<compile_context>
chip_gen: v7x
topology: tpu7x:2x2x1
jax: 0.10.0
libtpu: 0.0.40
codegen_flags: <defaults>
</compile_context>

<pallas_src>
import jax
import jax.numpy as jnp
import numpy as np
from jax.experimental import pallas as pl
from jax.experimental.pallas import tpu as pltpu


def _make_kernel(H, W, C, padding, n_blocks, hidden):
    EPS = 1e-5  # matches torch's 10e-6 in normalize_coordinate

    def kernel(p_ref, cxz_ref, cxy_ref, cyz_ref,
               wp_ref, bp_ref, wc_ref, bc_ref,
               w0_ref, b0_ref, w1_ref, b1_ref,
               wout_ref, bout_ref, out_ref):
        pt = p_ref[0]                                   # (3, TT): points on lanes
        TT = pt.shape[1]

        def norm01(v):
            # normalize_coordinate: scale to (0,1) then clamp like the torch code
            vn = v / (1.0 + padding + EPS) + 0.5
            vn = jnp.where(vn >= 1.0, 1.0 - EPS, vn)
            return jnp.where(vn < 0.0, 0.0, vn)

        memo = {}

        def bilinear_weights(col, size):
            # (size, TT) 1-D bilinear weight matrix for coordinate column `col`
            # (grid_sample, bilinear, align_corners=True, padding_mode='border').
            # Memoized: x and z feed two planes each (and H==W shares more).
            key = (col, size)
            if key not in memo:
                v = norm01(pt[col:col + 1, :]) * (size - 1)       # (1, TT)
                i0f = jnp.floor(v)
                frac = v - i0f                                    # (1, TT)
                i0 = i0f.astype(jnp.int32)
                i1 = jnp.minimum(i0 + 1, size - 1)                # border clamp
                iota = jax.lax.broadcasted_iota(jnp.int32, (size, 1), 0)
                memo[key] = (jnp.where(iota == i0, 1.0 - frac, 0.0)
                             + jnp.where(iota == i1, frac, 0.0))  # (size, TT)
            return memo[key]

        def sample_plane(plane_ref, xcol, ycol):
            # Separable bilinear gather:
            #   x corners on the MXU:  (C*H, W) @ (W, TT) -> (C*H, TT)
            #   y corners on the VPU:  elementwise weights + reduction over H
            xw = bilinear_weights(xcol, W)                        # (W, TT)
            yw = bilinear_weights(ycol, H)                        # (H, TT)
            gx = jnp.dot(plane_ref[0], xw,
                         preferred_element_type=jnp.float32)      # (C*H, TT)
            return jnp.sum(gx.reshape(C, H, TT) * yw[None, :, :], axis=1)  # (C, TT)

        # Summed plane features (non-concat mode), c: (C, TT)
        c = (sample_plane(cxz_ref, 0, 2)       # plane 'xz': p_x -> W, p_z -> H
             + sample_plane(cxy_ref, 0, 1)     # plane 'xy': p_x -> W, p_y -> H
             + sample_plane(cyz_ref, 1, 2))    # plane 'yz': p_y -> W, p_z -> H

        # net = fc_p(p): (hidden, TT)
        net = jnp.dot(wp_ref[...], pt, preferred_element_type=jnp.float32) + bp_ref[...]

        # All fc_c projections fused into one (n_blocks*hidden, c_dim) matmul.
        cw_all = jnp.dot(wc_ref[...], c, preferred_element_type=jnp.float32) + bc_ref[...]

        # ResnetBlockFC stack (size_in == size_out -> identity shortcut)
        for i in range(n_blocks):
            net = net + cw_all[i * hidden:(i + 1) * hidden, :]
            h = jnp.dot(w0_ref[i], jnp.maximum(net, 0.0),
                        preferred_element_type=jnp.float32) + b0_ref[i]
            dx = jnp.dot(w1_ref[i], jnp.maximum(h, 0.0),
                         preferred_element_type=jnp.float32) + b1_ref[i]
            net = net + dx

        # fc_out(relu(net))
        out = jnp.dot(wout_ref[...], jnp.maximum(net, 0.0),
                      preferred_element_type=jnp.float32) + bout_ref[...]
        out_ref[0] = out                                          # (out_dim, TT), lane-dense

    return kernel


def _choose_t_tile(T, C, H, W, hidden, n_blocks, B, vmem_limit):
    """Pick (TT, T_pad): TT a multiple of 128 (or == T for tiny T), VMEM-aware."""
    if T <= 128:
        return T, T                       # single block; block dim == full dim
    # Fixed VMEM: three plane blocks, double buffered.
    fixed = 3 * 2 * C * H * W * 4
    # Live f32 bytes per point: gather temporaries + one-hots + MLP activations.
    per_pt = (2 * C * H + H + W + (n_blocks + 4) * hidden + 64) * 4
    budget = max(vmem_limit // 2 - fixed, 256 * 1024)
    cap = pl.cdiv(T, 128) * 128           # don't pick a tile larger than padded T
    tt = 128
    for cand in (256, 512, 1024):
        if cand <= cap and cand * per_pt <= budget:
            tt = cand
    if B == 1:                            # keep both v7x TensorCores busy
        while tt > 128 and pl.cdiv(T, tt) < 2:
            tt //= 2
    t_pad = pl.cdiv(T, tt) * tt
    return tt, t_pad


def local_decoder_forward(p, c_planes, params, *, padding=0.1):
    """p: (B, T, 3). c_planes: dict of NCHW planes. params in nn.Linear (out, in) layout."""
    B, T, dim = p.shape
    assert dim == 3

    _, C, H, W = c_planes['xz'].shape
    # Native NCHW layout, flattened over (C, H): a pure reshape, no HBM transpose.
    cxz = c_planes['xz'].reshape(B, C * H, W)
    cxy = c_planes['xy'].reshape(B, C * H, W)
    cyz = c_planes['yz'].reshape(B, C * H, W)

    (wp, bp, wc, bc, w0, b0, w1, b1, wout, bout) = params
    n_blocks, hidden, c_dim = wc.shape
    assert c_dim == C and wp.shape == (hidden, dim)
    out_dim = wout.shape[0]

    # Channel-major operands: points on lanes, features on sublanes.
    p_t = jnp.transpose(p, (0, 2, 1)).astype(jnp.float32)          # (B, 3, T)
    wc_cat = wc.reshape(n_blocks * hidden, c_dim)                   # fused fc_c (N-widening)
    bc_cat = bc.reshape(n_blocks * hidden, 1)
    bp_c = bp.reshape(hidden, 1)
    b0_c = b0.reshape(n_blocks, hidden, 1)
    b1_c = b1.reshape(n_blocks, hidden, 1)
    bout_c = bout.reshape(out_dim, 1)

    # Generation-aware VMEM limit (v7x: 64 MiB -> ~48 MiB; v5e/v6e: 128 MiB -> 96 MiB).
    try:
        info = pltpu.get_tpu_info()
        vmem_cap = int(getattr(info, "vmem_capacity_bytes", 128 * 1024 * 1024))
    except Exception:
        vmem_cap = 128 * 1024 * 1024
    vmem_limit = int(min((vmem_cap * 3) // 4, 100 * 1024 * 1024))

    TT, T_pad = _choose_t_tile(T, C, H, W, hidden, n_blocks, B, vmem_limit)
    if T_pad != T:
        p_t = jnp.pad(p_t, ((0, 0), (0, 0), (0, T_pad - T)))
    nT = T_pad // TT

    kernel = _make_kernel(H, W, C, padding, n_blocks, hidden)

    def rep(arr):  # replicated (weight) operand: full block, constant index
        nd = arr.ndim
        return pl.BlockSpec(arr.shape, lambda b, t, _nd=nd: (0,) * _nd)

    grid_spec = pltpu.PrefetchScalarGridSpec(
        num_scalar_prefetch=0,
        grid=(B, nT),
        in_specs=[
            pl.BlockSpec((1, dim, TT), lambda b, t: (b, 0, t)),
            pl.BlockSpec((1, C * H, W), lambda b, t: (b, 0, 0)),
            pl.BlockSpec((1, C * H, W), lambda b, t: (b, 0, 0)),
            pl.BlockSpec((1, C * H, W), lambda b, t: (b, 0, 0)),
            rep(wp), rep(bp_c), rep(wc_cat), rep(bc_cat),
            rep(w0), rep(b0_c), rep(w1), rep(b1_c),
            rep(wout), rep(bout_c),
        ],
        out_specs=pl.BlockSpec((1, out_dim, TT), lambda b, t: (b, 0, t)),
    )

    pts = B * T_pad
    flops = int(pts * (3 * 2 * C * H * W            # separable x-gather matmuls
                       + 3 * 2 * C * H              # y weighting + reduce
                       + 2 * dim * hidden           # fc_p
                       + 2 * c_dim * n_blocks * hidden
                       + 4 * n_blocks * hidden * hidden
                       + 2 * hidden * out_dim))
    bytes_accessed = int(4 * (B * dim * T_pad + 3 * B * C * H * W
                              + B * out_dim * T_pad
                              + hidden * dim + hidden
                              + n_blocks * hidden * (c_dim + 2 * hidden + 3)
                              + out_dim * (hidden + 1)))

    out = pl.pallas_call(
        kernel,
        out_shape=jax.ShapeDtypeStruct((B, out_dim, T_pad), jnp.float32),
        grid_spec=grid_spec,
        compiler_params=pltpu.CompilerParams(
            dimension_semantics=("parallel", "parallel"),
            vmem_limit_bytes=vmem_limit),
        cost_estimate=pl.CostEstimate(
            flops=flops, transcendentals=0, bytes_accessed=bytes_accessed),
    )(p_t, cxz, cxy, cyz, wp, bp_c, wc_cat, bc_cat,
      w0, b0_c, w1, b1_c, wout, bout_c)

    out = out[:, :, :T]
    if out_dim == 1:
        return out[:, 0, :]               # torch .squeeze(-1)
    return jnp.transpose(out, (0, 2, 1))  # (B, T, out_dim) when out_dim > 1


def reference_forward(p, c_planes, params, *, padding=0.1):
    """Pure-JAX reference (mirrors torch grid_sample + decoder MLP)."""
    EPS = 1e-5

    def norm01(v):
        vn = v / (1.0 + padding + EPS) + 0.5
        vn = jnp.where(vn >= 1.0, 1.0 - EPS, vn)
        return jnp.where(vn < 0.0, 0.0, vn)

    def sample(plane, xcol, ycol):
        B, C, H, W = plane.shape
        x = norm01(p[..., xcol]) * (W - 1)
        y = norm01(p[..., ycol]) * (H - 1)
        x0 = jnp.floor(x).astype(jnp.int32)
        y0 = jnp.floor(y).astype(jnp.int32)
        fx = x - x0
        fy = y - y0
        x1 = jnp.minimum(x0 + 1, W - 1)
        y1 = jnp.minimum(y0 + 1, H - 1)
        pf = plane.reshape(B, C, H * W)

        def g(yi, xi):
            idx = yi * W + xi
            return jnp.take_along_axis(pf, idx[:, None, :], axis=2)   # (B, C, T)

        return (g(y0, x0) * ((1 - fx) * (1 - fy))[:, None, :]
                + g(y0, x1) * (fx * (1 - fy))[:, None, :]
                + g(y1, x0) * ((1 - fx) * fy)[:, None, :]
                + g(y1, x1) * (fx * fy)[:, None, :])

    c = (sample(c_planes['xz'], 0, 2)
         + sample(c_planes['xy'], 0, 1)
         + sample(c_planes['yz'], 1, 2))
    c = jnp.transpose(c, (0, 2, 1))                                   # (B, T, C)

    (wp, bp, wc, bc, w0, b0, w1, b1, wout, bout) = params
    net = p @ wp.T + bp
    for i in range(wc.shape[0]):
        net = net + c @ wc[i].T + bc[i]
        h = jnp.maximum(net, 0.0) @ w0[i].T + b0[i]
        dx = jnp.maximum(h, 0.0) @ w1[i].T + b1[i]
        net = net + dx
    out = jnp.maximum(net, 0.0) @ wout.T + bout
    return out[..., 0]


if __name__ == "__main__":
    key = jax.random.PRNGKey(0)
    B, T, dim = 2, 256, 3
    c_dim, hidden, n_blocks, out_dim = 4, 32, 3, 1
    H = W = 16
    ks = jax.random.split(key, 16)

    p = jax.random.uniform(ks[0], (B, T, dim), jnp.float32, -0.6, 0.6)
    c_planes = {
        'xz': jax.random.normal(ks[1], (B, c_dim, H, W), jnp.float32),
        'xy': jax.random.normal(ks[2], (B, c_dim, H, W), jnp.float32),
        'yz': jax.random.normal(ks[3], (B, c_dim, H, W), jnp.float32),
    }

    # nn.Linear layout: weights (out_features, in_features), biases (out_features,)
    s = 0.1
    wp = jax.random.normal(ks[4], (hidden, dim), jnp.float32) * s
    bp = jax.random.normal(ks[5], (hidden,), jnp.float32) * s
    wc = jax.random.normal(ks[6], (n_blocks, hidden, c_dim), jnp.float32) * s
    bc = jax.random.normal(ks[7], (n_blocks, hidden), jnp.float32) * s
    w0 = jax.random.normal(ks[8], (n_blocks, hidden, hidden), jnp.float32) * s
    b0 = jax.random.normal(ks[9], (n_blocks, hidden), jnp.float32) * s
    w1 = jax.random.normal(ks[10], (n_blocks, hidden, hidden), jnp.float32) * s
    b1 = jax.random.normal(ks[11], (n_blocks, hidden), jnp.float32) * s
    wout = jax.random.normal(ks[12], (out_dim, hidden), jnp.float32) * s
    bout = jax.random.normal(ks[13], (out_dim,), jnp.float32) * s
    params = (wp, bp, wc, bc, w0, b0, w1, b1, wout, bout)

    out = jax.block_until_ready(local_decoder_forward(p, c_planes, params))
    ref = jax.block_until_ready(reference_forward(p, c_planes, params))

    assert out.shape == (B, T)
    np.testing.assert_allclose(np.asarray(out), np.asarray(ref), rtol=1e-4, atol=1e-4)
    print("KERNEL_OK")
</pallas_src>

<mosaic_0001>
module attributes {stable_mosaic.version = 11 : i64} {
  func.func @kernel(%arg0: i32, %arg1: i32, %arg2: memref<1x3x256xf32, #tpu.memory_space<vmem>>, %arg3: memref<1x64x16xf32, #tpu.memory_space<vmem>>, %arg4: memref<1x64x16xf32, #tpu.memory_space<vmem>>, %arg5: memref<1x64x16xf32, #tpu.memory_space<vmem>>, %arg6: memref<32x3xf32, #tpu.memory_space<vmem>>, %arg7: memref<32x1xf32, #tpu.memory_space<vmem>>, %arg8: memref<96x4xf32, #tpu.memory_space<vmem>>, %arg9: memref<96x1xf32, #tpu.memory_space<vmem>>, %arg10: memref<3x32x32xf32, #tpu.memory_space<vmem>>, %arg11: memref<3x32x1xf32, #tpu.memory_space<vmem>>, %arg12: memref<3x32x32xf32, #tpu.memory_space<vmem>>, %arg13: memref<3x32x1xf32, #tpu.memory_space<vmem>>, %arg14: memref<1x32xf32, #tpu.memory_space<vmem>>, %arg15: memref<1x1xf32, #tpu.memory_space<vmem>>, %arg16: memref<1x1x256xf32, #tpu.memory_space<vmem>>) attributes {dimension_semantics = [#tpu.dimension_semantics<parallel>, #tpu.dimension_semantics<parallel>], iteration_bounds = array<i64: 2, 1>, scalar_prefetch = 0 : i64, scratch_operands = 0 : i64, tpu.core_type = #tpu.core_type<tc>, window_params = [{transform_indices = @transform_0, window_bounds = array<i64: 1, 3, 256>}, {transform_indices = @transform_1, window_bounds = array<i64: 1, 64, 16>}, {transform_indices = @transform_2, window_bounds = array<i64: 1, 64, 16>}, {transform_indices = @transform_3, window_bounds = array<i64: 1, 64, 16>}, {pipeline_mode = #tpu.pipeline_mode<synchronous>, transform_indices = @transform_4, window_bounds = array<i64: 32, 3>}, {pipeline_mode = #tpu.pipeline_mode<synchronous>, transform_indices = @transform_5, window_bounds = array<i64: 32, 1>}, {pipeline_mode = #tpu.pipeline_mode<synchronous>, transform_indices = @transform_6, window_bounds = array<i64: 96, 4>}, {pipeline_mode = #tpu.pipeline_mode<synchronous>, transform_indices = @transform_7, window_bounds = array<i64: 96, 1>}, {pipeline_mode = #tpu.pipeline_mode<synchronous>, transform_indices = @transform_8, window_bounds = array<i64: 3, 32, 32>}, {pipeline_mode = #tpu.pipeline_mode<synchronous>, transform_indices = @transform_9, window_bounds = array<i64: 3, 32, 1>}, {pipeline_mode = #tpu.pipeline_mode<synchronous>, transform_indices = @transform_10, window_bounds = array<i64: 3, 32, 32>}, {pipeline_mode = #tpu.pipeline_mode<synchronous>, transform_indices = @transform_11, window_bounds = array<i64: 3, 32, 1>}, {pipeline_mode = #tpu.pipeline_mode<synchronous>, transform_indices = @transform_12, window_bounds = array<i64: 1, 32>}, {pipeline_mode = #tpu.pipeline_mode<synchronous>, transform_indices = @transform_13, window_bounds = array<i64: 1, 1>}, {transform_indices = @transform_14, window_bounds = array<i64: 1, 1, 256>}]} {
    %c0 = arith.constant 0 : index
    %c0_0 = arith.constant 0 : index
    %c0_1 = arith.constant 0 : index
    %0 = vector.load %arg2[%c0, %c0_0, %c0_1] : memref<1x3x256xf32, #tpu.memory_space<vmem>>, vector<1x3x256xf32>
    %1 = vector.shape_cast %0 : vector<1x3x256xf32> to vector<3x256xf32>
    %2 = vector.extract_strided_slice %1 {offsets = [0, 0], sizes = [1, 256], strides = [1, 1]} : vector<3x256xf32> to vector<1x256xf32>
    %cst = arith.constant 1.100010e+00 : f32
    %3 = vector.broadcast %cst : f32 to vector<1x256xf32>
    %4 = arith.divf %2, %3 : vector<1x256xf32>
    %cst_2 = arith.constant 5.000000e-01 : f32
    %5 = vector.broadcast %cst_2 : f32 to vector<1x256xf32>
    %6 = arith.addf %4, %5 : vector<1x256xf32>
    %cst_3 = arith.constant 1.000000e+00 : f32
    %7 = vector.broadcast %cst_3 : f32 to vector<1x256xf32>
    %8 = arith.cmpf oge, %6, %7 : vector<1x256xf32>
    %cst_4 = arith.constant 0.999989986 : f32
    %9 = vector.broadcast %cst_4 : f32 to vector<1x256xf32>
    %10 = arith.select %8, %9, %6 : vector<1x256xi1>, vector<1x256xf32>
    %cst_5 = arith.constant 0.000000e+00 : f32
    %11 = vector.broadcast %cst_5 : f32 to vector<1x256xf32>
    %12 = arith.cmpf olt, %10, %11 : vector<1x256xf32>
    %cst_6 = arith.constant 0.000000e+00 : f32
    %13 = vector.broadcast %cst_6 : f32 to vector<1x256xf32>
    %14 = arith.select %12, %13, %10 : vector<1x256xi1>, vector<1x256xf32>
    %cst_7 = arith.constant 1.500000e+01 : f32
    %15 = vector.broadcast %cst_7 : f32 to vector<1x256xf32>
    %16 = arith.mulf %14, %15 : vector<1x256xf32>
    %17 = math.floor %16 : vector<1x256xf32>
    %18 = arith.subf %16, %17 : vector<1x256xf32>
    %19 = arith.fptosi %17 : vector<1x256xf32> to vector<1x256xi32>
    %c1_i32 = arith.constant 1 : i32
    %20 = vector.broadcast %c1_i32 : i32 to vector<1x256xi32>
    %21 = arith.addi %19, %20 : vector<1x256xi32>
    %c15_i32 = arith.constant 15 : i32
    %22 = vector.broadcast %c15_i32 : i32 to vector<1x256xi32>
    %23 = arith.minsi %21, %22 : vector<1x256xi32>
    %24 = tpu.iota {dimensions = array<i32: 0>} : vector<16x1xi32>
    %25 = vector.broadcast %24 : vector<16x1xi32> to vector<16x256xi32>
    %26 = vector.broadcast %19 : vector<1x256xi32> to vector<16x256xi32>
    %27 = arith.cmpi eq, %25, %26 : vector<16x256xi32>
    %cst_8 = arith.constant 1.000000e+00 : f32
    %28 = vector.broadcast %cst_8 : f32 to vector<1x256xf32>
    %29 = arith.subf %28, %18 : vector<1x256xf32>
    %cst_9 = arith.constant 0.000000e+00 : f32
    %30 = vector.shape_cast %29 : vector<1x256xf32> to vector<1x256xf32>
    %31 = vector.broadcast %30 : vector<1x256xf32> to vector<16x256xf32>
    %32 = vector.broadcast %cst_9 : f32 to vector<16x256xf32>
    %33 = arith.select %27, %31, %32 : vector<16x256xi1>, vector<16x256xf32>
    %34 = vector.broadcast %24 : vector<16x1xi32> to vector<16x256xi32>
    %35 = vector.broadcast %23 : vector<1x256xi32> to vector<16x256xi32>
    %36 = arith.cmpi eq, %34, %35 : vector<16x256xi32>
    %cst_10 = arith.constant 0.000000e+00 : f32
    %37 = vector.shape_cast %18 : vector<1x256xf32> to vector<1x256xf32>
    %38 = vector.broadcast %37 : vector<1x256xf32> to vector<16x256xf32>
    %39 = vector.broadcast %cst_10 : f32 to vector<16x256xf32>
    %40 = arith.select %36, %38, %39 : vector<16x256xi1>, vector<16x256xf32>
    %41 = arith.addf %33, %40 : vector<16x256xf32>
    %42 = vector.extract_strided_slice %1 {offsets = [2, 0], sizes = [1, 256], strides = [1, 1]} : vector<3x256xf32> to vector<1x256xf32>
    %cst_11 = arith.constant 1.100010e+00 : f32
    %43 = vector.broadcast %cst_11 : f32 to vector<1x256xf32>
    %44 = arith.divf %42, %43 : vector<1x256xf32>
    %cst_12 = arith.constant 5.000000e-01 : f32
    %45 = vector.broadcast %cst_12 : f32 to vector<1x256xf32>
    %46 = arith.addf %44, %45 : vector<1x256xf32>
    %cst_13 = arith.constant 1.000000e+00 : f32
    %47 = vector.broadcast %cst_13 : f32 to vector<1x256xf32>
    %48 = arith.cmpf oge, %46, %47 : vector<1x256xf32>
    %cst_14 = arith.constant 0.999989986 : f32
    %49 = vector.broadcast %cst_14 : f32 to vector<1x256xf32>
    %50 = arith.select %48, %49, %46 : vector<1x256xi1>, vector<1x256xf32>
    %cst_15 = arith.constant 0.000000e+00 : f32
    %51 = vector.broadcast %cst_15 : f32 to vector<1x256xf32>
    %52 = arith.cmpf olt, %50, %51 : vector<1x256xf32>
    %cst_16 = arith.constant 0.000000e+00 : f32
    %53 = vector.broadcast %cst_16 : f32 to vector<1x256xf32>
    %54 = arith.select %52, %53, %50 : vector<1x256xi1>, vector<1x256xf32>
    %cst_17 = arith.constant 1.500000e+01 : f32
    %55 = vector.broadcast %cst_17 : f32 to vector<1x256xf32>
    %56 = arith.mulf %54, %55 : vector<1x256xf32>
    %57 = math.floor %56 : vector<1x256xf32>
    %58 = arith.subf %56, %57 : vector<1x256xf32>
    %59 = arith.fptosi %57 : vector<1x256xf32> to vector<1x256xi32>
    %c1_i32_18 = arith.constant 1 : i32
    %60 = vector.broadcast %c1_i32_18 : i32 to vector<1x256xi32>
    %61 = arith.addi %59, %60 : vector<1x256xi32>
    %c15_i32_19 = arith.constant 15 : i32
    %62 = vector.broadcast %c15_i32_19 : i32 to vector<1x256xi32>
    %63 = arith.minsi %61, %62 : vector<1x256xi32>
    %64 = tpu.iota {dimensions = array<i32: 0>} : vector<16x1xi32>
    %65 = vector.broadcast %64 : vector<16x1xi32> to vector<16x256xi32>
    %66 = vector.broadcast %59 : vector<1x256xi32> to vector<16x256xi32>
    %67 = arith.cmpi eq, %65, %66 : vector<16x256xi32>
    %cst_20 = arith.constant 1.000000e+00 : f32
    %68 = vector.broadcast %cst_20 : f32 to vector<1x256xf32>
    %69 = arith.subf %68, %58 : vector<1x256xf32>
    %cst_21 = arith.constant 0.000000e+00 : f32
    %70 = vector.shape_cast %69 : vector<1x256xf32> to vector<1x256xf32>
    %71 = vector.broadcast %70 : vector<1x256xf32> to vector<16x256xf32>
    %72 = vector.broadcast %cst_21 : f32 to vector<16x256xf32>
    %73 = arith.select %67, %71, %72 : vector<16x256xi1>, vector<16x256xf32>
    %74 = vector.broadcast %64 : vector<16x1xi32> to vector<16x256xi32>
    %75 = vector.broadcast %63 : vector<1x256xi32> to vector<16x256xi32>
    %76 = arith.cmpi eq, %74, %75 : vector<16x256xi32>
    %cst_22 = arith.constant 0.000000e+00 : f32
    %77 = vector.shape_cast %58 : vector<1x256xf32> to vector<1x256xf32>
    %78 = vector.broadcast %77 : vector<1x256xf32> to vector<16x256xf32>
    %79 = vector.broadcast %cst_22 : f32 to vector<16x256xf32>
    %80 = arith.select %76, %78, %79 : vector<16x256xi1>, vector<16x256xf32>
    %81 = arith.addf %73, %80 : vector<16x256xf32>
    %c0_23 = arith.constant 0 : index
    %c0_24 = arith.constant 0 : index
    %c0_25 = arith.constant 0 : index
    %82 = vector.load %arg3[%c0_23, %c0_24, %c0_25] : memref<1x64x16xf32, #tpu.memory_space<vmem>>, vector<1x64x16xf32>
    %83 = vector.shape_cast %82 : vector<1x64x16xf32> to vector<64x16xf32>
    %cst_26 = arith.constant dense<0.000000e+00> : vector<64x256xf32>
    %84 = tpu.matmul %83, %41, %cst_26 {dimension_numbers = #tpu.dot_dimension_numbers<[1], [0], [0], [1], [0, 0, 1, 1], [], []>} : vector<64x16xf32>, vector<16x256xf32>, vector<64x256xf32> -> vector<64x256xf32>
    %85 = vector.shape_cast %84 : vector<64x256xf32> to vector<4x16x256xf32>
    %86 = vector.shape_cast %81 : vector<16x256xf32> to vector<1x16x256xf32>
    %87 = vector.broadcast %86 : vector<1x16x256xf32> to vector<4x16x256xf32>
    %88 = arith.mulf %85, %87 : vector<4x16x256xf32>
    %cst_27 = arith.constant dense<0.000000e+00> : vector<4x256xf32>
    %89 = vector.multi_reduction <add>, %88, %cst_27 [1] : vector<4x16x256xf32> to vector<4x256xf32>
    %90 = vector.extract_strided_slice %1 {offsets = [1, 0], sizes = [1, 256], strides = [1, 1]} : vector<3x256xf32> to vector<1x256xf32>
    %cst_28 = arith.constant 1.100010e+00 : f32
    %91 = vector.broadcast %cst_28 : f32 to vector<1x256xf32>
    %92 = arith.divf %90, %91 : vector<1x256xf32>
    %cst_29 = arith.constant 5.000000e-01 : f32
    %93 = vector.broadcast %cst_29 : f32 to vector<1x256xf32>
    %94 = arith.addf %92, %93 : vector<1x256xf32>
    %cst_30 = arith.constant 1.000000e+00 : f32
    %95 = vector.broadcast %cst_30 : f32 to vector<1x256xf32>
    %96 = arith.cmpf oge, %94, %95 : vector<1x256xf32>
    %cst_31 = arith.constant 0.999989986 : f32
    %97 = vector.broadcast %cst_31 : f32 to vector<1x256xf32>
    %98 = arith.select %96, %97, %94 : vector<1x256xi1>, vector<1x256xf32>
    %cst_32 = arith.constant 0.000000e+00 : f32
    %99 = vector.broadcast %cst_32 : f32 to vector<1x256xf32>
    %100 = arith.cmpf olt, %98, %99 : vector<1x256xf32>
    %cst_33 = arith.constant 0.000000e+00 : f32
    %101 = vector.broadcast %cst_33 : f32 to vector<1x256xf32>
    %102 = arith.select %100, %101, %98 : vector<1x256xi1>, vector<1x256xf32>
    %cst_34 = arith.constant 1.500000e+01 : f32
    %103 = vector.broadcast %cst_34 : f32 to vector<1x256xf32>
    %104 = arith.mulf %102, %103 : vector<1x256xf32>
    %105 = math.floor %104 : vector<1x256xf32>
    %106 = arith.subf %104, %105 : vector<1x256xf32>
    %107 = arith.fptosi %105 : vector<1x256xf32> to vector<1x256xi32>
    %c1_i32_35 = arith.constant 1 : i32
    %108 = vector.broadcast %c1_i32_35 : i32 to vector<1x256xi32>
    %109 = arith.addi %107, %108 : vector<1x256xi32>
    %c15_i32_36 = arith.constant 15 : i32
    %110 = vector.broadcast %c15_i32_36 : i32 to vector<1x256xi32>
    %111 = arith.minsi %109, %110 : vector<1x256xi32>
    %112 = tpu.iota {dimensions = array<i32: 0>} : vector<16x1xi32>
    %113 = vector.broadcast %112 : vector<16x1xi32> to vector<16x256xi32>
    %114 = vector.broadcast %107 : vector<1x256xi32> to vector<16x256xi32>
    %115 = arith.cmpi eq, %113, %114 : vector<16x256xi32>
    %cst_37 = arith.constant 1.000000e+00 : f32
    %116 = vector.broadcast %cst_37 : f32 to vector<1x256xf32>
    %117 = arith.subf %116, %106 : vector<1x256xf32>
    %cst_38 = arith.constant 0.000000e+00 : f32
    %118 = vector.shape_cast %117 : vector<1x256xf32> to vector<1x256xf32>
    %119 = vector.broadcast %118 : vector<1x256xf32> to vector<16x256xf32>
    %120 = vector.broadcast %cst_38 : f32 to vector<16x256xf32>
    %121 = arith.select %115, %119, %120 : vector<16x256xi1>, vector<16x256xf32>
    %122 = vector.broadcast %112 : vector<16x1xi32> to vector<16x256xi32>
    %123 = vector.broadcast %111 : vector<1x256xi32> to vector<16x256xi32>
    %124 = arith.cmpi eq, %122, %123 : vector<16x256xi32>
    %cst_39 = arith.constant 0.000000e+00 : f32
    %125 = vector.shape_cast %106 : vector<1x256xf32> to vector<1x256xf32>
    %126 = vector.broadcast %125 : vector<1x256xf32> to vector<16x256xf32>
    %127 = vector.broadcast %cst_39 : f32 to vector<16x256xf32>
    %128 = arith.select %124, %126, %127 : vector<16x256xi1>, vector<16x256xf32>
    %129 = arith.addf %121, %128 : vector<16x256xf32>
    %c0_40 = arith.constant 0 : index
    %c0_41 = arith.constant 0 : index
    %c0_42 = arith.constant 0 : index
    %130 = vector.load %arg4[%c0_40, %c0_41, %c0_42] : memref<1x64x16xf32, #tpu.memory_space<vmem>>, vector<1x64x16xf32>
    %131 = vector.shape_cast %130 : vector<1x64x16xf32> to vector<64x16xf32>
    %cst_43 = arith.constant dense<0.000000e+00> : vector<64x256xf32>
    %132 = tpu.matmul %131, %41, %cst_43 {dimension_numbers = #tpu.dot_dimension_numbers<[1], [0], [0], [1], [0, 0, 1, 1], [], []>} : vector<64x16xf32>, vector<16x256xf32>, vector<64x256xf32> -> vector<64x256xf32>
    %133 = vector.shape_cast %132 : vector<64x256xf32> to vector<4x16x256xf32>
    %134 = vector.shape_cast %129 : vector<16x256xf32> to vector<1x16x256xf32>
    %135 = vector.broadcast %134 : vector<1x16x256xf32> to vector<4x16x256xf32>
    %136 = arith.mulf %133, %135 : vector<4x16x256xf32>
    %cst_44 = arith.constant dense<0.000000e+00> : vector<4x256xf32>
    %137 = vector.multi_reduction <add>, %136, %cst_44 [1] : vector<4x16x256xf32> to vector<4x256xf32>
    %138 = arith.addf %89, %137 : vector<4x256xf32>
    %c0_45 = arith.constant 0 : index
    %c0_46 = arith.constant 0 : index
    %c0_47 = arith.constant 0 : index
    %139 = vector.load %arg5[%c0_45, %c0_46, %c0_47] : memref<1x64x16xf32, #tpu.memory_space<vmem>>, vector<1x64x16xf32>
    %140 = vector.shape_cast %139 : vector<1x64x16xf32> to vector<64x16xf32>
    %cst_48 = arith.constant dense<0.000000e+00> : vector<64x256xf32>
    %141 = tpu.matmul %140, %129, %cst_48 {dimension_numbers = #tpu.dot_dimension_numbers<[1], [0], [0], [1], [0, 0, 1, 1], [], []>} : vector<64x16xf32>, vector<16x256xf32>, vector<64x256xf32> -> vector<64x256xf32>
    %142 = vector.shape_cast %141 : vector<64x256xf32> to vector<4x16x256xf32>
    %143 = vector.shape_cast %81 : vector<16x256xf32> to vector<1x16x256xf32>
    %144 = vector.broadcast %143 : vector<1x16x256xf32> to vector<4x16x256xf32>
    %145 = arith.mulf %142, %144 : vector<4x16x256xf32>
    %cst_49 = arith.constant dense<0.000000e+00> : vector<4x256xf32>
    %146 = vector.multi_reduction <add>, %145, %cst_49 [1] : vector<4x16x256xf32> to vector<4x256xf32>
    %147 = arith.addf %138, %146 : vector<4x256xf32>
    %c0_50 = arith.constant 0 : index
    %c0_51 = arith.constant 0 : index
    %148 = vector.load %arg6[%c0_50, %c0_51] : memref<32x3xf32, #tpu.memory_space<vmem>>, vector<32x3xf32>
    %cst_52 = arith.constant dense<0.000000e+00> : vector<32x256xf32>
    %149 = tpu.matmul %148, %1, %cst_52 {dimension_numbers = #tpu.dot_dimension_numbers<[1], [0], [0], [1], [0, 0, 1, 1], [], []>} : vector<32x3xf32>, vector<3x256xf32>, vector<32x256xf32> -> vector<32x256xf32>
    %c0_53 = arith.constant 0 : index
    %c0_54 = arith.constant 0 : index
    %150 = vector.load %arg7[%c0_53, %c0_54] : memref<32x1xf32, #tpu.memory_space<vmem>>, vector<32x1xf32>
    %151 = vector.broadcast %150 : vector<32x1xf32> to vector<32x256xf32>
    %152 = arith.addf %149, %151 : vector<32x256xf32>
    %c0_55 = arith.constant 0 : index
    %c0_56 = arith.constant 0 : index
    %153 = vector.load %arg8[%c0_55, %c0_56] : memref<96x4xf32, #tpu.memory_space<vmem>>, vector<96x4xf32>
    %cst_57 = arith.constant dense<0.000000e+00> : vector<96x256xf32>
    %154 = tpu.matmul %153, %147, %cst_57 {dimension_numbers = #tpu.dot_dimension_numbers<[1], [0], [0], [1], [0, 0, 1, 1], [], []>} : vector<96x4xf32>, vector<4x256xf32>, vector<96x256xf32> -> vector<96x256xf32>
    %c0_58 = arith.constant 0 : index
    %c0_59 = arith.constant 0 : index
    %155 = vector.load %arg9[%c0_58, %c0_59] : memref<96x1xf32, #tpu.memory_space<vmem>>, vector<96x1xf32>
    %156 = vector.broadcast %155 : vector<96x1xf32> to vector<96x256xf32>
    %157 = arith.addf %154, %156 : vector<96x256xf32>
    %158 = vector.extract_strided_slice %157 {offsets = [0, 0], sizes = [32, 256], strides = [1, 1]} : vector<96x256xf32> to vector<32x256xf32>
    %159 = arith.addf %152, %158 : vector<32x256xf32>
    %c0_60 = arith.constant 0 : index
    %c0_61 = arith.constant 0 : index
    %c0_62 = arith.constant 0 : index
    %160 = vector.load %arg10[%c0_60, %c0_61, %c0_62] : memref<3x32x32xf32, #tpu.memory_space<vmem>>, vector<1x32x32xf32>
    %161 = vector.shape_cast %160 : vector<1x32x32xf32> to vector<32x32xf32>
    %cst_63 = arith.constant 0.000000e+00 : f32
    %162 = vector.broadcast %cst_63 : f32 to vector<32x256xf32>
    %163 = arith.maximumf %159, %162 : vector<32x256xf32>
    %cst_64 = arith.constant dense<0.000000e+00> : vector<32x256xf32>
    %164 = tpu.matmul %161, %163, %cst_64 {dimension_numbers = #tpu.dot_dimension_numbers<[1], [0], [0], [1], [0, 0, 1, 1], [], []>} : vector<32x32xf32>, vector<32x256xf32>, vector<32x256xf32> -> vector<32x256xf32>
    %c0_65 = arith.constant 0 : index
    %c0_66 = arith.constant 0 : index
    %c0_67 = arith.constant 0 : index
    %165 = vector.load %arg11[%c0_65, %c0_66, %c0_67] : memref<3x32x1xf32, #tpu.memory_space<vmem>>, vector<1x32x1xf32>
    %166 = vector.shape_cast %165 : vector<1x32x1xf32> to vector<32x1xf32>
    %167 = vector.broadcast %166 : vector<32x1xf32> to vector<32x256xf32>
    %168 = arith.addf %164, %167 : vector<32x256xf32>
    %c0_68 = arith.constant 0 : index
    %c0_69 = arith.constant 0 : index
    %c0_70 = arith.constant 0 : index
    %169 = vector.load %arg12[%c0_68, %c0_69, %c0_70] : memref<3x32x32xf32, #tpu.memory_space<vmem>>, vector<1x32x32xf32>
    %170 = vector.shape_cast %169 : vector<1x32x32xf32> to vector<32x32xf32>
    %cst_71 = arith.constant 0.000000e+00 : f32
    %171 = vector.broadcast %cst_71 : f32 to vector<32x256xf32>
    %172 = arith.maximumf %168, %171 : vector<32x256xf32>
    %cst_72 = arith.constant dense<0.000000e+00> : vector<32x256xf32>
    %173 = tpu.matmul %170, %172, %cst_72 {dimension_numbers = #tpu.dot_dimension_numbers<[1], [0], [0], [1], [0, 0, 1, 1], [], []>} : vector<32x32xf32>, vector<32x256xf32>, vector<32x256xf32> -> vector<32x256xf32>
    %c0_73 = arith.constant 0 : index
    %c0_74 = arith.constant 0 : index
    %c0_75 = arith.constant 0 : index
    %174 = vector.load %arg13[%c0_73, %c0_74, %c0_75] : memref<3x32x1xf32, #tpu.memory_space<vmem>>, vector<1x32x1xf32>
    %175 = vector.shape_cast %174 : vector<1x32x1xf32> to vector<32x1xf32>
    %176 = vector.broadcast %175 : vector<32x1xf32> to vector<32x256xf32>
    %177 = arith.addf %173, %176 : vector<32x256xf32>
    %178 = arith.addf %159, %177 : vector<32x256xf32>
    %179 = vector.extract_strided_slice %157 {offsets = [32, 0], sizes = [32, 256], strides = [1, 1]} : vector<96x256xf32> to vector<32x256xf32>
    %180 = arith.addf %178, %179 : vector<32x256xf32>
    %c1 = arith.constant 1 : index
    %c0_76 = arith.constant 0 : index
    %c0_77 = arith.constant 0 : index
    %181 = vector.load %arg10[%c1, %c0_76, %c0_77] : memref<3x32x32xf32, #tpu.memory_space<vmem>>, vector<1x32x32xf32>
    %182 = vector.shape_cast %181 : vector<1x32x32xf32> to vector<32x32xf32>
    %cst_78 = arith.constant 0.000000e+00 : f32
    %183 = vector.broadcast %cst_78 : f32 to vector<32x256xf32>
    %184 = arith.maximumf %180, %183 : vector<32x256xf32>
    %cst_79 = arith.constant dense<0.000000e+00> : vector<32x256xf32>
    %185 = tpu.matmul %182, %184, %cst_79 {dimension_numbers = #tpu.dot_dimension_numbers<[1], [0], [0], [1], [0, 0, 1, 1], [], []>} : vector<32x32xf32>, vector<32x256xf32>, vector<32x256xf32> -> vector<32x256xf32>
    %c1_80 = arith.constant 1 : index
    %c0_81 = arith.constant 0 : index
    %c0_82 = arith.constant 0 : index
    %186 = vector.load %arg11[%c1_80, %c0_81, %c0_82] : memref<3x32x1xf32, #tpu.memory_space<vmem>>, vector<1x32x1xf32>
    %187 = vector.shape_cast %186 : vector<1x32x1xf32> to vector<32x1xf32>
    %188 = vector.broadcast %187 : vector<32x1xf32> to vector<32x256xf32>
    %189 = arith.addf %185, %188 : vector<32x256xf32>
    %c1_83 = arith.constant 1 : index
    %c0_84 = arith.constant 0 : index
    %c0_85 = arith.constant 0 : index
    %190 = vector.load %arg12[%c1_83, %c0_84, %c0_85] : memref<3x32x32xf32, #tpu.memory_space<vmem>>, vector<1x32x32xf32>
    %191 = vector.shape_cast %190 : vector<1x32x32xf32> to vector<32x32xf32>
    %cst_86 = arith.constant 0.000000e+00 : f32
    %192 = vector.broadcast %cst_86 : f32 to vector<32x256xf32>
    %193 = arith.maximumf %189, %192 : vector<32x256xf32>
    %cst_87 = arith.constant dense<0.000000e+00> : vector<32x256xf32>
    %194 = tpu.matmul %191, %193, %cst_87 {dimension_numbers = #tpu.dot_dimension_numbers<[1], [0], [0], [1], [0, 0, 1, 1], [], []>} : vector<32x32xf32>, vector<32x256xf32>, vector<32x256xf32> -> vector<32x256xf32>
    %c1_88 = arith.constant 1 : index
    %c0_89 = arith.constant 0 : index
    %c0_90 = arith.constant 0 : index
    %195 = vector.load %arg13[%c1_88, %c0_89, %c0_90] : memref<3x32x1xf32, #tpu.memory_space<vmem>>, vector<1x32x1xf32>
    %196 = vector.shape_cast %195 : vector<1x32x1xf32> to vector<32x1xf32>
    %197 = vector.broadcast %196 : vector<32x1xf32> to vector<32x256xf32>
    %198 = arith.addf %194, %197 : vector<32x256xf32>
    %199 = arith.addf %180, %198 : vector<32x256xf32>
    %200 = vector.extract_strided_slice %157 {offsets = [64, 0], sizes = [32, 256], strides = [1, 1]} : vector<96x256xf32> to vector<32x256xf32>
    %201 = arith.addf %199, %200 : vector<32x256xf32>
    %c2 = arith.constant 2 : index
    %c0_91 = arith.constant 0 : index
    %c0_92 = arith.constant 0 : index
    %202 = vector.load %arg10[%c2, %c0_91, %c0_92] : memref<3x32x32xf32, #tpu.memory_space<vmem>>, vector<1x32x32xf32>
    %203 = vector.shape_cast %202 : vector<1x32x32xf32> to vector<32x32xf32>
    %cst_93 = arith.constant 0.000000e+00 : f32
    %204 = vector.broadcast %cst_93 : f32 to vector<32x256xf32>
    %205 = arith.maximumf %201, %204 : vector<32x256xf32>
    %cst_94 = arith.constant dense<0.000000e+00> : vector<32x256xf32>
    %206 = tpu.matmul %203, %205, %cst_94 {dimension_numbers = #tpu.dot_dimension_numbers<[1], [0], [0], [1], [0, 0, 1, 1], [], []>} : vector<32x32xf32>, vector<32x256xf32>, vector<32x256xf32> -> vector<32x256xf32>
    %c2_95 = arith.constant 2 : index
    %c0_96 = arith.constant 0 : index
    %c0_97 = arith.constant 0 : index
    %207 = vector.load %arg11[%c2_95, %c0_96, %c0_97] : memref<3x32x1xf32, #tpu.memory_space<vmem>>, vector<1x32x1xf32>
    %208 = vector.shape_cast %207 : vector<1x32x1xf32> to vector<32x1xf32>
    %209 = vector.broadcast %208 : vector<32x1xf32> to vector<32x256xf32>
    %210 = arith.addf %206, %209 : vector<32x256xf32>
    %c2_98 = arith.constant 2 : index
    %c0_99 = arith.constant 0 : index
    %c0_100 = arith.constant 0 : index
    %211 = vector.load %arg12[%c2_98, %c0_99, %c0_100] : memref<3x32x32xf32, #tpu.memory_space<vmem>>, vector<1x32x32xf32>
    %212 = vector.shape_cast %211 : vector<1x32x32xf32> to vector<32x32xf32>
    %cst_101 = arith.constant 0.000000e+00 : f32
    %213 = vector.broadcast %cst_101 : f32 to vector<32x256xf32>
    %214 = arith.maximumf %210, %213 : vector<32x256xf32>
    %cst_102 = arith.constant dense<0.000000e+00> : vector<32x256xf32>
    %215 = tpu.matmul %212, %214, %cst_102 {dimension_numbers = #tpu.dot_dimension_numbers<[1], [0], [0], [1], [0, 0, 1, 1], [], []>} : vector<32x32xf32>, vector<32x256xf32>, vector<32x256xf32> -> vector<32x256xf32>
    %c2_103 = arith.constant 2 : index
    %c0_104 = arith.constant 0 : index
    %c0_105 = arith.constant 0 : index
    %216 = vector.load %arg13[%c2_103, %c0_104, %c0_105] : memref<3x32x1xf32, #tpu.memory_space<vmem>>, vector<1x32x1xf32>
    %217 = vector.shape_cast %216 : vector<1x32x1xf32> to vector<32x1xf32>
    %218 = vector.broadcast %217 : vector<32x1xf32> to vector<32x256xf32>
    %219 = arith.addf %215, %218 : vector<32x256xf32>
    %220 = arith.addf %201, %219 : vector<32x256xf32>
    %c0_106 = arith.constant 0 : index
    %c0_107 = arith.constant 0 : index
    %221 = vector.load %arg14[%c0_106, %c0_107] : memref<1x32xf32, #tpu.memory_space<vmem>>, vector<1x32xf32>
    %cst_108 = arith.constant 0.000000e+00 : f32
    %222 = vector.broadcast %cst_108 : f32 to vector<32x256xf32>
    %223 = arith.maximumf %220, %222 : vector<32x256xf32>
    %cst_109 = arith.constant dense<0.000000e+00> : vector<1x256xf32>
    %224 = tpu.matmul %221, %223, %cst_109 {dimension_numbers = #tpu.dot_dimension_numbers<[1], [0], [0], [1], [0, 0, 1, 1], [], []>} : vector<1x32xf32>, vector<32x256xf32>, vector<1x256xf32> -> vector<1x256xf32>
    %c0_110 = arith.constant 0 : index
    %c0_111 = arith.constant 0 : index
    %225 = vector.load %arg15[%c0_110, %c0_111] : memref<1x1xf32, #tpu.memory_space<vmem>>, vector<1x1xf32>
    %226 = vector.broadcast %225 : vector<1x1xf32> to vector<1x256xf32>
    %227 = arith.addf %224, %226 : vector<1x256xf32>
    %c0_112 = arith.constant 0 : index
    %c0_113 = arith.constant 0 : index
    %c0_114 = arith.constant 0 : index
    %228 = vector.load %arg16[%c0_112, %c0_113, %c0_114] : memref<1x1x256xf32, #tpu.memory_space<vmem>>, vector<1x1x256xf32>
    %229 = vector.shape_cast %228 : vector<1x1x256xf32> to vector<1x256xf32>
    %230 = vector.shape_cast %227 : vector<1x256xf32> to vector<1x1x256xf32>
    tpu.vector_store %arg16[%c0_112, %c0_113, %c0_114], %230 {strides = array<i32>} : memref<1x1x256xf32, #tpu.memory_space<vmem>>, vector<1x1x256xf32>,
    return
  }
  func.func @transform_0(%arg0: i32, %arg1: i32) -> (i32, i32, i32) {
    %c0_i32 = arith.constant 0 : i32
    %c0_i32_0 = arith.constant 0 : i32
    return %arg0, %c0_i32, %arg1 : i32, i32, i32
  }
  func.func @transform_1(%arg0: i32, %arg1: i32) -> (i32, i32, i32) {
    %c0_i32 = arith.constant 0 : i32
    %c0_i32_0 = arith.constant 0 : i32
    %c0_i32_1 = arith.constant 0 : i32
    return %arg0, %c0_i32, %c0_i32_0 : i32, i32, i32
  }
  func.func @transform_2(%arg0: i32, %arg1: i32) -> (i32, i32, i32) {
    %c0_i32 = arith.constant 0 : i32
    %c0_i32_0 = arith.constant 0 : i32
    %c0_i32_1 = arith.constant 0 : i32
    return %arg0, %c0_i32, %c0_i32_0 : i32, i32, i32
  }
  func.func @transform_3(%arg0: i32, %arg1: i32) -> (i32, i32, i32) {
    %c0_i32 = arith.constant 0 : i32
    %c0_i32_0 = arith.constant 0 : i32
    %c0_i32_1 = arith.constant 0 : i32
    return %arg0, %c0_i32, %c0_i32_0 : i32, i32, i32
  }
  func.func @transform_4(%arg0: i32, %arg1: i32) -> (i32, i32) {
    %c0_i32 = arith.constant 0 : i32
    %c0_i32_0 = arith.constant 0 : i32
    %c0_i32_1 = arith.constant 0 : i32
    return %c0_i32, %c0_i32_0 : i32, i32
  }
  func.func @transform_5(%arg0: i32, %arg1: i32) -> (i32, i32) {
    %c0_i32 = arith.constant 0 : i32
    %c0_i32_0 = arith.constant 0 : i32
    %c0_i32_1 = arith.constant 0 : i32
    return %c0_i32, %c0_i32_0 : i32, i32
  }
  func.func @transform_6(%arg0: i32, %arg1: i32) -> (i32, i32) {
    %c0_i32 = arith.constant 0 : i32
    %c0_i32_0 = arith.constant 0 : i32
    %c0_i32_1 = arith.constant 0 : i32
    return %c0_i32, %c0_i32_0 : i32, i32
  }
  func.func @transform_7(%arg0: i32, %arg1: i32) -> (i32, i32) {
    %c0_i32 = arith.constant 0 : i32
    %c0_i32_0 = arith.constant 0 : i32
    %c0_i32_1 = arith.constant 0 : i32
    return %c0_i32, %c0_i32_0 : i32, i32
  }
  func.func @transform_8(%arg0: i32, %arg1: i32) -> (i32, i32, i32) {
    %c0_i32 = arith.constant 0 : i32
    %c0_i32_0 = arith.constant 0 : i32
    %c0_i32_1 = arith.constant 0 : i32
    %c0_i32_2 = arith.constant 0 : i32
    return %c0_i32, %c0_i32_0, %c0_i32_1 : i32, i32, i32
  }
  func.func @transform_9(%arg0: i32, %arg1: i32) -> (i32, i32, i32) {
    %c0_i32 = arith.constant 0 : i32
    %c0_i32_0 = arith.constant 0 : i32
    %c0_i32_1 = arith.constant 0 : i32
    %c0_i32_2 = arith.constant 0 : i32
    return %c0_i32, %c0_i32_0, %c0_i32_1 : i32, i32, i32
  }
  func.func @transform_10(%arg0: i32, %arg1: i32) -> (i32, i32, i32) {
    %c0_i32 = arith.constant 0 : i32
    %c0_i32_0 = arith.constant 0 : i32
    %c0_i32_1 = arith.constant 0 : i32
    %c0_i32_2 = arith.constant 0 : i32
    return %c0_i32, %c0_i32_0, %c0_i32_1 : i32, i32, i32
  }
  func.func @transform_11(%arg0: i32, %arg1: i32) -> (i32, i32, i32) {
    %c0_i32 = arith.constant 0 : i32
    %c0_i32_0 = arith.constant 0 : i32
    %c0_i32_1 = arith.constant 0 : i32
    %c0_i32_2 = arith.constant 0 : i32
    return %c0_i32, %c0_i32_0, %c0_i32_1 : i32, i32, i32
  }
  func.func @transform_12(%arg0: i32, %arg1: i32) -> (i32, i32) {
    %c0_i32 = arith.constant 0 : i32
    %c0_i32_0 = arith.constant 0 : i32
    %c0_i32_1 = arith.constant 0 : i32
    return %c0_i32, %c0_i32_0 : i32, i32
  }
  func.func @transform_13(%arg0: i32, %arg1: i32) -> (i32, i32) {
    %c0_i32 = arith.constant 0 : i32
    %c0_i32_0 = arith.constant 0 : i32
    %c0_i32_1 = arith.constant 0 : i32
    return %c0_i32, %c0_i32_0 : i32, i32
  }
  func.func @transform_14(%arg0: i32, %arg1: i32) -> (i32, i32, i32) {
    %c0_i32 = arith.constant 0 : i32
    %c0_i32_0 = arith.constant 0 : i32
    return %arg0, %c0_i32, %arg1 : i32, i32, i32
  }
}

</mosaic_0001>

<llo_original>
// kernel: tpu_custom_call.1
$region0: #{tpu_custom_call.1}
  #allocation0 [shape = 'u32[]', space=smem, size = 0x4, offset = 0x4, fixed_abs, tag = 'smem constant byte address 0x4 - core index']
  #allocation1 [shape = 'u32[144,128]{1,0:T(1,128)}', space=vmem, size = 0x12000, scoped, tag = 'internal scratch']
  #allocation2 [shape = 'f32[1,1]{1,0:T(1,128)S(1)}', space=vmem, size = 0x200, scoped, tag = 'scoped memory for tpu_custom_call.1']
  %s0 = inlined_call_operand.hbm [shape: f32[2,3,256], index: 0, kind: input, shape index: {}]
  %s1 = inlined_call_operand.hbm [shape: f32[2,64,16], index: 1, kind: input, shape index: {}]
  %s2 = inlined_call_operand.hbm [shape: f32[2,64,16], index: 2, kind: input, shape index: {}]
  %s3 = inlined_call_operand.hbm [shape: f32[2,64,16], index: 3, kind: input, shape index: {}]
  %s4 = inlined_call_operand.hbm [shape: f32[32,3], index: 4, kind: input, shape index: {}]
  %s5 = inlined_call_operand.hbm [shape: f32[32,1], index: 5, kind: input, shape index: {}]
  %s6 = inlined_call_operand.hbm [shape: f32[96,4], index: 6, kind: input, shape index: {}]
  %s7 = inlined_call_operand.hbm [shape: f32[96,1], index: 7, kind: input, shape index: {}]
  %s8 = inlined_call_operand.hbm [shape: f32[3,32,32], index: 8, kind: input, shape index: {}]
  %s9 = inlined_call_operand.hbm [shape: f32[3,32,1], index: 9, kind: input, shape index: {}]
  %s10 = inlined_call_operand.hbm [shape: f32[3,32,32], index: 10, kind: input, shape index: {}]
  %s11 = inlined_call_operand.hbm [shape: f32[3,32,1], index: 11, kind: input, shape index: {}]
  %s12 = inlined_call_operand.hbm [shape: f32[1,32], index: 12, kind: input, shape index: {}]
  %s13 = inlined_call_operand.<no memory space> [shape: f32[1,1], index: 13, kind: input, shape index: {}]
  %s14 = inlined_call_operand.hbm [shape: f32[2,1,256], index: 14, kind: output, shape index: {}]
  %s15 = sld [smem:[#allocation0]]
  $region141: #{tpu_custom_call.1} parent=0
    _
  %s17 = ssub.s32 1, %s15
  %s18 = scalar_select 0, %s17, %s15
  %v19 = vstv %s13
  %20 = vst [vmem:[#allocation2] sm:$0x1] %v19
  $region1: #{tpu_custom_call.1} parent=0
    #allocation3 [shape = 'u8[8192]{0}', space=vmem, size = 0x2000, scoped, tag = 'input window, operand 0']
    #allocation4 [shape = 's32[2]{0}', space=sflag, size = 0x8, scoped, tag = 'scoped memory for tpu_custom_call.1']
    #allocation5 [shape = 's32[2]{0}', space=sflag, size = 0x8, scoped, tag = 'scoped memory for tpu_custom_call.1']
    #allocation6 [shape = 'u8[65536]{0}', space=vmem, size = 0x10000, scoped, tag = 'input window, operand 1']
    #allocation7 [shape = 's32[2]{0}', space=sflag, size = 0x8, scoped, tag = 'scoped memory for tpu_custom_call.1']
    #allocation8 [shape = 'u8[65536]{0}', space=vmem, size = 0x10000, scoped, tag = 'input window, operand 2']
    #allocation9 [shape = 'u8[65536]{0}', space=vmem, size = 0x10000, scoped, tag = 'input window, operand 3']
    #allocation10 [shape = 's32[2]{0}', space=sflag, size = 0x8, scoped, tag = 'scoped memory for tpu_custom_call.1']
    #allocation11 [shape = 'u8[16384]{0}', space=vmem, size = 0x4000, scoped, tag = 'input window, operand 4, single buffered']
    #allocation12 [shape = 'u8[16384]{0}', space=vmem, size = 0x4000, scoped, tag = 'input window, operand 5, single buffered']
    #allocation13 [shape = 's32[1]{0}', space=sflag, size = 0x4, scoped, tag = 'scoped memory for tpu_custom_call.1']
    #allocation14 [shape = 'u8[49152]{0}', space=vmem, size = 0xc000, scoped, tag = 'input window, operand 6, single buffered']
    #allocation15 [shape = 'u8[49152]{0}', space=vmem, size = 0xc000, scoped, tag = 'input window, operand 7, single buffered']
    #allocation16 [shape = 's32[1]{0}', space=sflag, size = 0x4, scoped, tag = 'scoped memory for tpu_custom_call.1']
    #allocation17 [shape = 'u8[49152]{0}', space=vmem, size = 0xc000, scoped, tag = 'input window, operand 8, single buffered']
    #allocation18 [shape = 'u8[49152]{0}', space=vmem, size = 0xc000, scoped, tag = 'input window, operand 9, single buffered']
    #allocation19 [shape = 's32[1]{0}', space=sflag, size = 0x4, scoped, tag = 'scoped memory for tpu_custom_call.1']
    #allocation20 [shape = 'u8[49152]{0}', space=vmem, size = 0xc000, scoped, tag = 'input window, operand 10, single buffered']
    #allocation21 [shape = 'u8[49152]{0}', space=vmem, size = 0xc000, scoped, tag = 'input window, operand 11, single buffered']
    #allocation22 [shape = 's32[1]{0}', space=sflag, size = 0x4, scoped, tag = 'scoped memory for tpu_custom_call.1']
    #allocation23 [shape = 'u8[512]{0}', space=vmem, size = 0x400, scoped, tag = 'input window, operand 12, single buffered']
    #allocation24 [shape = 'u8[2048]{0}', space=vmem, size = 0x800, scoped, tag = 'output window, operand 0']
    %21 = vsyncpa [#allocation4], 0
    %s22 = scalar_lea.sflag [#allocation4], 1
    %23 = vsyncpa %s22, 0
    %24 = vsyncpa [#allocation7], 0
    %s25 = scalar_lea.sflag [#allocation7], 1
    %26 = vsyncpa %s25, 0
    %27 = vsyncpa [#allocation10], 0
    %s28 = scalar_lea.sflag [#allocation10], 1
    %29 = vsyncpa %s28, 0
    %30 = vsyncpa [#allocation13], 0
    %31 = vsyncpa [#allocation16], 0
    %32 = vsyncpa [#allocation19], 0
    %33 = vsyncpa [#allocation22], 0
    %34 = vsyncpa [#allocation5], 0
    %s35 = scalar_lea.sflag [#allocation5], 1
    %36 = vsyncpa %s35, 0
    loop: start=0, step=1, limit=4
    $region2: #{tpu_custom_call.1} parent=1 // loop_pre_header
      _
    $region3: #{tpu_custom_call.1} parent=1 // loop_header
      %s38 = sphi 0, %s42
      %p39 = scmp.ge.s32.totalorder %s38, 4
      %s45 = sphi 0, %s57
      %s46 = sphi 0, %s53
      %s47 = sphi 0, %s45
      %s48 = sphi 0, %s46
      %s49 = sphi 0, %s47
      %s50 = sphi 0, %s48
      %s62 = sphi 0, %s64
      %s65 = sphi 0, %s62
      %s66 = sphi 0, %s65
      %s82 = sphi 0, %s66
      %s88 = sphi 0, %s90
      %s91 = sphi 0, %s88
      %s92 = sphi 0, %s91
      %s108 = sphi 0, %s92
      %s114 = sphi 0, %s116
      %s117 = sphi 0, %s114
      %s118 = sphi 0, %s117
      %s134 = sphi 0, %s118
      %s140 = sphi 0, %s142
      %s143 = sphi 0, %s140
      %s144 = sphi 0, %s143
      %s160 = sphi 0, %s144
      %s164 = sphi 0, %s164
      %s166 = sphi 0, %s164
      %s167 = sphi 0, %s166
      %s181 = sphi 0, %s167
      %s185 = sphi 0, %s185
      %s187 = sphi 0, %s185
      %s188 = sphi 0, %s187
      %s202 = sphi 0, %s188
      %s206 = sphi 0, %s206
      %s208 = sphi 0, %s206
      %s209 = sphi 0, %s208
      %s223 = sphi 0, %s209
      %s227 = sphi 0, %s227
      %s229 = sphi 0, %s227
      %s230 = sphi 0, %s229
      %s244 = sphi 0, %s230
      %s248 = sphi 0, %s248
      %s250 = sphi 0, %s248
      %s251 = sphi 0, %s250
      %s265 = sphi 0, %s251
      %s269 = sphi 0, %s269
      %s271 = sphi 0, %s269
      %s272 = sphi 0, %s271
      %s286 = sphi 0, %s272
      %s290 = sphi 0, %s290
      %s292 = sphi 0, %s290
      %s293 = sphi 0, %s292
      %s307 = sphi 0, %s293
      %s311 = sphi 0, %s311
      %s313 = sphi 0, %s311
      %s314 = sphi 0, %s313
      %s328 = sphi 0, %s314
      %s332 = sphi 0, %s332
      %s334 = sphi 0, %s332
      %s335 = sphi 0, %s334
      %s349 = sphi 0, %s335
      %s353 = sphi 0, %s353
      %s355 = sphi 0, %s353
      %s356 = sphi 0, %s355
      %s370 = sphi 0, %s356
      %s378 = sphi 0, %s380
      %s381 = sphi 0, %s378
      %s382 = sphi 0, %s381
      %s398 = sphi 0, %s382
    $region4: #{tpu_custom_call.1} parent=1 // loop_header_branch
      %41 = sbr.rel (%p39) target = $region8
    $region5: #{tpu_custom_call.1} parent=1 // loop_body
      %s43 = ssub.s32 %s38, 1
      %s44 = ssub.s32 %s38, 2
      %s51 = sadd.s32 1, %s46
      %p52 = scmp.ge.s32.totalorder %s51, 1
      %s53 = scalar_select %p52, 0, %s51
      %s54 = sadd.s32 1, %s45
      %s55 = scalar_select %p52, %s54, %s45
      %p56 = scmp.ge.s32.totalorder %s55, 2
      %s57 = scalar_select %p56, 0, %s55
      %s58 = ssub.s32 %s45, %s57
      %s59 = ssub.s32 %s46, %s53
      %s60 = sor.u32 %s58, %s59
      %p61 = scmp.eq.s32.totalorder %s60, 0
      %s63 = sadd.s32 %s62, 1
      %s64 = scalar_select %p61, %s62, %s63
      %p67 = pneg %p61
      %p68 = scmp.eq.s32.totalorder %s38, 1
      %p69 = por %p67, %p68
      %p70 = scmp.ne.s32.totalorder %s62, %s65
      %p71 = scmp.eq.s32.totalorder %s38, 0
      %p72 = por %p70, %p71
      %p73 = scmp.ne.s32.totalorder %s62, %s65
      %p74 = scmp.eq.s32.totalorder %s43, 1
      %p75 = por %p73, %p74
      %p76 = scmp.ne.s32.totalorder %s65, %s66
      %p77 = scmp.eq.s32.totalorder %s43, 0
      %p78 = por %p76, %p77
      %p79 = scmp.ne.s32.totalorder %s65, %s66
      %p80 = scmp.eq.s32.totalorder %s44, 1
      %p81 = por %p79, %p80
      %p83 = scmp.ne.s32.totalorder %s66, %s82
      %p84 = scmp.eq.s32.totalorder %s44, 0
      %p85 = por %p83, %p84
      %s86 = ssub.s32 %s45, %s57
      %p87 = scmp.eq.s32.totalorder %s86, 0
      %s89 = sadd.s32 %s88, 1
      %s90 = scalar_select %p87, %s88, %s89
      %p93 = pneg %p87
      %p94 = scmp.eq.s32.totalorder %s38, 1
      %p95 = por %p93, %p94
      %p96 = scmp.ne.s32.totalorder %s88, %s91
      %p97 = scmp.eq.s32.totalorder %s38, 0
      %p98 = por %p96, %p97
      %p99 = scmp.ne.s32.totalorder %s88, %s91
      %p100 = scmp.eq.s32.totalorder %s43, 1
      %p101 = por %p99, %p100
      %p102 = scmp.ne.s32.totalorder %s91, %s92
      %p103 = scmp.eq.s32.totalorder %s43, 0
      %p104 = por %p102, %p103
      %p105 = scmp.ne.s32.totalorder %s91, %s92
      %p106 = scmp.eq.s32.totalorder %s44, 1
      %p107 = por %p105, %p106
      %p109 = scmp.ne.s32.totalorder %s92, %s108
      %p110 = scmp.eq.s32.totalorder %s44, 0
      %p111 = por %p109, %p110
      %s112 = ssub.s32 %s45, %s57
      %p113 = scmp.eq.s32.totalorder %s112, 0
      %s115 = sadd.s32 %s114, 1
      %s116 = scalar_select %p113, %s114, %s115
      %p119 = pneg %p113
      %p120 = scmp.eq.s32.totalorder %s38, 1
      %p121 = por %p119, %p120
      %p122 = scmp.ne.s32.totalorder %s114, %s117
      %p123 = scmp.eq.s32.totalorder %s38, 0
      %p124 = por %p122, %p123
      %p125 = scmp.ne.s32.totalorder %s114, %s117
      %p126 = scmp.eq.s32.totalorder %s43, 1
      %p127 = por %p125, %p126
      %p128 = scmp.ne.s32.totalorder %s117, %s118
      %p129 = scmp.eq.s32.totalorder %s43, 0
      %p130 = por %p128, %p129
      %p131 = scmp.ne.s32.totalorder %s117, %s118
      %p132 = scmp.eq.s32.totalorder %s44, 1
      %p133 = por %p131, %p132
      %p135 = scmp.ne.s32.totalorder %s118, %s134
      %p136 = scmp.eq.s32.totalorder %s44, 0
      %p137 = por %p135, %p136
      %s138 = ssub.s32 %s45, %s57
      %p139 = scmp.eq.s32.totalorder %s138, 0
      %s141 = sadd.s32 %s140, 1
      %s142 = scalar_select %p139, %s140, %s141
      %p145 = pneg %p139
      %p146 = scmp.eq.s32.totalorder %s38, 1
      %p147 = por %p145, %p146
      %p148 = scmp.ne.s32.totalorder %s140, %s143
      %p149 = scmp.eq.s32.totalorder %s38, 0
      %p150 = por %p148, %p149
      %p151 = scmp.ne.s32.totalorder %s140, %s143
      %p152 = scmp.eq.s32.totalorder %s43, 1
      %p153 = por %p151, %p152
      %p154 = scmp.ne.s32.totalorder %s143, %s144
      %p155 = scmp.eq.s32.totalorder %s43, 0
      %p156 = por %p154, %p155
      %p157 = scmp.ne.s32.totalorder %s143, %s144
      %p158 = scmp.eq.s32.totalorder %s44, 1
      %p159 = por %p157, %p158
      %p161 = scmp.ne.s32.totalorder %s144, %s160
      %p162 = scmp.eq.s32.totalorder %s44, 0
      %p163 = por %p161, %p162
      %s165 = sadd.s32 %s164, 1
      %p168 = scmp.eq.s32.totalorder %s38, 1
      %p169 = scmp.ne.s32.totalorder %s164, %s166
      %p170 = scmp.eq.s32.totalorder %s38, 0
      %p171 = por %p169, %p170
      %p172 = scmp.ne.s32.totalorder %s164, %s166
      %p173 = scmp.eq.s32.totalorder %s43, 1
      %p174 = por %p172, %p173
      %p175 = scmp.ne.s32.totalorder %s166, %s167
      %p176 = scmp.eq.s32.totalorder %s43, 0
      %p177 = por %p175, %p176
      %p178 = scmp.ne.s32.totalorder %s166, %s167
      %p179 = scmp.eq.s32.totalorder %s44, 1
      %p180 = por %p178, %p179
      %p182 = scmp.ne.s32.totalorder %s167, %s181
      %p183 = scmp.eq.s32.totalorder %s44, 0
      %p184 = por %p182, %p183
      %s186 = sadd.s32 %s185, 1
      %p189 = scmp.eq.s32.totalorder %s38, 1
      %p190 = scmp.ne.s32.totalorder %s185, %s187
      %p191 = scmp.eq.s32.totalorder %s38, 0
      %p192 = por %p190, %p191
      %p193 = scmp.ne.s32.totalorder %s185, %s187
      %p194 = scmp.eq.s32.totalorder %s43, 1
      %p195 = por %p193, %p194
      %p196 = scmp.ne.s32.totalorder %s187, %s188
      %p197 = scmp.eq.s32.totalorder %s43, 0
      %p198 = por %p196, %p197
      %p199 = scmp.ne.s32.totalorder %s187, %s188
      %p200 = scmp.eq.s32.totalorder %s44, 1
      %p201 = por %p199, %p200
      %p203 = scmp.ne.s32.totalorder %s188, %s202
      %p204 = scmp.eq.s32.totalorder %s44, 0
      %p205 = por %p203, %p204
      %s207 = sadd.s32 %s206, 1
      %p210 = scmp.eq.s32.totalorder %s38, 1
      %p211 = scmp.ne.s32.totalorder %s206, %s208
      %p212 = scmp.eq.s32.totalorder %s38, 0
      %p213 = por %p211, %p212
      %p214 = scmp.ne.s32.totalorder %s206, %s208
      %p215 = scmp.eq.s32.totalorder %s43, 1
      %p216 = por %p214, %p215
      %p217 = scmp.ne.s32.totalorder %s208, %s209
      %p218 = scmp.eq.s32.totalorder %s43, 0
      %p219 = por %p217, %p218
      %p220 = scmp.ne.s32.totalorder %s208, %s209
      %p221 = scmp.eq.s32.totalorder %s44, 1
      %p222 = por %p220, %p221
      %p224 = scmp.ne.s32.totalorder %s209, %s223
      %p225 = scmp.eq.s32.totalorder %s44, 0
      %p226 = por %p224, %p225
      %s228 = sadd.s32 %s227, 1
      %p231 = scmp.eq.s32.totalorder %s38, 1
      %p232 = scmp.ne.s32.totalorder %s227, %s229
      %p233 = scmp.eq.s32.totalorder %s38, 0
      %p234 = por %p232, %p233
      %p235 = scmp.ne.s32.totalorder %s227, %s229
      %p236 = scmp.eq.s32.totalorder %s43, 1
      %p237 = por %p235, %p236
      %p238 = scmp.ne.s32.totalorder %s229, %s230
      %p239 = scmp.eq.s32.totalorder %s43, 0
      %p240 = por %p238, %p239
      %p241 = scmp.ne.s32.totalorder %s229, %s230
      %p242 = scmp.eq.s32.totalorder %s44, 1
      %p243 = por %p241, %p242
      %p245 = scmp.ne.s32.totalorder %s230, %s244
      %p246 = scmp.eq.s32.totalorder %s44, 0
      %p247 = por %p245, %p246
      %s249 = sadd.s32 %s248, 1
      %p252 = scmp.eq.s32.totalorder %s38, 1
      %p253 = scmp.ne.s32.totalorder %s248, %s250
      %p254 = scmp.eq.s32.totalorder %s38, 0
      %p255 = por %p253, %p254
      %p256 = scmp.ne.s32.totalorder %s248, %s250
      %p257 = scmp.eq.s32.totalorder %s43, 1
      %p258 = por %p256, %p257
      %p259 = scmp.ne.s32.totalorder %s250, %s251
      %p260 = scmp.eq.s32.totalorder %s43, 0
      %p261 = por %p259, %p260
      %p262 = scmp.ne.s32.totalorder %s250, %s251
      %p263 = scmp.eq.s32.totalorder %s44, 1
      %p264 = por %p262, %p263
      %p266 = scmp.ne.s32.totalorder %s251, %s265
      %p267 = scmp.eq.s32.totalorder %s44, 0
      %p268 = por %p266, %p267
      %s270 = sadd.s32 %s269, 1
      %p273 = scmp.eq.s32.totalorder %s38, 1
      %p274 = scmp.ne.s32.totalorder %s269, %s271
      %p275 = scmp.eq.s32.totalorder %s38, 0
      %p276 = por %p274, %p275
      %p277 = scmp.ne.s32.totalorder %s269, %s271
      %p278 = scmp.eq.s32.totalorder %s43, 1
      %p279 = por %p277, %p278
      %p280 = scmp.ne.s32.totalorder %s271, %s272
      %p281 = scmp.eq.s32.totalorder %s43, 0
      %p282 = por %p280, %p281
      %p283 = scmp.ne.s32.totalorder %s271, %s272
      %p284 = scmp.eq.s32.totalorder %s44, 1
      %p285 = por %p283, %p284
      %p287 = scmp.ne.s32.totalorder %s272, %s286
      %p288 = scmp.eq.s32.totalorder %s44, 0
      %p289 = por %p287, %p288
      %s291 = sadd.s32 %s290, 1
      %p294 = scmp.eq.s32.totalorder %s38, 1
      %p295 = scmp.ne.s32.totalorder %s290, %s292
      %p296 = scmp.eq.s32.totalorder %s38, 0
      %p297 = por %p295, %p296
      %p298 = scmp.ne.s32.totalorder %s290, %s292
      %p299 = scmp.eq.s32.totalorder %s43, 1
      %p300 = por %p298, %p299
      %p301 = scmp.ne.s32.totalorder %s292, %s293
      %p302 = scmp.eq.s32.totalorder %s43, 0
      %p303 = por %p301, %p302
      %p304 = scmp.ne.s32.totalorder %s292, %s293
      %p305 = scmp.eq.s32.totalorder %s44, 1
      %p306 = por %p304, %p305
      %p308 = scmp.ne.s32.totalorder %s293, %s307
      %p309 = scmp.eq.s32.totalorder %s44, 0
      %p310 = por %p308, %p309
      %s312 = sadd.s32 %s311, 1
      %p315 = scmp.eq.s32.totalorder %s38, 1
      %p316 = scmp.ne.s32.totalorder %s311, %s313
      %p317 = scmp.eq.s32.totalorder %s38, 0
      %p318 = por %p316, %p317
      %p319 = scmp.ne.s32.totalorder %s311, %s313
      %p320 = scmp.eq.s32.totalorder %s43, 1
      %p321 = por %p319, %p320
      %p322 = scmp.ne.s32.totalorder %s313, %s314
      %p323 = scmp.eq.s32.totalorder %s43, 0
      %p324 = por %p322, %p323
      %p325 = scmp.ne.s32.totalorder %s313, %s314
      %p326 = scmp.eq.s32.totalorder %s44, 1
      %p327 = por %p325, %p326
      %p329 = scmp.ne.s32.totalorder %s314, %s328
      %p330 = scmp.eq.s32.totalorder %s44, 0
      %p331 = por %p329, %p330
      %s333 = sadd.s32 %s332, 1
      %p336 = scmp.eq.s32.totalorder %s38, 1
      %p337 = scmp.ne.s32.totalorder %s332, %s334
      %p338 = scmp.eq.s32.totalorder %s38, 0
      %p339 = por %p337, %p338
      %p340 = scmp.ne.s32.totalorder %s332, %s334
      %p341 = scmp.eq.s32.totalorder %s43, 1
      %p342 = por %p340, %p341
      %p343 = scmp.ne.s32.totalorder %s334, %s335
      %p344 = scmp.eq.s32.totalorder %s43, 0
      %p345 = por %p343, %p344
      %p346 = scmp.ne.s32.totalorder %s334, %s335
      %p347 = scmp.eq.s32.totalorder %s44, 1
      %p348 = por %p346, %p347
      %p350 = scmp.ne.s32.totalorder %s335, %s349
      %p351 = scmp.eq.s32.totalorder %s44, 0
      %p352 = por %p350, %p351
      %s354 = sadd.s32 %s353, 1
      %p357 = scmp.eq.s32.totalorder %s38, 1
      %p358 = scmp.ne.s32.totalorder %s353, %s355
      %p359 = scmp.eq.s32.totalorder %s38, 0
      %p360 = por %p358, %p359
      %p361 = scmp.ne.s32.totalorder %s353, %s355
      %p362 = scmp.eq.s32.totalorder %s43, 1
      %p363 = por %p361, %p362
      %p364 = scmp.ne.s32.totalorder %s355, %s356
      %p365 = scmp.eq.s32.totalorder %s43, 0
      %p366 = por %p364, %p365
      %p367 = scmp.ne.s32.totalorder %s355, %s356
      %p368 = scmp.eq.s32.totalorder %s44, 1
      %p369 = por %p367, %p368
      %p371 = scmp.ne.s32.totalorder %s356, %s370
      %p372 = scmp.eq.s32.totalorder %s44, 0
      %p373 = por %p371, %p372
      %s374 = ssub.s32 %s45, %s57
      %s375 = ssub.s32 %s46, %s53
      %s376 = sor.u32 %s374, %s375
      %p377 = scmp.eq.s32.totalorder %s376, 0
      %s379 = sadd.s32 %s378, 1
      %s380 = scalar_select %p377, %s378, %s379
      %p383 = pneg %p377
      %p384 = scmp.eq.s32.totalorder %s38, 1
      %p385 = por %p383, %p384
      %p386 = scmp.ne.s32.totalorder %s378, %s381
      %p387 = scmp.eq.s32.totalorder %s38, 0
      %p388 = por %p386, %p387
      %p389 = scmp.ne.s32.totalorder %s378, %s381
      %p390 = scmp.eq.s32.totalorder %s43, 1
      %p391 = por %p389, %p390
      %p392 = scmp.ne.s32.totalorder %s381, %s382
      %p393 = scmp.eq.s32.totalorder %s43, 0
      %p394 = por %p392, %p393
      %p395 = scmp.ne.s32.totalorder %s381, %s382
      %p396 = scmp.eq.s32.totalorder %s44, 1
      %p397 = por %p395, %p396
      %p399 = scmp.ne.s32.totalorder %s382, %s398
      %p400 = scmp.eq.s32.totalorder %s44, 0
      %p401 = por %p399, %p400
      %p402 = scmp.le.s32.totalorder 1, %s38
      %p403 = scmp.lt.s32.totalorder %s38, 3
      %p404 = pnand %p402, %p403
      %p405 = pneg %p404
      // Predicated region
      $region9: #{tpu_custom_call.1} parent=5 // pred_check
        _
      $region10: #{tpu_custom_call.1} parent=5 // pred_check_branch
        %407 = sbr.rel (%p404) target = $region12
      $region11: #{tpu_custom_call.1} parent=5 // pred_region
        %s408 = ssub.s32 %s38, 1
        // Predicated region
        $region13: #{tpu_custom_call.1} parent=11 // pred_check
          %p409 = pneg %p177
        $region14: #{tpu_custom_call.1} parent=11 // pred_check_branch
          %411 = sbr.rel (%p409) target = $region16
        $region15: #{tpu_custom_call.1} parent=11 // pred_region
          %s413 = ssub.s32 512, 512
          %414 = vsyncadd [#allocation10], %s413
          %s415 = sshll.u32 [#allocation11], 4
          %s416 = int_to_ptr.vmem [resolvable:$true] %s415
          %421 = dma.hbm_to_vmem [thread:$0]  %s4, 512, %s416, [#allocation10], 128, 128, 8
        $region16: #{tpu_custom_call.1} parent=11 // pred_fallthru
          _
        // Predicated region
        $region17: #{tpu_custom_call.1} parent=11 // pred_check
          %p422 = pneg %p198
        $region18: #{tpu_custom_call.1} parent=11 // pred_check_branch
          %424 = sbr.rel (%p422) target = $region20
        $region19: #{tpu_custom_call.1} parent=11 // pred_region
          %s426 = ssub.s32 512, 512
          %427 = vsyncadd [#allocation13], %s426
          %s428 = sshll.u32 [#allocation12], 4
          %s429 = int_to_ptr.vmem [resolvable:$true] %s428
          %434 = dma.hbm_to_vmem [thread:$0]  %s5, 512, %s429, [#allocation13], 128, 128, 8
        $region20: #{tpu_custom_call.1} parent=11 // pred_fallthru
          _
        // Predicated region
        $region21: #{tpu_custom_call.1} parent=11 // pred_check
          %p435 = pneg %p219
        $region22: #{tpu_custom_call.1} parent=11 // pred_check_branch
          %437 = sbr.rel (%p435) target = $region24
        $region23: #{tpu_custom_call.1} parent=11 // pred_region
          %s439 = ssub.s32 1536, 1536
          %440 = vsyncadd [#allocation13], %s439
          %s441 = sshll.u32 [#allocation14], 4
          %s442 = int_to_ptr.vmem [resolvable:$true] %s441
          %447 = dma.hbm_to_vmem [thread:$0]  %s6, 1536, %s442, [#allocation13], 128, 128, 8
        $region24: #{tpu_custom_call.1} parent=11 // pred_fallthru
          _
        // Predicated region
        $region25: #{tpu_custom_call.1} parent=11 // pred_check
          %p448 = pneg %p240
        $region26: #{tpu_custom_call.1} parent=11 // pred_check_branch
          %450 = sbr.rel (%p448) target = $region28
        $region27: #{tpu_custom_call.1} parent=11 // pred_region
          %s452 = ssub.s32 1536, 1536
          %453 = vsyncadd [#allocation16], %s452
          %s454 = sshll.u32 [#allocation15], 4
          %s455 = int_to_ptr.vmem [resolvable:$true] %s454
          %460 = dma.hbm_to_vmem [thread:$0]  %s7, 1536, %s455, [#allocation16], 128, 128, 8
        $region28: #{tpu_custom_call.1} parent=11 // pred_fallthru
          _
        // Predicated region
        $region29: #{tpu_custom_call.1} parent=11 // pred_check
          %p461 = pneg %p261
        $region30: #{tpu_custom_call.1} parent=11 // pred_check_branch
          %463 = sbr.rel (%p461) target = $region32
        $region31: #{tpu_custom_call.1} parent=11 // pred_region
          %s465 = ssub.s32 1536, 1536
          %466 = vsyncadd [#allocation16], %s465
          %s467 = sshll.u32 [#allocation17], 4
          %s468 = int_to_ptr.vmem [resolvable:$true] %s467
          %473 = dma.hbm_to_vmem [thread:$0]  %s8, 1536, %s468, [#allocation16], 128, 128, 8
        $region32: #{tpu_custom_call.1} parent=11 // pred_fallthru
          _
        // Predicated region
        $region33: #{tpu_custom_call.1} parent=11 // pred_check
          %p474 = pneg %p282
        $region34: #{tpu_custom_call.1} parent=11 // pred_check_branch
          %476 = sbr.rel (%p474) target = $region36
        $region35: #{tpu_custom_call.1} parent=11 // pred_region
          %s478 = ssub.s32 1536, 1536
          %479 = vsyncadd [#allocation19], %s478
          %s480 = sshll.u32 [#allocation18], 4
          %s481 = int_to_ptr.vmem [resolvable:$true] %s480
          %486 = dma.hbm_to_vmem [thread:$0]  %s9, 1536, %s481, [#allocation19], 128, 128, 8
        $region36: #{tpu_custom_call.1} parent=11 // pred_fallthru
          _
        // Predicated region
        $region37: #{tpu_custom_call.1} parent=11 // pred_check
          %p487 = pneg %p303
        $region38: #{tpu_custom_call.1} parent=11 // pred_check_branch
          %489 = sbr.rel (%p487) target = $region40
        $region39: #{tpu_custom_call.1} parent=11 // pred_region
          %s491 = ssub.s32 1536, 1536
          %492 = vsyncadd [#allocation19], %s491
          %s493 = sshll.u32 [#allocation20], 4
          %s494 = int_to_ptr.vmem [resolvable:$true] %s493
          %499 = dma.hbm_to_vmem [thread:$0]  %s10, 1536, %s494, [#allocation19], 128, 128, 8
        $region40: #{tpu_custom_call.1} parent=11 // pred_fallthru
          _
        // Predicated region
        $region41: #{tpu_custom_call.1} parent=11 // pred_check
          %p500 = pneg %p324
        $region42: #{tpu_custom_call.1} parent=11 // pred_check_branch
          %502 = sbr.rel (%p500) target = $region44
        $region43: #{tpu_custom_call.1} parent=11 // pred_region
          %s504 = ssub.s32 1536, 1536
          %505 = vsyncadd [#allocation22], %s504
          %s506 = sshll.u32 [#allocation21], 4
          %s507 = int_to_ptr.vmem [resolvable:$true] %s506
          %512 = dma.hbm_to_vmem [thread:$0]  %s11, 1536, %s507, [#allocation22], 128, 128, 8
        $region44: #{tpu_custom_call.1} parent=11 // pred_fallthru
          _
        // Predicated region
        $region45: #{tpu_custom_call.1} parent=11 // pred_check
          %p513 = pneg %p345
        $region46: #{tpu_custom_call.1} parent=11 // pred_check_branch
          %515 = sbr.rel (%p513) target = $region48
        $region47: #{tpu_custom_call.1} parent=11 // pred_region
          %s517 = ssub.s32 16, 16
          %518 = vsyncadd [#allocation22], %s517
          %s520 = sshll.u32 [#allocation23], 4
          %s521 = int_to_ptr.vmem [resolvable:$true] %s520
          %523 = dma.hbm_to_vmem [thread:$0]  %s12, 16, %s521, [#allocation22]
        $region48: #{tpu_custom_call.1} parent=11 // pred_fallthru
          _
        // Predicated region
        $region49: #{tpu_custom_call.1} parent=11 // pred_check
          %p524 = pneg %p366
        $region50: #{tpu_custom_call.1} parent=11 // pred_check_branch
          %526 = sbr.rel (%p524) target = $region52
        $region51: #{tpu_custom_call.1} parent=11 // pred_region
          _
        $region52: #{tpu_custom_call.1} parent=11 // pred_fallthru
          _
      $region12: #{tpu_custom_call.1} parent=5 // pred_fallthru
        _
      %p527 = scmp.lt.s32.totalorder %s38, 2
      // Predicated region
      $region53: #{tpu_custom_call.1} parent=5 // pred_check
        %p528 = pneg %p527
      $region54: #{tpu_custom_call.1} parent=5 // pred_check_branch
        %530 = sbr.rel (%p528) target = $region56
      $region55: #{tpu_custom_call.1} parent=5 // pred_region
        // Predicated region
        $region57: #{tpu_custom_call.1} parent=55 // pred_check
          %p531 = pneg %p72
        $region58: #{tpu_custom_call.1} parent=55 // pred_check_branch
          %533 = sbr.rel (%p531) target = $region60
        $region59: #{tpu_custom_call.1} parent=55 // pred_region
          %s534 = sand.u32 %s62, 1
          %s535 = scalar_lea.sflag [#allocation4], %s534
          %s536 = sand.u32 %s62, 1
          %s537 = smul.addr %s536, 8
          %s538 = scalar_lea.vmem [#allocation3], %s537
          %s539 = smul.u32 2, %s46
          %s541 = ssub.s32 128, 128
          %542 = vsyncadd %s535, %s541
          %s543 = smul.addr %s45, 2
          %s544 = sadd.s32 %s539, %s543
          %s545 = smul.addr %s544, 64
          %s546 = scalar_lea.hbm %s0, %s545
          %s548 = sshll.u32 %s538, 4
          %s549 = int_to_ptr.vmem [resolvable:$true] %s548
          %551 = dma.hbm_to_vmem [thread:$0]  %s546, 128, %s549, %s535
        $region60: #{tpu_custom_call.1} parent=55 // pred_fallthru
          _
        // Predicated region
        $region61: #{tpu_custom_call.1} parent=55 // pred_check
          %p552 = pneg %p98
        $region62: #{tpu_custom_call.1} parent=55 // pred_check_branch
          %554 = sbr.rel (%p552) target = $region64
        $region63: #{tpu_custom_call.1} parent=55 // pred_region
          %s555 = sand.u32 %s38, 1
          %s556 = scalar_lea.sflag [#allocation7], %s555
          %s557 = sand.u32 %s88, 1
          %s558 = smul.addr %s557, 64
          %s559 = scalar_lea.vmem [#allocation6], %s558
          %s561 = ssub.s32 1024, 1024
          %562 = vsyncadd %s556, %s561
          %s563 = smul.addr %s45, 8
          %s564 = smul.addr %s563, 128
          %s565 = scalar_lea.hbm %s1, %s564
          %s566 = sshll.u32 %s559, 4
          %s567 = int_to_ptr.vmem [resolvable:$true] %s566
          %572 = dma.hbm_to_vmem [thread:$0]  %s565, 1024, %s567, %s556, 128, 128, 8
        $region64: #{tpu_custom_call.1} parent=55 // pred_fallthru
          _
        // Predicated region
        $region65: #{tpu_custom_call.1} parent=55 // pred_check
          %p573 = pneg %p124
        $region66: #{tpu_custom_call.1} parent=55 // pred_check_branch
          %575 = sbr.rel (%p573) target = $region68
        $region67: #{tpu_custom_call.1} parent=55 // pred_region
          %s576 = sand.u32 %s38, 1
          %s577 = scalar_lea.sflag [#allocation7], %s576
          %s578 = sand.u32 %s114, 1
          %s579 = smul.addr %s578, 64
          %s580 = scalar_lea.vmem [#allocation8], %s579
          %s582 = ssub.s32 1024, 1024
          %583 = vsyncadd %s577, %s582
          %s584 = smul.addr %s45, 8
          %s585 = smul.addr %s584, 128
          %s586 = scalar_lea.hbm %s2, %s585
          %s587 = sshll.u32 %s580, 4
          %s588 = int_to_ptr.vmem [resolvable:$true] %s587
          %593 = dma.hbm_to_vmem [thread:$0]  %s586, 1024, %s588, %s577, 128, 128, 8
        $region68: #{tpu_custom_call.1} parent=55 // pred_fallthru
          _
        // Predicated region
        $region69: #{tpu_custom_call.1} parent=55 // pred_check
          %p594 = pneg %p150
        $region70: #{tpu_custom_call.1} parent=55 // pred_check_branch
          %596 = sbr.rel (%p594) target = $region72
        $region71: #{tpu_custom_call.1} parent=55 // pred_region
          %s597 = sand.u32 %s38, 1
          %s598 = scalar_lea.sflag [#allocation10], %s597
          %s599 = sand.u32 %s140, 1
          %s600 = smul.addr %s599, 64
          %s601 = scalar_lea.vmem [#allocation9], %s600
          %s603 = ssub.s32 1024, 1024
          %604 = vsyncadd %s598, %s603
          %s605 = smul.addr %s45, 8
          %s606 = smul.addr %s605, 128
          %s607 = scalar_lea.hbm %s3, %s606
          %s608 = sshll.u32 %s601, 4
          %s609 = int_to_ptr.vmem [resolvable:$true] %s608
          %614 = dma.hbm_to_vmem [thread:$0]  %s607, 1024, %s609, %s598, 128, 128, 8
        $region72: #{tpu_custom_call.1} parent=55 // pred_fallthru
          _
      $region56: #{tpu_custom_call.1} parent=5 // pred_fallthru
        _
      %p615 = scmp.le.s32.totalorder 1, %s38
      %p616 = scmp.lt.s32.totalorder %s38, 3
      %p617 = pnand %p615, %p616
      %p618 = pneg %p617
      // Predicated region
      $region73: #{tpu_custom_call.1} parent=5 // pred_check
        _
      $region74: #{tpu_custom_call.1} parent=5 // pred_check_branch
        %620 = sbr.rel (%p617) target = $region76
      $region75: #{tpu_custom_call.1} parent=5 // pred_region
        %s621 = ssub.s32 %s38, 1
        %s622 = sand.u32 %s65, 1
        %s623 = scalar_lea.sflag [#allocation4], %s622
        %s624 = sand.u32 %s65, 1
        %s625 = smul.addr %s624, 8
        %s626 = scalar_lea.vmem [#allocation3], %s625
        // Predicated region
        $region77: #{tpu_custom_call.1} parent=75 // pred_check
          %p627 = pneg %p78
        $region78: #{tpu_custom_call.1} parent=75 // pred_check_branch
          %629 = sbr.rel (%p627) target = $region80
        $region79: #{tpu_custom_call.1} parent=75 // pred_region
          %630 = dma.done %s623, 128
        $region80: #{tpu_custom_call.1} parent=75 // pred_fallthru
          _
        %s631 = sand.u32 %s43, 1
        %s632 = scalar_lea.sflag [#allocation7], %s631
        %s633 = sand.u32 %s91, 1
        %s634 = smul.addr %s633, 64
        %s635 = scalar_lea.vmem [#allocation6], %s634
        // Predicated region
        $region81: #{tpu_custom_call.1} parent=75 // pred_check
          %p636 = pneg %p104
        $region82: #{tpu_custom_call.1} parent=75 // pred_check_branch
          %638 = sbr.rel (%p636) target = $region84
        $region83: #{tpu_custom_call.1} parent=75 // pred_region
          %639 = dma.done %s632, 1024
        $region84: #{tpu_custom_call.1} parent=75 // pred_fallthru
          _
        %s640 = sand.u32 %s43, 1
        %s641 = scalar_lea.sflag [#allocation7], %s640
        %s642 = sand.u32 %s117, 1
        %s643 = smul.addr %s642, 64
        %s644 = scalar_lea.vmem [#allocation8], %s643
        // Predicated region
        $region85: #{tpu_custom_call.1} parent=75 // pred_check
          %p645 = pneg %p130
        $region86: #{tpu_custom_call.1} parent=75 // pred_check_branch
          %647 = sbr.rel (%p645) target = $region88
        $region87: #{tpu_custom_call.1} parent=75 // pred_region
          %648 = dma.done %s641, 1024
        $region88: #{tpu_custom_call.1} parent=75 // pred_fallthru
          _
        %s649 = sand.u32 %s43, 1
        %s650 = scalar_lea.sflag [#allocation10], %s649
        %s651 = sand.u32 %s143, 1
        %s652 = smul.addr %s651, 64
        %s653 = scalar_lea.vmem [#allocation9], %s652
        // Predicated region
        $region89: #{tpu_custom_call.1} parent=75 // pred_check
          %p654 = pneg %p156
        $region90: #{tpu_custom_call.1} parent=75 // pred_check_branch
          %656 = sbr.rel (%p654) target = $region92
        $region91: #{tpu_custom_call.1} parent=75 // pred_region
          %657 = dma.done %s650, 1024
        $region92: #{tpu_custom_call.1} parent=75 // pred_fallthru
          _
        // Predicated region
        $region93: #{tpu_custom_call.1} parent=75 // pred_check
          %p658 = pneg %p177
        $region94: #{tpu_custom_call.1} parent=75 // pred_check_branch
          %660 = sbr.rel (%p658) target = $region96
        $region95: #{tpu_custom_call.1} parent=75 // pred_region
          %661 = dma.done [#allocation10], 512
        $region96: #{tpu_custom_call.1} parent=75 // pred_fallthru
          _
        // Predicated region
        $region97: #{tpu_custom_call.1} parent=75 // pred_check
          %p662 = pneg %p198
        $region98: #{tpu_custom_call.1} parent=75 // pred_check_branch
          %664 = sbr.rel (%p662) target = $region100
        $region99: #{tpu_custom_call.1} parent=75 // pred_region
          %665 = dma.done [#allocation13], 512
        $region100: #{tpu_custom_call.1} parent=75 // pred_fallthru
          _
        // Predicated region
        $region101: #{tpu_custom_call.1} parent=75 // pred_check
          %p666 = pneg %p219
        $region102: #{tpu_custom_call.1} parent=75 // pred_check_branch
          %668 = sbr.rel (%p666) target = $region104
        $region103: #{tpu_custom_call.1} parent=75 // pred_region
          %669 = dma.done [#allocation13], 1536
        $region104: #{tpu_custom_call.1} parent=75 // pred_fallthru
          _
        // Predicated region
        $region105: #{tpu_custom_call.1} parent=75 // pred_check
          %p670 = pneg %p240
        $region106: #{tpu_custom_call.1} parent=75 // pred_check_branch
          %672 = sbr.rel (%p670) target = $region108
        $region107: #{tpu_custom_call.1} parent=75 // pred_region
          %673 = dma.done [#allocation16], 1536
        $region108: #{tpu_custom_call.1} parent=75 // pred_fallthru
          _
        // Predicated region
        $region109: #{tpu_custom_call.1} parent=75 // pred_check
          %p674 = pneg %p261
        $region110: #{tpu_custom_call.1} parent=75 // pred_check_branch
          %676 = sbr.rel (%p674) target = $region112
        $region111: #{tpu_custom_call.1} parent=75 // pred_region
          %677 = dma.done [#allocation16], 1536
        $region112: #{tpu_custom_call.1} parent=75 // pred_fallthru
          _
        // Predicated region
        $region113: #{tpu_custom_call.1} parent=75 // pred_check
          %p678 = pneg %p282
        $region114: #{tpu_custom_call.1} parent=75 // pred_check_branch
          %680 = sbr.rel (%p678) target = $region116
        $region115: #{tpu_custom_call.1} parent=75 // pred_region
          %681 = dma.done [#allocation19], 1536
        $region116: #{tpu_custom_call.1} parent=75 // pred_fallthru
          _
        // Predicated region
        $region117: #{tpu_custom_call.1} parent=75 // pred_check
          %p682 = pneg %p303
        $region118: #{tpu_custom_call.1} parent=75 // pred_check_branch
          %684 = sbr.rel (%p682) target = $region120
        $region119: #{tpu_custom_call.1} parent=75 // pred_region
          %685 = dma.done [#allocation19], 1536
        $region120: #{tpu_custom_call.1} parent=75 // pred_fallthru
          _
        // Predicated region
        $region121: #{tpu_custom_call.1} parent=75 // pred_check
          %p686 = pneg %p324
        $region122: #{tpu_custom_call.1} parent=75 // pred_check_branch
          %688 = sbr.rel (%p686) target = $region124
        $region123: #{tpu_custom_call.1} parent=75 // pred_region
          %689 = dma.done [#allocation22], 1536
        $region124: #{tpu_custom_call.1} parent=75 // pred_fallthru
          _
        // Predicated region
        $region125: #{tpu_custom_call.1} parent=75 // pred_check
          %p690 = pneg %p345
        $region126: #{tpu_custom_call.1} parent=75 // pred_check_branch
          %692 = sbr.rel (%p690) target = $region128
        $region127: #{tpu_custom_call.1} parent=75 // pred_region
          %693 = dma.done [#allocation22], 16
        $region128: #{tpu_custom_call.1} parent=75 // pred_fallthru
          _
        %s694 = sand.u32 %s65, 1
        %s695 = scalar_lea.sflag [#allocation4], %s694
        %s696 = sand.u32 %s65, 1
        %s697 = smul.addr %s696, 8
        %s698 = scalar_lea.vmem [#allocation3], %s697
        %p699 = pneg %p78
        %p700 = pneg %p75
        %s701 = sand.u32 %s43, 1
        %s702 = scalar_lea.sflag [#allocation7], %s701
        %s703 = sand.u32 %s91, 1
        %s704 = smul.addr %s703, 64
        %s705 = scalar_lea.vmem [#allocation6], %s704
        %p706 = pneg %p104
        %p707 = pneg %p101
        %s708 = sand.u32 %s43, 1
        %s709 = scalar_lea.sflag [#allocation7], %s708
        %s710 = sand.u32 %s117, 1
        %s711 = smul.addr %s710, 64
        %s712 = scalar_lea.vmem [#allocation8], %s711
        %p713 = pneg %p130
        %p714 = pneg %p127
        %s715 = sand.u32 %s43, 1
        %s716 = scalar_lea.sflag [#allocation10], %s715
        %s717 = sand.u32 %s143, 1
        %s718 = smul.addr %s717, 64
        %s719 = scalar_lea.vmem [#allocation9], %s718
        %p720 = pneg %p156
        %p721 = pneg %p153
        %p722 = pneg %p177
        %p723 = pneg %p174
        %p724 = pneg %p198
        %p725 = pneg %p195
        %p726 = pneg %p219
        %p727 = pneg %p216
        %p728 = pneg %p240
        %p729 = pneg %p237
        %p730 = pneg %p261
        %p731 = pneg %p258
        %p732 = pneg %p282
        %p733 = pneg %p279
        %p734 = pneg %p303
        %p735 = pneg %p300
        %p736 = pneg %p324
        %p737 = pneg %p321
        %p738 = pneg %p345
        %p739 = pneg %p342
        %p740 = pneg %p366
        %p741 = pneg %p363
        %p742 = pneg %p394
        %p743 = pneg %p391
        %s744 = sand.u32 %s381, 1
        %s745 = scalar_lea.sflag [#allocation5], %s744
        %s746 = sand.u32 %s381, 1
        %s747 = smul.addr %s746, 2
        %s748 = scalar_lea.vmem [#allocation24], %s747
        %s749 = smul.u32 2, %s48
        %s750 = smul.u32 2, %s48
        %v751 = vld [vmem:[%s626] sm:$0x77]
        %v752 = vrcp.pop 1.10001
        %v753 = vmul.f32 %v751, %v752
        %v754 = vadd.f32 %v753, 0.5
        %vm755 = vcmp.ge.f32.partialorder %v754, 1.0
        %v756 = vsel %vm755, 0.99999, %v754
        %vm757 = vcmp.lt.f32.partialorder %v756, 0.0
        %v758 = vsel %vm757, 0.0, %v756
        %v759 = vmul.f32 %v758, 15.0
        %v760 = vfloor.f32 %v759
        %v761 = vsub.f32 %v759, %v760
        %v762 = vcvt.f32.s32.to.zero.pseudo %v760
        %v763 = vadd.s32 %v762, 1
        %vm764 = vcmp.lt.s32.totalorder %v763, 15
        %v765 = vsel %vm764, %v763, 15
        %v766 = vlaneseq
        %v767 = vshrl.u32 %v766, 7
        %v768 = vadd.s32 %v767, 8
        %v769 = vlaneseq
        %v770 = vshrl.u32 %v769, 7
        %v771 = vsub.s32 0, %v770
        %v772 = vrot.slane %v762, %v771
        %v773 = vlaneseq
        %v774 = vshrl.u32 %v773, 7
        %v775 = vsub.s32 4, %v774
        %v776 = vrot.slane %v762, %v775
        %v777 = vlaneseq
        %v778 = vshrl.u32 %v777, 7
        %v779 = vsub.s32 0, %v778
        %v780 = vrot.slane %v772, %v779
        %v781 = vlaneseq
        %v782 = vshrl.u32 %v781, 7
        %v783 = vsub.s32 0, %v782
        %v784 = vrot.slane %v776, %v783
        %vm785 = vcmp.eq.s32.totalorder %v767, %v780
        %vm786 = vcmp.eq.s32.totalorder %v767, %v784
        %vm787 = vcmp.eq.s32.totalorder %v768, %v780
        %vm788 = vcmp.eq.s32.totalorder %v768, %v784
        %v789 = vsub.f32 1.0, %v761
        %v791 = vlaneseq
        %v792 = vshrl.u32 %v791, 7
        %v793 = vsub.s32 0, %v792
        %v794 = vrot.slane %v789, %v793
        %v795 = vlaneseq
        %v796 = vshrl.u32 %v795, 7
        %v797 = vsub.s32 4, %v796
        %v798 = vrot.slane %v789, %v797
        %v801 = vlaneseq
        %v802 = vshrl.u32 %v801, 7
        %v803 = vsub.s32 0, %v802
        %v804 = vrot.slane %v794, %v803
        %v805 = vlaneseq
        %v806 = vshrl.u32 %v805, 7
        %v807 = vsub.s32 0, %v806
        %v808 = vrot.slane %v798, %v807
        %v809 = vsel %vm785, %v804, 0.0
        %v810 = vsel %vm786, %v808, 0.0
        %v811 = vsel %vm787, %v804, 0.0
        %v812 = vsel %vm788, %v808, 0.0
        %v813 = vlaneseq
        %v814 = vshrl.u32 %v813, 7
        %v815 = vsub.s32 0, %v814
        %v816 = vrot.slane %v765, %v815
        %v817 = vlaneseq
        %v818 = vshrl.u32 %v817, 7
        %v819 = vsub.s32 4, %v818
        %v820 = vrot.slane %v765, %v819
        %v821 = vlaneseq
        %v822 = vshrl.u32 %v821, 7
        %v823 = vsub.s32 0, %v822
        %v824 = vrot.slane %v816, %v823
        %v825 = vlaneseq
        %v826 = vshrl.u32 %v825, 7
        %v827 = vsub.s32 0, %v826
        %v828 = vrot.slane %v820, %v827
        %vm829 = vcmp.eq.s32.totalorder %v767, %v824
        %vm830 = vcmp.eq.s32.totalorder %v767, %v828
        %vm831 = vcmp.eq.s32.totalorder %v768, %v824
        %vm832 = vcmp.eq.s32.totalorder %v768, %v828
        %v834 = vlaneseq
        %v835 = vshrl.u32 %v834, 7
        %v836 = vsub.s32 0, %v835
        %v837 = vrot.slane %v761, %v836
        %v838 = vlaneseq
        %v839 = vshrl.u32 %v838, 7
        %v840 = vsub.s32 4, %v839
        %v841 = vrot.slane %v761, %v840
        %v844 = vlaneseq
        %v845 = vshrl.u32 %v844, 7
        %v846 = vsub.s32 0, %v845
        %v847 = vrot.slane %v837, %v846
        %v848 = vlaneseq
        %v849 = vshrl.u32 %v848, 7
        %v850 = vsub.s32 0, %v849
        %v851 = vrot.slane %v841, %v850
        %v852 = vsel %vm829, %v847, 0.0
        %v853 = vsel %vm830, %v851, 0.0
        %v854 = vsel %vm831, %v847, 0.0
        %v855 = vsel %vm832, %v851, 0.0
        %v856 = vadd.f32 %v809, %v852
        %v857 = vadd.f32 %v810, %v853
        %v858 = vadd.f32 %v811, %v854
        %v859 = vadd.f32 %v812, %v855
        %v860 = vlaneseq
        %v861 = vshrl.u32 %v860, 7
        %v862 = vsub.s32 2, %v861
        %v863 = vrot.slane %v762, %v862
        %v864 = vlaneseq
        %v865 = vshrl.u32 %v864, 7
        %v866 = vsub.s32 6, %v865
        %v867 = vrot.slane %v762, %v866
        %v868 = vlaneseq
        %v869 = vshrl.u32 %v868, 7
        %v870 = vsub.s32 2, %v869
        %v871 = vrot.slane %v863, %v870
        %v872 = vlaneseq
        %v873 = vshrl.u32 %v872, 7
        %v874 = vsub.s32 2, %v873
        %v875 = vrot.slane %v867, %v874
        %vm876 = vcmp.eq.s32.totalorder %v767, %v871
        %vm877 = vcmp.eq.s32.totalorder %v767, %v875
        %vm878 = vcmp.eq.s32.totalorder %v768, %v871
        %vm879 = vcmp.eq.s32.totalorder %v768, %v875
        %v880 = vlaneseq
        %v881 = vshrl.u32 %v880, 7
        %v882 = vsub.s32 2, %v881
        %v883 = vrot.slane %v789, %v882
        %v884 = vlaneseq
        %v885 = vshrl.u32 %v884, 7
        %v886 = vsub.s32 6, %v885
        %v887 = vrot.slane %v789, %v886
        %v890 = vlaneseq
        %v891 = vshrl.u32 %v890, 7
        %v892 = vsub.s32 2, %v891
        %v893 = vrot.slane %v883, %v892
        %v894 = vlaneseq
        %v895 = vshrl.u32 %v894, 7
        %v896 = vsub.s32 2, %v895
        %v897 = vrot.slane %v887, %v896
        %v898 = vsel %vm876, %v893, 0.0
        %v899 = vsel %vm877, %v897, 0.0
        %v900 = vsel %vm878, %v893, 0.0
        %v901 = vsel %vm879, %v897, 0.0
        %v902 = vlaneseq
        %v903 = vshrl.u32 %v902, 7
        %v904 = vsub.s32 2, %v903
        %v905 = vrot.slane %v765, %v904
        %v906 = vlaneseq
        %v907 = vshrl.u32 %v906, 7
        %v908 = vsub.s32 6, %v907
        %v909 = vrot.slane %v765, %v908
        %v910 = vlaneseq
        %v911 = vshrl.u32 %v910, 7
        %v912 = vsub.s32 2, %v911
        %v913 = vrot.slane %v905, %v912
        %v914 = vlaneseq
        %v915 = vshrl.u32 %v914, 7
        %v916 = vsub.s32 2, %v915
        %v917 = vrot.slane %v909, %v916
        %vm918 = vcmp.eq.s32.totalorder %v767, %v913
        %vm919 = vcmp.eq.s32.totalorder %v767, %v917
        %vm920 = vcmp.eq.s32.totalorder %v768, %v913
        %vm921 = vcmp.eq.s32.totalorder %v768, %v917
        %v922 = vlaneseq
        %v923 = vshrl.u32 %v922, 7
        %v924 = vsub.s32 2, %v923
        %v925 = vrot.slane %v761, %v924
        %v926 = vlaneseq
        %v927 = vshrl.u32 %v926, 7
        %v928 = vsub.s32 6, %v927
        %v929 = vrot.slane %v761, %v928
        %v932 = vlaneseq
        %v933 = vshrl.u32 %v932, 7
        %v934 = vsub.s32 2, %v933
        %v935 = vrot.slane %v925, %v934
        %v936 = vlaneseq
        %v937 = vshrl.u32 %v936, 7
        %v938 = vsub.s32 2, %v937
        %v939 = vrot.slane %v929, %v938
        %v940 = vsel %vm918, %v935, 0.0
        %v941 = vsel %vm919, %v939, 0.0
        %v942 = vsel %vm920, %v935, 0.0
        %v943 = vsel %vm921, %v939, 0.0
        %v944 = vadd.f32 %v898, %v940
        %v945 = vadd.f32 %v899, %v941
        %v946 = vadd.f32 %v900, %v942
        %v947 = vadd.f32 %v901, %v943
        %v948 = vld [vmem:[%s635] sm:$0xff]
        %v949 = vld [vmem:[%s635 + $0x8] sm:$0xff]
        %v950 = vld [vmem:[%s635 + $0x10] sm:$0xff]
        %v951 = vld [vmem:[%s635 + $0x18] sm:$0xff]
        %v952 = vld [vmem:[%s635 + $0x20] sm:$0xff]
        %v953 = vld [vmem:[%s635 + $0x28] sm:$0xff]
        %v954 = vld [vmem:[%s635 + $0x30] sm:$0xff]
        %v955 = vld [vmem:[%s635 + $0x38] sm:$0xff]
        %vm956 = vcmask 130048
        %v958 = vsel %vm956, %v948, 0
        %v961 = vsel %vm956, %v949, 0
        %v964 = vsel %vm956, %v950, 0
        %v967 = vsel %vm956, %v951, 0
        %v970 = vsel %vm956, %v952, 0
        %v973 = vsel %vm956, %v953, 0
        %v976 = vsel %vm956, %v954, 0
        %v979 = vsel %vm956, %v955, 0
        %981 = vmatprep.subr.mxu0 %v857
        %982 = vmatpush1.msra.mxu0 %v856
        %983 = vmatprep.subr.mxu0 %v859
        %984 = vmatpush1.msra.mxu0 %v858
        %985 = vmatprep.subr.mxu0 0.0
        %986 = vmatpush1.msra.mxu0 0.0
        %987 = vmatprep.subr.mxu0 0.0
        %988 = vmatpush1.msra.mxu0 0.0
        %989 = vmatprep.subr.mxu0 0.0
        %990 = vmatpush1.msra.mxu0 0.0
        %991 = vmatprep.subr.mxu0 0.0
        %992 = vmatpush1.msra.mxu0 0.0
        %993 = vmatprep.subr.mxu0 0.0
        %994 = vmatpush1.msra.mxu0 0.0
        %995 = vmatprep.subr.mxu0 0.0
        %996 = vmatpush1.msra.mxu0 0.0
        %997 = vmatprep.subr.mxu0 0.0
        %998 = vmatpush1.msra.mxu0 0.0
        %999 = vmatprep.subr.mxu0 0.0
        %1000 = vmatpush1.msra.mxu0 0.0
        %1001 = vmatprep.subr.mxu0 0.0
        %1002 = vmatpush1.msra.mxu0 0.0
        %1003 = vmatprep.subr.mxu0 0.0
        %1004 = vmatpush1.msra.mxu0 0.0
        %1005 = vmatprep.subr.mxu0 0.0
        %1006 = vmatpush1.msra.mxu0 0.0
        %1007 = vmatprep.subr.mxu0 0.0
        %1008 = vmatpush1.msra.mxu0 0.0
        %1009 = vmatprep.subr.mxu0 0.0
        %1010 = vmatpush1.msra.mxu0 0.0
        %1011 = vmatprep.subr.mxu0 0.0
        %1012 = vmatpush1.msra.mxu0 0.0
        %1013 = vmatprep.subr.mxu0 0.0
        %1014 = vmatpush1.msra.mxu0 0.0
        %1015 = vmatprep.subr.mxu0 0.0
        %1016 = vmatpush1.msra.mxu0 0.0
        %1017 = vmatprep.subr.mxu0 0.0
        %1018 = vmatpush1.msra.mxu0 0.0
        %1019 = vmatprep.subr.mxu0 0.0
        %1020 = vmatpush1.msra.mxu0 0.0
        %1021 = vmatprep.subr.mxu0 0.0
        %1022 = vmatpush1.msra.mxu0 0.0
        %1023 = vmatprep.subr.mxu0 0.0
        %1024 = vmatpush1.msra.mxu0 0.0
        %1025 = vmatprep.subr.mxu0 0.0
        %1026 = vmatpush1.msra.mxu0 0.0
        %1027 = vmatprep.subr.mxu0 0.0
        %1028 = vmatpush1.msra.mxu0 0.0
        %1029 = vmatprep.subr.mxu0 0.0
        %1030 = vmatpush1.msra.mxu0 0.0
        %1031 = vmatprep.subr.mxu0 0.0
        %1032 = vmatpush1.msra.mxu0 0.0
        %1033 = vmatprep.subr.mxu0 0.0
        %1034 = vmatpush1.msra.mxu0 0.0
        %1035 = vmatprep.subr.mxu0 0.0
        %1036 = vmatpush1.msra.mxu0 0.0
        %1037 = vmatprep.subr.mxu0 0.0
        %1038 = vmatpush1.msra.mxu0 0.0
        %1039 = vmatprep.subr.mxu0 0.0
        %1040 = vmatpush1.msra.mxu0 0.0
        %1041 = vmatprep.subr.mxu0 0.0
        %1042 = vmatpush1.msra.mxu0 0.0
        %1043 = vmatprep.subr.mxu0 0.0
        %1044 = vmatpush1.msra.mxu0 0.0
        %1045 = vmatprep.mubr.f32.mxu0 0.0
        %1046 = vmatmul.mubr.f32.gmra.mrb[0].mxu0 %v958
        %v1047 = vpop.f32.mrb[0].mxu0
        %v1048 = vadd.f32 0.0, %v1047
        %v1049 = vpop.f32.mrb[0].mxu0
        %v1050 = vadd.f32 0.0, %v1049
        %1051 = vmatprep.mubr.f32.mxu0 0.0
        %1052 = vmatmul.mubr.f32.gmra.mrb[0].mxu0 %v961
        %v1053 = vpop.f32.mrb[0].mxu0
        %v1054 = vadd.f32 0.0, %v1053
        %v1055 = vpop.f32.mrb[0].mxu0
        %v1056 = vadd.f32 0.0, %v1055
        %1057 = vmatprep.mubr.f32.mxu0 0.0
        %1058 = vmatmul.mubr.f32.gmra.mrb[0].mxu0 %v964
        %v1059 = vpop.f32.mrb[0].mxu0
        %v1060 = vadd.f32 0.0, %v1059
        %v1061 = vpop.f32.mrb[0].mxu0
        %v1062 = vadd.f32 0.0, %v1061
        %1063 = vmatprep.mubr.f32.mxu0 0.0
        %1064 = vmatmul.mubr.f32.gmra.mrb[0].mxu0 %v967
        %v1065 = vpop.f32.mrb[0].mxu0
        %v1066 = vadd.f32 0.0, %v1065
        %v1067 = vpop.f32.mrb[0].mxu0
        %v1068 = vadd.f32 0.0, %v1067
        %1069 = vmatprep.mubr.f32.mxu0 0.0
        %1070 = vmatmul.mubr.f32.gmra.mrb[0].mxu0 %v970
        %v1071 = vpop.f32.mrb[0].mxu0
        %v1072 = vadd.f32 0.0, %v1071
        %v1073 = vpop.f32.mrb[0].mxu0
        %v1074 = vadd.f32 0.0, %v1073
        %1075 = vmatprep.mubr.f32.mxu0 0.0
        %1076 = vmatmul.mubr.f32.gmra.mrb[0].mxu0 %v973
        %v1077 = vpop.f32.mrb[0].mxu0
        %v1078 = vadd.f32 0.0, %v1077
        %v1079 = vpop.f32.mrb[0].mxu0
        %v1080 = vadd.f32 0.0, %v1079
        %1081 = vmatprep.mubr.f32.mxu0 0.0
        %1082 = vmatmul.mubr.f32.gmra.mrb[0].mxu0 %v976
        %v1083 = vpop.f32.mrb[0].mxu0
        %v1084 = vadd.f32 0.0, %v1083
        %v1085 = vpop.f32.mrb[0].mxu0
        %v1086 = vadd.f32 0.0, %v1085
        %1087 = vmatprep.mubr.f32.mxu0 0.0
        %1088 = vmatmul.mubr.f32.gmra.mrb[0].mxu0 %v979
        %v1089 = vpop.f32.mrb[0].mxu0
        %v1090 = vadd.f32 0.0, %v1089
        %v1091 = vpop.f32.mrb[0].mxu0
        %v1092 = vadd.f32 0.0, %v1091
        %1093 = vdwg.mxu0
        %v1094 = vmul.f32 %v1048, %v944
        %v1095 = vmul.f32 %v1050, %v945
        %v1096 = vmul.f32 %v1054, %v946
        %v1097 = vmul.f32 %v1056, %v947
        %v1098 = vmul.f32 %v1060, %v944
        %v1099 = vmul.f32 %v1062, %v945
        %v1100 = vmul.f32 %v1066, %v946
        %v1101 = vmul.f32 %v1068, %v947
        %v1102 = vmul.f32 %v1072, %v944
        %v1103 = vmul.f32 %v1074, %v945
        %v1104 = vmul.f32 %v1078, %v946
        %v1105 = vmul.f32 %v1080, %v947
        %v1106 = vmul.f32 %v1084, %v944
        %v1107 = vmul.f32 %v1086, %v945
        %v1108 = vmul.f32 %v1090, %v946
        %v1109 = vmul.f32 %v1092, %v947
        %v1110 = vadd.f32 %v1094, %v1096
        %v1111 = vrot.slane %v1110, 4
        %v1112 = vadd.f32 %v1110, %v1111
        %v1113 = vrot.slane %v1112, 2
        %v1114 = vadd.f32 %v1112, %v1113
        %v1115 = vrot.slane %v1114, 1
        %v1116 = vadd.f32 %v1114, %v1115
        %v1117 = vadd.f32 %v1095, %v1097
        %v1118 = vrot.slane %v1117, 4
        %v1119 = vadd.f32 %v1117, %v1118
        %v1120 = vrot.slane %v1119, 2
        %v1121 = vadd.f32 %v1119, %v1120
        %v1122 = vrot.slane %v1121, 1
        %v1123 = vadd.f32 %v1121, %v1122
        %v1124 = vadd.f32 %v1098, %v1100
        %v1125 = vrot.slane %v1124, 4
        %v1126 = vadd.f32 %v1124, %v1125
        %v1127 = vrot.slane %v1126, 2
        %v1128 = vadd.f32 %v1126, %v1127
        %v1129 = vrot.slane %v1128, 1
        %v1130 = vadd.f32 %v1128, %v1129
        %v1131 = vadd.f32 %v1099, %v1101
        %v1132 = vrot.slane %v1131, 4
        %v1133 = vadd.f32 %v1131, %v1132
        %v1134 = vrot.slane %v1133, 2
        %v1135 = vadd.f32 %v1133, %v1134
        %v1136 = vrot.slane %v1135, 1
        %v1137 = vadd.f32 %v1135, %v1136
        %v1138 = vadd.f32 %v1102, %v1104
        %v1139 = vrot.slane %v1138, 4
        %v1140 = vadd.f32 %v1138, %v1139
        %v1141 = vrot.slane %v1140, 2
        %v1142 = vadd.f32 %v1140, %v1141
        %v1143 = vrot.slane %v1142, 1
        %v1144 = vadd.f32 %v1142, %v1143
        %v1145 = vadd.f32 %v1103, %v1105
        %v1146 = vrot.slane %v1145, 4
        %v1147 = vadd.f32 %v1145, %v1146
        %v1148 = vrot.slane %v1147, 2
        %v1149 = vadd.f32 %v1147, %v1148
        %v1150 = vrot.slane %v1149, 1
        %v1151 = vadd.f32 %v1149, %v1150
        %v1152 = vadd.f32 %v1106, %v1108
        %v1153 = vrot.slane %v1152, 4
        %v1154 = vadd.f32 %v1152, %v1153
        %v1155 = vrot.slane %v1154, 2
        %v1156 = vadd.f32 %v1154, %v1155
        %v1157 = vrot.slane %v1156, 1
        %v1158 = vadd.f32 %v1156, %v1157
        %v1159 = vadd.f32 %v1107, %v1109
        %v1160 = vrot.slane %v1159, 4
        %v1161 = vadd.f32 %v1159, %v1160
        %v1162 = vrot.slane %v1161, 2
        %v1163 = vadd.f32 %v1161, %v1162
        %v1164 = vrot.slane %v1163, 1
        %v1165 = vadd.f32 %v1163, %v1164
        %v1166 = vlaneseq
        %v1167 = vshrl.u32 %v1166, 7
        %v1168 = vsub.s32 1, %v1167
        %v1169 = vrot.slane %v762, %v1168
        %v1170 = vlaneseq
        %v1171 = vshrl.u32 %v1170, 7
        %v1172 = vsub.s32 5, %v1171
        %v1173 = vrot.slane %v762, %v1172
        %v1174 = vlaneseq
        %v1175 = vshrl.u32 %v1174, 7
        %v1176 = vsub.s32 1, %v1175
        %v1177 = vrot.slane %v1169, %v1176
        %v1178 = vlaneseq
        %v1179 = vshrl.u32 %v1178, 7
        %v1180 = vsub.s32 1, %v1179
        %v1181 = vrot.slane %v1173, %v1180
        %vm1182 = vcmp.eq.s32.totalorder %v767, %v1177
        %vm1183 = vcmp.eq.s32.totalorder %v767, %v1181
        %vm1184 = vcmp.eq.s32.totalorder %v768, %v1177
        %vm1185 = vcmp.eq.s32.totalorder %v768, %v1181
        %v1186 = vlaneseq
        %v1187 = vshrl.u32 %v1186, 7
        %v1188 = vsub.s32 1, %v1187
        %v1189 = vrot.slane %v789, %v1188
        %v1190 = vlaneseq
        %v1191 = vshrl.u32 %v1190, 7
        %v1192 = vsub.s32 5, %v1191
        %v1193 = vrot.slane %v789, %v1192
        %v1196 = vlaneseq
        %v1197 = vshrl.u32 %v1196, 7
        %v1198 = vsub.s32 1, %v1197
        %v1199 = vrot.slane %v1189, %v1198
        %v1200 = vlaneseq
        %v1201 = vshrl.u32 %v1200, 7
        %v1202 = vsub.s32 1, %v1201
        %v1203 = vrot.slane %v1193, %v1202
        %v1204 = vsel %vm1182, %v1199, 0.0
        %v1205 = vsel %vm1183, %v1203, 0.0
        %v1206 = vsel %vm1184, %v1199, 0.0
        %v1207 = vsel %vm1185, %v1203, 0.0
        %v1208 = vlaneseq
        %v1209 = vshrl.u32 %v1208, 7
        %v1210 = vsub.s32 1, %v1209
        %v1211 = vrot.slane %v765, %v1210
        %v1212 = vlaneseq
        %v1213 = vshrl.u32 %v1212, 7
        %v1214 = vsub.s32 5, %v1213
        %v1215 = vrot.slane %v765, %v1214
        %v1216 = vlaneseq
        %v1217 = vshrl.u32 %v1216, 7
        %v1218 = vsub.s32 1, %v1217
        %v1219 = vrot.slane %v1211, %v1218
        %v1220 = vlaneseq
        %v1221 = vshrl.u32 %v1220, 7
        %v1222 = vsub.s32 1, %v1221
        %v1223 = vrot.slane %v1215, %v1222
        %vm1224 = vcmp.eq.s32.totalorder %v767, %v1219
        %vm1225 = vcmp.eq.s32.totalorder %v767, %v1223
        %vm1226 = vcmp.eq.s32.totalorder %v768, %v1219
        %vm1227 = vcmp.eq.s32.totalorder %v768, %v1223
        %v1228 = vlaneseq
        %v1229 = vshrl.u32 %v1228, 7
        %v1230 = vsub.s32 1, %v1229
        %v1231 = vrot.slane %v761, %v1230
        %v1232 = vlaneseq
        %v1233 = vshrl.u32 %v1232, 7
        %v1234 = vsub.s32 5, %v1233
        %v1235 = vrot.slane %v761, %v1234
        %v1238 = vlaneseq
        %v1239 = vshrl.u32 %v1238, 7
        %v1240 = vsub.s32 1, %v1239
        %v1241 = vrot.slane %v1231, %v1240
        %v1242 = vlaneseq
        %v1243 = vshrl.u32 %v1242, 7
        %v1244 = vsub.s32 1, %v1243
        %v1245 = vrot.slane %v1235, %v1244
        %v1246 = vsel %vm1224, %v1241, 0.0
        %v1247 = vsel %vm1225, %v1245, 0.0
        %v1248 = vsel %vm1226, %v1241, 0.0
        %v1249 = vsel %vm1227, %v1245, 0.0
        %v1250 = vadd.f32 %v1204, %v1246
        %v1251 = vadd.f32 %v1205, %v1247
        %v1252 = vadd.f32 %v1206, %v1248
        %v1253 = vadd.f32 %v1207, %v1249
        %v1254 = vld [vmem:[%s644] sm:$0xff]
        %v1255 = vld [vmem:[%s644 + $0x8] sm:$0xff]
        %v1256 = vld [vmem:[%s644 + $0x10] sm:$0xff]
        %v1257 = vld [vmem:[%s644 + $0x18] sm:$0xff]
        %v1258 = vld [vmem:[%s644 + $0x20] sm:$0xff]
        %v1259 = vld [vmem:[%s644 + $0x28] sm:$0xff]
        %v1260 = vld [vmem:[%s644 + $0x30] sm:$0xff]
        %v1261 = vld [vmem:[%s644 + $0x38] sm:$0xff]
        %v1263 = vsel %vm956, %v1254, 0
        %v1266 = vsel %vm956, %v1255, 0
        %v1269 = vsel %vm956, %v1256, 0
        %v1272 = vsel %vm956, %v1257, 0
        %v1275 = vsel %vm956, %v1258, 0
        %v1278 = vsel %vm956, %v1259, 0
        %v1281 = vsel %vm956, %v1260, 0
        %v1284 = vsel %vm956, %v1261, 0
        %1286 = vmatprep.subr.mxu0 %v857
        %1287 = vmatpush1.msra.mxu0 %v856
        %1288 = vmatprep.subr.mxu0 %v859
        %1289 = vmatpush1.msra.mxu0 %v858
        %1290 = vmatprep.subr.mxu0 0.0
        %1291 = vmatpush1.msra.mxu0 0.0
        %1292 = vmatprep.subr.mxu0 0.0
        %1293 = vmatpush1.msra.mxu0 0.0
        %1294 = vmatprep.subr.mxu0 0.0
        %1295 = vmatpush1.msra.mxu0 0.0
        %1296 = vmatprep.subr.mxu0 0.0
        %1297 = vmatpush1.msra.mxu0 0.0
        %1298 = vmatprep.subr.mxu0 0.0
        %1299 = vmatpush1.msra.mxu0 0.0
        %1300 = vmatprep.subr.mxu0 0.0
        %1301 = vmatpush1.msra.mxu0 0.0
        %1302 = vmatprep.subr.mxu0 0.0
        %1303 = vmatpush1.msra.mxu0 0.0
        %1304 = vmatprep.subr.mxu0 0.0
        %1305 = vmatpush1.msra.mxu0 0.0
        %1306 = vmatprep.subr.mxu0 0.0
        %1307 = vmatpush1.msra.mxu0 0.0
        %1308 = vmatprep.subr.mxu0 0.0
        %1309 = vmatpush1.msra.mxu0 0.0
        %1310 = vmatprep.subr.mxu0 0.0
        %1311 = vmatpush1.msra.mxu0 0.0
        %1312 = vmatprep.subr.mxu0 0.0
        %1313 = vmatpush1.msra.mxu0 0.0
        %1314 = vmatprep.subr.mxu0 0.0
        %1315 = vmatpush1.msra.mxu0 0.0
        %1316 = vmatprep.subr.mxu0 0.0
        %1317 = vmatpush1.msra.mxu0 0.0
        %1318 = vmatprep.subr.mxu0 0.0
        %1319 = vmatpush1.msra.mxu0 0.0
        %1320 = vmatprep.subr.mxu0 0.0
        %1321 = vmatpush1.msra.mxu0 0.0
        %1322 = vmatprep.subr.mxu0 0.0
        %1323 = vmatpush1.msra.mxu0 0.0
        %1324 = vmatprep.subr.mxu0 0.0
        %1325 = vmatpush1.msra.mxu0 0.0
        %1326 = vmatprep.subr.mxu0 0.0
        %1327 = vmatpush1.msra.mxu0 0.0
        %1328 = vmatprep.subr.mxu0 0.0
        %1329 = vmatpush1.msra.mxu0 0.0
        %1330 = vmatprep.subr.mxu0 0.0
        %1331 = vmatpush1.msra.mxu0 0.0
        %1332 = vmatprep.subr.mxu0 0.0
        %1333 = vmatpush1.msra.mxu0 0.0
        %1334 = vmatprep.subr.mxu0 0.0
        %1335 = vmatpush1.msra.mxu0 0.0
        %1336 = vmatprep.subr.mxu0 0.0
        %1337 = vmatpush1.msra.mxu0 0.0
        %1338 = vmatprep.subr.mxu0 0.0
        %1339 = vmatpush1.msra.mxu0 0.0
        %1340 = vmatprep.subr.mxu0 0.0
        %1341 = vmatpush1.msra.mxu0 0.0
        %1342 = vmatprep.subr.mxu0 0.0
        %1343 = vmatpush1.msra.mxu0 0.0
        %1344 = vmatprep.subr.mxu0 0.0
        %1345 = vmatpush1.msra.mxu0 0.0
        %1346 = vmatprep.subr.mxu0 0.0
        %1347 = vmatpush1.msra.mxu0 0.0
        %1348 = vmatprep.subr.mxu0 0.0
        %1349 = vmatpush1.msra.mxu0 0.0
        %1350 = vmatprep.mubr.f32.mxu0 0.0
        %1351 = vmatmul.mubr.f32.gmra.mrb[0].mxu0 %v1263
        %v1352 = vpop.f32.mrb[0].mxu0
        %v1353 = vadd.f32 0.0, %v1352
        %v1354 = vpop.f32.mrb[0].mxu0
        %v1355 = vadd.f32 0.0, %v1354
        %1356 = vmatprep.mubr.f32.mxu0 0.0
        %1357 = vmatmul.mubr.f32.gmra.mrb[0].mxu0 %v1266
        %v1358 = vpop.f32.mrb[0].mxu0
        %v1359 = vadd.f32 0.0, %v1358
        %v1360 = vpop.f32.mrb[0].mxu0
        %v1361 = vadd.f32 0.0, %v1360
        %1362 = vmatprep.mubr.f32.mxu0 0.0
        %1363 = vmatmul.mubr.f32.gmra.mrb[0].mxu0 %v1269
        %v1364 = vpop.f32.mrb[0].mxu0
        %v1365 = vadd.f32 0.0, %v1364
        %v1366 = vpop.f32.mrb[0].mxu0
        %v1367 = vadd.f32 0.0, %v1366
        %1368 = vmatprep.mubr.f32.mxu0 0.0
        %1369 = vmatmul.mubr.f32.gmra.mrb[0].mxu0 %v1272
        %v1370 = vpop.f32.mrb[0].mxu0
        %v1371 = vadd.f32 0.0, %v1370
        %v1372 = vpop.f32.mrb[0].mxu0
        %v1373 = vadd.f32 0.0, %v1372
        %1374 = vmatprep.mubr.f32.mxu0 0.0
        %1375 = vmatmul.mubr.f32.gmra.mrb[0].mxu0 %v1275
        %v1376 = vpop.f32.mrb[0].mxu0
        %v1377 = vadd.f32 0.0, %v1376
        %v1378 = vpop.f32.mrb[0].mxu0
        %v1379 = vadd.f32 0.0, %v1378
        %1380 = vmatprep.mubr.f32.mxu0 0.0
        %1381 = vmatmul.mubr.f32.gmra.mrb[0].mxu0 %v1278
        %v1382 = vpop.f32.mrb[0].mxu0
        %v1383 = vadd.f32 0.0, %v1382
        %v1384 = vpop.f32.mrb[0].mxu0
        %v1385 = vadd.f32 0.0, %v1384
        %1386 = vmatprep.mubr.f32.mxu0 0.0
        %1387 = vmatmul.mubr.f32.gmra.mrb[0].mxu0 %v1281
        %v1388 = vpop.f32.mrb[0].mxu0
        %v1389 = vadd.f32 0.0, %v1388
        %v1390 = vpop.f32.mrb[0].mxu0
        %v1391 = vadd.f32 0.0, %v1390
        %1392 = vmatprep.mubr.f32.mxu0 0.0
        %1393 = vmatmul.mubr.f32.gmra.mrb[0].mxu0 %v1284
        %v1394 = vpop.f32.mrb[0].mxu0
        %v1395 = vadd.f32 0.0, %v1394
        %v1396 = vpop.f32.mrb[0].mxu0
        %v1397 = vadd.f32 0.0, %v1396
        %1398 = vdwg.mxu0
        %v1399 = vmul.f32 %v1353, %v1250
        %v1400 = vmul.f32 %v1355, %v1251
        %v1401 = vmul.f32 %v1359, %v1252
        %v1402 = vmul.f32 %v1361, %v1253
        %v1403 = vmul.f32 %v1365, %v1250
        %v1404 = vmul.f32 %v1367, %v1251
        %v1405 = vmul.f32 %v1371, %v1252
        %v1406 = vmul.f32 %v1373, %v1253
        %v1407 = vmul.f32 %v1377, %v1250
        %v1408 = vmul.f32 %v1379, %v1251
        %v1409 = vmul.f32 %v1383, %v1252
        %v1410 = vmul.f32 %v1385, %v1253
        %v1411 = vmul.f32 %v1389, %v1250
        %v1412 = vmul.f32 %v1391, %v1251
        %v1413 = vmul.f32 %v1395, %v1252
        %v1414 = vmul.f32 %v1397, %v1253
        %v1415 = vadd.f32 %v1399, %v1401
        %v1416 = vrot.slane %v1415, 4
        %v1417 = vadd.f32 %v1415, %v1416
        %v1418 = vrot.slane %v1417, 2
        %v1419 = vadd.f32 %v1417, %v1418
        %v1420 = vrot.slane %v1419, 1
        %v1421 = vadd.f32 %v1419, %v1420
        %v1422 = vadd.f32 %v1400, %v1402
        %v1423 = vrot.slane %v1422, 4
        %v1424 = vadd.f32 %v1422, %v1423
        %v1425 = vrot.slane %v1424, 2
        %v1426 = vadd.f32 %v1424, %v1425
        %v1427 = vrot.slane %v1426, 1
        %v1428 = vadd.f32 %v1426, %v1427
        %v1429 = vadd.f32 %v1403, %v1405
        %v1430 = vrot.slane %v1429, 4
        %v1431 = vadd.f32 %v1429, %v1430
        %v1432 = vrot.slane %v1431, 2
        %v1433 = vadd.f32 %v1431, %v1432
        %v1434 = vrot.slane %v1433, 1
        %v1435 = vadd.f32 %v1433, %v1434
        %v1436 = vadd.f32 %v1404, %v1406
        %v1437 = vrot.slane %v1436, 4
        %v1438 = vadd.f32 %v1436, %v1437
        %v1439 = vrot.slane %v1438, 2
        %v1440 = vadd.f32 %v1438, %v1439
        %v1441 = vrot.slane %v1440, 1
        %v1442 = vadd.f32 %v1440, %v1441
        %v1443 = vadd.f32 %v1407, %v1409
        %v1444 = vrot.slane %v1443, 4
        %v1445 = vadd.f32 %v1443, %v1444
        %v1446 = vrot.slane %v1445, 2
        %v1447 = vadd.f32 %v1445, %v1446
        %v1448 = vrot.slane %v1447, 1
        %v1449 = vadd.f32 %v1447, %v1448
        %v1450 = vadd.f32 %v1408, %v1410
        %v1451 = vrot.slane %v1450, 4
        %v1452 = vadd.f32 %v1450, %v1451
        %v1453 = vrot.slane %v1452, 2
        %v1454 = vadd.f32 %v1452, %v1453
        %v1455 = vrot.slane %v1454, 1
        %v1456 = vadd.f32 %v1454, %v1455
        %v1457 = vadd.f32 %v1411, %v1413
        %v1458 = vrot.slane %v1457, 4
        %v1459 = vadd.f32 %v1457, %v1458
        %v1460 = vrot.slane %v1459, 2
        %v1461 = vadd.f32 %v1459, %v1460
        %v1462 = vrot.slane %v1461, 1
        %v1463 = vadd.f32 %v1461, %v1462
        %v1464 = vadd.f32 %v1412, %v1414
        %v1465 = vrot.slane %v1464, 4
        %v1466 = vadd.f32 %v1464, %v1465
        %v1467 = vrot.slane %v1466, 2
        %v1468 = vadd.f32 %v1466, %v1467
        %v1469 = vrot.slane %v1468, 1
        %v1470 = vadd.f32 %v1468, %v1469
        %v1471 = vadd.f32 %v1116, %v1421
        %v1472 = vadd.f32 %v1123, %v1428
        %v1473 = vadd.f32 %v1130, %v1435
        %v1474 = vadd.f32 %v1137, %v1442
        %v1475 = vadd.f32 %v1144, %v1449
        %v1476 = vadd.f32 %v1151, %v1456
        %v1477 = vadd.f32 %v1158, %v1463
        %v1478 = vadd.f32 %v1165, %v1470
        %v1479 = vld [vmem:[%s653] sm:$0xff]
        %v1480 = vld [vmem:[%s653 + $0x8] sm:$0xff]
        %v1481 = vld [vmem:[%s653 + $0x10] sm:$0xff]
        %v1482 = vld [vmem:[%s653 + $0x18] sm:$0xff]
        %v1483 = vld [vmem:[%s653 + $0x20] sm:$0xff]
        %v1484 = vld [vmem:[%s653 + $0x28] sm:$0xff]
        %v1485 = vld [vmem:[%s653 + $0x30] sm:$0xff]
        %v1486 = vld [vmem:[%s653 + $0x38] sm:$0xff]
        %v1488 = vsel %vm956, %v1479, 0
        %v1491 = vsel %vm956, %v1480, 0
        %v1494 = vsel %vm956, %v1481, 0
        %v1497 = vsel %vm956, %v1482, 0
        %v1500 = vsel %vm956, %v1483, 0
        %v1503 = vsel %vm956, %v1484, 0
        %v1506 = vsel %vm956, %v1485, 0
        %v1509 = vsel %vm956, %v1486, 0
        %1511 = vmatprep.subr.mxu0 %v1251
        %1512 = vmatpush1.msra.mxu0 %v1250
        %1513 = vmatprep.subr.mxu0 %v1253
        %1514 = vmatpush1.msra.mxu0 %v1252
        %1515 = vmatprep.subr.mxu0 0.0
        %1516 = vmatpush1.msra.mxu0 0.0
        %1517 = vmatprep.subr.mxu0 0.0
        %1518 = vmatpush1.msra.mxu0 0.0
        %1519 = vmatprep.subr.mxu0 0.0
        %1520 = vmatpush1.msra.mxu0 0.0
        %1521 = vmatprep.subr.mxu0 0.0
        %1522 = vmatpush1.msra.mxu0 0.0
        %1523 = vmatprep.subr.mxu0 0.0
        %1524 = vmatpush1.msra.mxu0 0.0
        %1525 = vmatprep.subr.mxu0 0.0
        %1526 = vmatpush1.msra.mxu0 0.0
        %1527 = vmatprep.subr.mxu0 0.0
        %1528 = vmatpush1.msra.mxu0 0.0
        %1529 = vmatprep.subr.mxu0 0.0
        %1530 = vmatpush1.msra.mxu0 0.0
        %1531 = vmatprep.subr.mxu0 0.0
        %1532 = vmatpush1.msra.mxu0 0.0
        %1533 = vmatprep.subr.mxu0 0.0
        %1534 = vmatpush1.msra.mxu0 0.0
        %1535 = vmatprep.subr.mxu0 0.0
        %1536 = vmatpush1.msra.mxu0 0.0
        %1537 = vmatprep.subr.mxu0 0.0
        %1538 = vmatpush1.msra.mxu0 0.0
        %1539 = vmatprep.subr.mxu0 0.0
        %1540 = vmatpush1.msra.mxu0 0.0
        %1541 = vmatprep.subr.mxu0 0.0
        %1542 = vmatpush1.msra.mxu0 0.0
        %1543 = vmatprep.subr.mxu0 0.0
        %1544 = vmatpush1.msra.mxu0 0.0
        %1545 = vmatprep.subr.mxu0 0.0
        %1546 = vmatpush1.msra.mxu0 0.0
        %1547 = vmatprep.subr.mxu0 0.0
        %1548 = vmatpush1.msra.mxu0 0.0
        %1549 = vmatprep.subr.mxu0 0.0
        %1550 = vmatpush1.msra.mxu0 0.0
        %1551 = vmatprep.subr.mxu0 0.0
        %1552 = vmatpush1.msra.mxu0 0.0
        %1553 = vmatprep.subr.mxu0 0.0
        %1554 = vmatpush1.msra.mxu0 0.0
        %1555 = vmatprep.subr.mxu0 0.0
        %1556 = vmatpush1.msra.mxu0 0.0
        %1557 = vmatprep.subr.mxu0 0.0
        %1558 = vmatpush1.msra.mxu0 0.0
        %1559 = vmatprep.subr.mxu0 0.0
        %1560 = vmatpush1.msra.mxu0 0.0
        %1561 = vmatprep.subr.mxu0 0.0
        %1562 = vmatpush1.msra.mxu0 0.0
        %1563 = vmatprep.subr.mxu0 0.0
        %1564 = vmatpush1.msra.mxu0 0.0
        %1565 = vmatprep.subr.mxu0 0.0
        %1566 = vmatpush1.msra.mxu0 0.0
        %1567 = vmatprep.subr.mxu0 0.0
        %1568 = vmatpush1.msra.mxu0 0.0
        %1569 = vmatprep.subr.mxu0 0.0
        %1570 = vmatpush1.msra.mxu0 0.0
        %1571 = vmatprep.subr.mxu0 0.0
        %1572 = vmatpush1.msra.mxu0 0.0
        %1573 = vmatprep.subr.mxu0 0.0
        %1574 = vmatpush1.msra.mxu0 0.0
        %1575 = vmatprep.mubr.f32.mxu0 0.0
        %1576 = vmatmul.mubr.f32.gmra.mrb[0].mxu0 %v1488
        %v1577 = vpop.f32.mrb[0].mxu0
        %v1578 = vadd.f32 0.0, %v1577
        %v1579 = vpop.f32.mrb[0].mxu0
        %v1580 = vadd.f32 0.0, %v1579
        %1581 = vmatprep.mubr.f32.mxu0 0.0
        %1582 = vmatmul.mubr.f32.gmra.mrb[0].mxu0 %v1491
        %v1583 = vpop.f32.mrb[0].mxu0
        %v1584 = vadd.f32 0.0, %v1583
        %v1585 = vpop.f32.mrb[0].mxu0
        %v1586 = vadd.f32 0.0, %v1585
        %1587 = vmatprep.mubr.f32.mxu0 0.0
        %1588 = vmatmul.mubr.f32.gmra.mrb[0].mxu0 %v1494
        %v1589 = vpop.f32.mrb[0].mxu0
        %v1590 = vadd.f32 0.0, %v1589
        %v1591 = vpop.f32.mrb[0].mxu0
        %v1592 = vadd.f32 0.0, %v1591
        %1593 = vmatprep.mubr.f32.mxu0 0.0
        %1594 = vmatmul.mubr.f32.gmra.mrb[0].mxu0 %v1497
        %v1595 = vpop.f32.mrb[0].mxu0
        %v1596 = vadd.f32 0.0, %v1595
        %v1597 = vpop.f32.mrb[0].mxu0
        %v1598 = vadd.f32 0.0, %v1597
        %1599 = vmatprep.mubr.f32.mxu0 0.0
        %1600 = vmatmul.mubr.f32.gmra.mrb[0].mxu0 %v1500
        %v1601 = vpop.f32.mrb[0].mxu0
        %v1602 = vadd.f32 0.0, %v1601
        %v1603 = vpop.f32.mrb[0].mxu0
        %v1604 = vadd.f32 0.0, %v1603
        %1605 = vmatprep.mubr.f32.mxu0 0.0
        %1606 = vmatmul.mubr.f32.gmra.mrb[0].mxu0 %v1503
        %v1607 = vpop.f32.mrb[0].mxu0
        %v1608 = vadd.f32 0.0, %v1607
        %v1609 = vpop.f32.mrb[0].mxu0
        %v1610 = vadd.f32 0.0, %v1609
        %1611 = vmatprep.mubr.f32.mxu0 0.0
        %1612 = vmatmul.mubr.f32.gmra.mrb[0].mxu0 %v1506
        %v1613 = vpop.f32.mrb[0].mxu0
        %v1614 = vadd.f32 0.0, %v1613
        %v1615 = vpop.f32.mrb[0].mxu0
        %v1616 = vadd.f32 0.0, %v1615
        %1617 = vmatprep.mubr.f32.mxu0 0.0
        %1618 = vmatmul.mubr.f32.gmra.mrb[0].mxu0 %v1509
        %v1619 = vpop.f32.mrb[0].mxu0
        %v1620 = vadd.f32 0.0, %v1619
        %v1621 = vpop.f32.mrb[0].mxu0
        %v1622 = vadd.f32 0.0, %v1621
        %1623 = vdwg.mxu0
        %v1624 = vmul.f32 %v1578, %v944
        %v1625 = vmul.f32 %v1580, %v945
        %v1626 = vmul.f32 %v1584, %v946
        %v1627 = vmul.f32 %v1586, %v947
        %v1628 = vmul.f32 %v1590, %v944
        %v1629 = vmul.f32 %v1592, %v945
        %v1630 = vmul.f32 %v1596, %v946
        %v1631 = vmul.f32 %v1598, %v947
        %v1632 = vmul.f32 %v1602, %v944
        %v1633 = vmul.f32 %v1604, %v945
        %v1634 = vmul.f32 %v1608, %v946
        %v1635 = vmul.f32 %v1610, %v947
        %v1636 = vmul.f32 %v1614, %v944
        %v1637 = vmul.f32 %v1616, %v945
        %v1638 = vmul.f32 %v1620, %v946
        %v1639 = vmul.f32 %v1622, %v947
        %v1640 = vadd.f32 %v1624, %v1626
        %v1641 = vrot.slane %v1640, 4
        %v1642 = vadd.f32 %v1640, %v1641
        %v1643 = vrot.slane %v1642, 2
        %v1644 = vadd.f32 %v1642, %v1643
        %v1645 = vrot.slane %v1644, 1
        %v1646 = vadd.f32 %v1644, %v1645
        %v1647 = vadd.f32 %v1625, %v1627
        %v1648 = vrot.slane %v1647, 4
        %v1649 = vadd.f32 %v1647, %v1648
        %v1650 = vrot.slane %v1649, 2
        %v1651 = vadd.f32 %v1649, %v1650
        %v1652 = vrot.slane %v1651, 1
        %v1653 = vadd.f32 %v1651, %v1652
        %v1654 = vadd.f32 %v1628, %v1630
        %v1655 = vrot.slane %v1654, 4
        %v1656 = vadd.f32 %v1654, %v1655
        %v1657 = vrot.slane %v1656, 2
        %v1658 = vadd.f32 %v1656, %v1657
        %v1659 = vrot.slane %v1658, 1
        %v1660 = vadd.f32 %v1658, %v1659
        %v1661 = vadd.f32 %v1629, %v1631
        %v1662 = vrot.slane %v1661, 4
        %v1663 = vadd.f32 %v1661, %v1662
        %v1664 = vrot.slane %v1663, 2
        %v1665 = vadd.f32 %v1663, %v1664
        %v1666 = vrot.slane %v1665, 1
        %v1667 = vadd.f32 %v1665, %v1666
        %v1668 = vadd.f32 %v1632, %v1634
        %v1669 = vrot.slane %v1668, 4
        %v1670 = vadd.f32 %v1668, %v1669
        %v1671 = vrot.slane %v1670, 2
        %v1672 = vadd.f32 %v1670, %v1671
        %v1673 = vrot.slane %v1672, 1
        %v1674 = vadd.f32 %v1672, %v1673
        %v1675 = vadd.f32 %v1633, %v1635
        %v1676 = vrot.slane %v1675, 4
        %v1677 = vadd.f32 %v1675, %v1676
        %v1678 = vrot.slane %v1677, 2
        %v1679 = vadd.f32 %v1677, %v1678
        %v1680 = vrot.slane %v1679, 1
        %v1681 = vadd.f32 %v1679, %v1680
        %v1682 = vadd.f32 %v1636, %v1638
        %v1683 = vrot.slane %v1682, 4
        %v1684 = vadd.f32 %v1682, %v1683
        %v1685 = vrot.slane %v1684, 2
        %v1686 = vadd.f32 %v1684, %v1685
        %v1687 = vrot.slane %v1686, 1
        %v1688 = vadd.f32 %v1686, %v1687
        %v1689 = vadd.f32 %v1637, %v1639
        %v1690 = vrot.slane %v1689, 4
        %v1691 = vadd.f32 %v1689, %v1690
        %v1692 = vrot.slane %v1691, 2
        %v1693 = vadd.f32 %v1691, %v1692
        %v1694 = vrot.slane %v1693, 1
        %v1695 = vadd.f32 %v1693, %v1694
        %v1696 = vadd.f32 %v1471, %v1646
        %v1697 = vadd.f32 %v1472, %v1653
        %v1698 = vadd.f32 %v1473, %v1660
        %v1699 = vadd.f32 %v1474, %v1667
        %v1700 = vadd.f32 %v1475, %v1674
        %v1701 = vadd.f32 %v1476, %v1681
        %v1702 = vadd.f32 %v1477, %v1688
        %v1703 = vadd.f32 %v1478, %v1695
        %v1704 = vld [vmem:[#allocation11] sm:$0xff]
        %v1705 = vld [vmem:[#allocation11 + $0x8] sm:$0xff]
        %v1706 = vld [vmem:[#allocation11 + $0x10] sm:$0xff]
        %v1707 = vld [vmem:[#allocation11 + $0x18] sm:$0xff]
        %v1708 = vld [vmem:[#allocation12] sm:$0xff]
        %v1709 = vld [vmem:[#allocation12 + $0x8] sm:$0xff]
        %v1710 = vld [vmem:[#allocation12 + $0x10] sm:$0xff]
        %v1711 = vld [vmem:[#allocation12 + $0x18] sm:$0xff]
        %1713 = vset.pattern.permute.xlu0 0
        %1714 = vperm.xlu0 %1713, %v1708
        %v1715 = vpop.permute.xlu0 %1714
        %1718 = vset.pattern.permute.xlu0 0
        %1719 = vperm.xlu0 %1718, %v1709
        %v1720 = vpop.permute.xlu0 %1719
        %1723 = vset.pattern.permute.xlu0 0
        %1724 = vperm.xlu0 %1723, %v1710
        %v1725 = vpop.permute.xlu0 %1724
        %1728 = vset.pattern.permute.xlu0 0
        %1729 = vperm.xlu0 %1728, %v1711
        %v1730 = vpop.permute.xlu0 %1729
        %v1733 = vcombine.high %v751, %v751
        %vm1734 = vcmask 23552
        %v1736 = vsel %vm1734, %v1704, 0
        %v1739 = vsel %vm1734, %v1705, 0
        %v1742 = vsel %vm1734, %v1706, 0
        %v1745 = vsel %vm1734, %v1707, 0
        %vm1747 = vcmask 1042432
        %v1748 = vsel %vm1747, %v751, 0
        %v1750 = vsel %vm1747, %v1733, 0
        %1752 = vmatprep.subr.mxu0 %v1750
        %1753 = vmatpush1.msra.mxu0 %v1748
        %1754 = vmatprep.subr.mxu0 0.0
        %1755 = vmatpush1.msra.mxu0 0.0
        %1756 = vmatprep.subr.mxu0 0.0
        %1757 = vmatpush1.msra.mxu0 0.0
        %1758 = vmatprep.subr.mxu0 0.0
        %1759 = vmatpush1.msra.mxu0 0.0
        %1760 = vmatprep.subr.mxu0 0.0
        %1761 = vmatpush1.msra.mxu0 0.0
        %1762 = vmatprep.subr.mxu0 0.0
        %1763 = vmatpush1.msra.mxu0 0.0
        %1764 = vmatprep.subr.mxu0 0.0
        %1765 = vmatpush1.msra.mxu0 0.0
        %1766 = vmatprep.subr.mxu0 0.0
        %1767 = vmatpush1.msra.mxu0 0.0
        %1768 = vmatprep.subr.mxu0 0.0
        %1769 = vmatpush1.msra.mxu0 0.0
        %1770 = vmatprep.subr.mxu0 0.0
        %1771 = vmatpush1.msra.mxu0 0.0
        %1772 = vmatprep.subr.mxu0 0.0
        %1773 = vmatpush1.msra.mxu0 0.0
        %1774 = vmatprep.subr.mxu0 0.0
        %1775 = vmatpush1.msra.mxu0 0.0
        %1776 = vmatprep.subr.mxu0 0.0
        %1777 = vmatpush1.msra.mxu0 0.0
        %1778 = vmatprep.subr.mxu0 0.0
        %1779 = vmatpush1.msra.mxu0 0.0
        %1780 = vmatprep.subr.mxu0 0.0
        %1781 = vmatpush1.msra.mxu0 0.0
        %1782 = vmatprep.subr.mxu0 0.0
        %1783 = vmatpush1.msra.mxu0 0.0
        %1784 = vmatprep.subr.mxu0 0.0
        %1785 = vmatpush1.msra.mxu0 0.0
        %1786 = vmatprep.subr.mxu0 0.0
        %1787 = vmatpush1.msra.mxu0 0.0
        %1788 = vmatprep.subr.mxu0 0.0
        %1789 = vmatpush1.msra.mxu0 0.0
        %1790 = vmatprep.subr.mxu0 0.0
        %1791 = vmatpush1.msra.mxu0 0.0
        %1792 = vmatprep.subr.mxu0 0.0
        %1793 = vmatpush1.msra.mxu0 0.0
        %1794 = vmatprep.subr.mxu0 0.0
        %1795 = vmatpush1.msra.mxu0 0.0
        %1796 = vmatprep.subr.mxu0 0.0
        %1797 = vmatpush1.msra.mxu0 0.0
        %1798 = vmatprep.subr.mxu0 0.0
        %1799 = vmatpush1.msra.mxu0 0.0
        %1800 = vmatprep.subr.mxu0 0.0
        %1801 = vmatpush1.msra.mxu0 0.0
        %1802 = vmatprep.subr.mxu0 0.0
        %1803 = vmatpush1.msra.mxu0 0.0
        %1804 = vmatprep.subr.mxu0 0.0
        %1805 = vmatpush1.msra.mxu0 0.0
        %1806 = vmatprep.subr.mxu0 0.0
        %1807 = vmatpush1.msra.mxu0 0.0
        %1808 = vmatprep.subr.mxu0 0.0
        %1809 = vmatpush1.msra.mxu0 0.0
        %1810 = vmatprep.subr.mxu0 0.0
        %1811 = vmatpush1.msra.mxu0 0.0
        %1812 = vmatprep.subr.mxu0 0.0
        %1813 = vmatpush1.msra.mxu0 0.0
        %1814 = vmatprep.subr.mxu0 0.0
        %1815 = vmatpush1.msra.mxu0 0.0
        %1816 = vmatprep.mubr.f32.mxu0 0.0
        %1817 = vmatmul.mubr.f32.gmra.mrb[0].mxu0 %v1736
        %v1818 = vpop.f32.mrb[0].mxu0
        %v1819 = vadd.f32 %v1715, %v1818
        %v1820 = vpop.f32.mrb[0].mxu0
        %v1821 = vadd.f32 %v1715, %v1820
        %1822 = vmatprep.mubr.f32.mxu0 0.0
        %1823 = vmatmul.mubr.f32.gmra.mrb[0].mxu0 %v1739
        %v1824 = vpop.f32.mrb[0].mxu0
        %v1825 = vadd.f32 %v1720, %v1824
        %v1826 = vpop.f32.mrb[0].mxu0
        %v1827 = vadd.f32 %v1720, %v1826
        %1828 = vmatprep.mubr.f32.mxu0 0.0
        %1829 = vmatmul.mubr.f32.gmra.mrb[0].mxu0 %v1742
        %v1830 = vpop.f32.mrb[0].mxu0
        %v1831 = vadd.f32 %v1725, %v1830
        %v1832 = vpop.f32.mrb[0].mxu0
        %v1833 = vadd.f32 %v1725, %v1832
        %1834 = vmatprep.mubr.f32.mxu0 0.0
        %1835 = vmatmul.mubr.f32.gmra.mrb[0].mxu0 %v1745
        %v1836 = vpop.f32.mrb[0].mxu0
        %v1837 = vadd.f32 %v1730, %v1836
        %v1838 = vpop.f32.mrb[0].mxu0
        %v1839 = vadd.f32 %v1730, %v1838
        %1840 = vdwg.mxu0
        %v1841 = vld [vmem:[#allocation14] sm:$0xff]
        %v1842 = vld [vmem:[#allocation14 + $0x8] sm:$0xff]
        %v1843 = vld [vmem:[#allocation14 + $0x10] sm:$0xff]
        %v1844 = vld [vmem:[#allocation14 + $0x18] sm:$0xff]
        %v1845 = vld [vmem:[#allocation14 + $0x20] sm:$0xff]
        %v1846 = vld [vmem:[#allocation14 + $0x28] sm:$0xff]
        %v1847 = vld [vmem:[#allocation14 + $0x30] sm:$0xff]
        %v1848 = vld [vmem:[#allocation14 + $0x38] sm:$0xff]
        %v1849 = vld [vmem:[#allocation14 + $0x40] sm:$0xff]
        %v1850 = vld [vmem:[#allocation14 + $0x48] sm:$0xff]
        %v1851 = vld [vmem:[#allocation14 + $0x50] sm:$0xff]
        %v1852 = vld [vmem:[#allocation14 + $0x58] sm:$0xff]
        %v1853 = vld [vmem:[#allocation15] sm:$0xff]
        %v1854 = vld [vmem:[#allocation15 + $0x8] sm:$0xff]
        %v1855 = vld [vmem:[#allocation15 + $0x10] sm:$0xff]
        %v1856 = vld [vmem:[#allocation15 + $0x18] sm:$0xff]
        %v1857 = vld [vmem:[#allocation15 + $0x20] sm:$0xff]
        %v1858 = vld [vmem:[#allocation15 + $0x28] sm:$0xff]
        %v1859 = vld [vmem:[#allocation15 + $0x30] sm:$0xff]
        %v1860 = vld [vmem:[#allocation15 + $0x38] sm:$0xff]
        %v1861 = vld [vmem:[#allocation15 + $0x40] sm:$0xff]
        %v1862 = vld [vmem:[#allocation15 + $0x48] sm:$0xff]
        %v1863 = vld [vmem:[#allocation15 + $0x50] sm:$0xff]
        %v1864 = vld [vmem:[#allocation15 + $0x58] sm:$0xff]
        %1866 = vset.pattern.permute.xlu0 0
        %1867 = vperm.xlu0 %1866, %v1853
        %v1868 = vpop.permute.xlu0 %1867
        %1871 = vset.pattern.permute.xlu0 0
        %1872 = vperm.xlu0 %1871, %v1854
        %v1873 = vpop.permute.xlu0 %1872
        %1876 = vset.pattern.permute.xlu0 0
        %1877 = vperm.xlu0 %1876, %v1855
        %v1878 = vpop.permute.xlu0 %1877
        %1881 = vset.pattern.permute.xlu0 0
        %1882 = vperm.xlu0 %1881, %v1856
        %v1883 = vpop.permute.xlu0 %1882
        %1886 = vset.pattern.permute.xlu0 0
        %1887 = vperm.xlu0 %1886, %v1857
        %v1888 = vpop.permute.xlu0 %1887
        %1891 = vset.pattern.permute.xlu0 0
        %1892 = vperm.xlu0 %1891, %v1858
        %v1893 = vpop.permute.xlu0 %1892
        %1896 = vset.pattern.permute.xlu0 0
        %1897 = vperm.xlu0 %1896, %v1859
        %v1898 = vpop.permute.xlu0 %1897
        %1901 = vset.pattern.permute.xlu0 0
        %1902 = vperm.xlu0 %1901, %v1860
        %v1903 = vpop.permute.xlu0 %1902
        %1906 = vset.pattern.permute.xlu0 0
        %1907 = vperm.xlu0 %1906, %v1861
        %v1908 = vpop.permute.xlu0 %1907
        %1911 = vset.pattern.permute.xlu0 0
        %1912 = vperm.xlu0 %1911, %v1862
        %v1913 = vpop.permute.xlu0 %1912
        %1916 = vset.pattern.permute.xlu0 0
        %1917 = vperm.xlu0 %1916, %v1863
        %v1918 = vpop.permute.xlu0 %1917
        %1921 = vset.pattern.permute.xlu0 0
        %1922 = vperm.xlu0 %1921, %v1864
        %v1923 = vpop.permute.xlu0 %1922
        %vm1933 = vcmask 1041409
        %v1934 = vsel %vm1933, %v1698, %v1696
        %vm1935 = vcmask 1042434
        %v1936 = vsel %vm1935, %v1700, %v1934
        %vm1937 = vcmask 1043459
        %v1938 = vsel %vm1937, %v1702, %v1936
        %v1939 = vsel %vm1933, %v1699, %v1697
        %v1940 = vsel %vm1935, %v1701, %v1939
        %v1941 = vsel %vm1937, %v1703, %v1940
        %vm1942 = vcmask 31744
        %v1944 = vsel %vm1942, %v1841, 0
        %v1947 = vsel %vm1942, %v1842, 0
        %v1950 = vsel %vm1942, %v1843, 0
        %v1953 = vsel %vm1942, %v1844, 0
        %v1956 = vsel %vm1942, %v1845, 0
        %v1959 = vsel %vm1942, %v1846, 0
        %v1962 = vsel %vm1942, %v1847, 0
        %v1965 = vsel %vm1942, %v1848, 0
        %v1968 = vsel %vm1942, %v1849, 0
        %v1971 = vsel %vm1942, %v1850, 0
        %v1974 = vsel %vm1942, %v1851, 0
        %v1977 = vsel %vm1942, %v1852, 0
        %vm1979 = vcmask 1043456
        %v1980 = vsel %vm1979, %v1938, 0
        %v1982 = vsel %vm1979, %v1941, 0
        %1984 = vmatprep.subr.mxu0 %v1982
        %1985 = vmatpush1.msra.mxu0 %v1980
        %1986 = vmatprep.subr.mxu0 0.0
        %1987 = vmatpush1.msra.mxu0 0.0
        %1988 = vmatprep.subr.mxu0 0.0
        %1989 = vmatpush1.msra.mxu0 0.0
        %1990 = vmatprep.subr.mxu0 0.0
        %1991 = vmatpush1.msra.mxu0 0.0
        %1992 = vmatprep.subr.mxu0 0.0
        %1993 = vmatpush1.msra.mxu0 0.0
        %1994 = vmatprep.subr.mxu0 0.0
        %1995 = vmatpush1.msra.mxu0 0.0
        %1996 = vmatprep.subr.mxu0 0.0
        %1997 = vmatpush1.msra.mxu0 0.0
        %1998 = vmatprep.subr.mxu0 0.0
        %1999 = vmatpush1.msra.mxu0 0.0
        %2000 = vmatprep.subr.mxu0 0.0
        %2001 = vmatpush1.msra.mxu0 0.0
        %2002 = vmatprep.subr.mxu0 0.0
        %2003 = vmatpush1.msra.mxu0 0.0
        %2004 = vmatprep.subr.mxu0 0.0
        %2005 = vmatpush1.msra.mxu0 0.0
        %2006 = vmatprep.subr.mxu0 0.0
        %2007 = vmatpush1.msra.mxu0 0.0
        %2008 = vmatprep.subr.mxu0 0.0
        %2009 = vmatpush1.msra.mxu0 0.0
        %2010 = vmatprep.subr.mxu0 0.0
        %2011 = vmatpush1.msra.mxu0 0.0
        %2012 = vmatprep.subr.mxu0 0.0
        %2013 = vmatpush1.msra.mxu0 0.0
        %2014 = vmatprep.subr.mxu0 0.0
        %2015 = vmatpush1.msra.mxu0 0.0
        %2016 = vmatprep.subr.mxu0 0.0
        %2017 = vmatpush1.msra.mxu0 0.0
        %2018 = vmatprep.subr.mxu0 0.0
        %2019 = vmatpush1.msra.mxu0 0.0
        %2020 = vmatprep.subr.mxu0 0.0
        %2021 = vmatpush1.msra.mxu0 0.0
        %2022 = vmatprep.subr.mxu0 0.0
        %2023 = vmatpush1.msra.mxu0 0.0
        %2024 = vmatprep.subr.mxu0 0.0
        %2025 = vmatpush1.msra.mxu0 0.0
        %2026 = vmatprep.subr.mxu0 0.0
        %2027 = vmatpush1.msra.mxu0 0.0
        %2028 = vmatprep.subr.mxu0 0.0
        %2029 = vmatpush1.msra.mxu0 0.0
        %2030 = vmatprep.subr.mxu0 0.0
        %2031 = vmatpush1.msra.mxu0 0.0
        %2032 = vmatprep.subr.mxu0 0.0
        %2033 = vmatpush1.msra.mxu0 0.0
        %2034 = vmatprep.subr.mxu0 0.0
        %2035 = vmatpush1.msra.mxu0 0.0
        %2036 = vmatprep.subr.mxu0 0.0
        %2037 = vmatpush1.msra.mxu0 0.0
        %2038 = vmatprep.subr.mxu0 0.0
        %2039 = vmatpush1.msra.mxu0 0.0
        %2040 = vmatprep.subr.mxu0 0.0
        %2041 = vmatpush1.msra.mxu0 0.0
        %2042 = vmatprep.subr.mxu0 0.0
        %2043 = vmatpush1.msra.mxu0 0.0
        %2044 = vmatprep.subr.mxu0 0.0
        %2045 = vmatpush1.msra.mxu0 0.0
        %2046 = vmatprep.subr.mxu0 0.0
        %2047 = vmatpush1.msra.mxu0 0.0
        %2048 = vmatprep.mubr.f32.mxu0 0.0
        %2049 = vmatmul.mubr.f32.gmra.mrb[0].mxu0 %v1944
        %v2050 = vpop.f32.mrb[0].mxu0
        %v2051 = vadd.f32 %v1868, %v2050
        %v2052 = vpop.f32.mrb[0].mxu0
        %v2053 = vadd.f32 %v1868, %v2052
        %2054 = vmatprep.mubr.f32.mxu0 0.0
        %2055 = vmatmul.mubr.f32.gmra.mrb[0].mxu0 %v1947
        %v2056 = vpop.f32.mrb[0].mxu0
        %v2057 = vadd.f32 %v1873, %v2056
        %v2058 = vpop.f32.mrb[0].mxu0
        %v2059 = vadd.f32 %v1873, %v2058
        %2060 = vmatprep.mubr.f32.mxu0 0.0
        %2061 = vmatmul.mubr.f32.gmra.mrb[0].mxu0 %v1950
        %v2062 = vpop.f32.mrb[0].mxu0
        %v2063 = vadd.f32 %v1878, %v2062
        %v2064 = vpop.f32.mrb[0].mxu0
        %v2065 = vadd.f32 %v1878, %v2064
        %2066 = vmatprep.mubr.f32.mxu0 0.0
        %2067 = vmatmul.mubr.f32.gmra.mrb[0].mxu0 %v1953
        %v2068 = vpop.f32.mrb[0].mxu0
        %v2069 = vadd.f32 %v1883, %v2068
        %v2070 = vpop.f32.mrb[0].mxu0
        %v2071 = vadd.f32 %v1883, %v2070
        %2072 = vmatprep.mubr.f32.mxu0 0.0
        %2073 = vmatmul.mubr.f32.gmra.mrb[0].mxu0 %v1956
        %v2074 = vpop.f32.mrb[0].mxu0
        %v2075 = vadd.f32 %v1888, %v2074
        %v2076 = vpop.f32.mrb[0].mxu0
        %v2077 = vadd.f32 %v1888, %v2076
        %2078 = vmatprep.mubr.f32.mxu0 0.0
        %2079 = vmatmul.mubr.f32.gmra.mrb[0].mxu0 %v1959
        %v2080 = vpop.f32.mrb[0].mxu0
        %v2081 = vadd.f32 %v1893, %v2080
        %v2082 = vpop.f32.mrb[0].mxu0
        %v2083 = vadd.f32 %v1893, %v2082
        %2084 = vmatprep.mubr.f32.mxu0 0.0
        %2085 = vmatmul.mubr.f32.gmra.mrb[0].mxu0 %v1962
        %v2086 = vpop.f32.mrb[0].mxu0
        %v2087 = vadd.f32 %v1898, %v2086
        %v2088 = vpop.f32.mrb[0].mxu0
        %v2089 = vadd.f32 %v1898, %v2088
        %2090 = vmatprep.mubr.f32.mxu0 0.0
        %2091 = vmatmul.mubr.f32.gmra.mrb[0].mxu0 %v1965
        %v2092 = vpop.f32.mrb[0].mxu0
        %v2093 = vadd.f32 %v1903, %v2092
        %v2094 = vpop.f32.mrb[0].mxu0
        %v2095 = vadd.f32 %v1903, %v2094
        %2096 = vmatprep.mubr.f32.mxu0 0.0
        %2097 = vmatmul.mubr.f32.gmra.mrb[0].mxu0 %v1968
        %v2098 = vpop.f32.mrb[0].mxu0
        %v2099 = vadd.f32 %v1908, %v2098
        %v2100 = vpop.f32.mrb[0].mxu0
        %v2101 = vadd.f32 %v1908, %v2100
        %2102 = vmatprep.mubr.f32.mxu0 0.0
        %2103 = vmatmul.mubr.f32.gmra.mrb[0].mxu0 %v1971
        %v2104 = vpop.f32.mrb[0].mxu0
        %v2105 = vadd.f32 %v1913, %v2104
        %v2106 = vpop.f32.mrb[0].mxu0
        %v2107 = vadd.f32 %v1913, %v2106
        %2108 = vmatprep.mubr.f32.mxu0 0.0
        %2109 = vmatmul.mubr.f32.gmra.mrb[0].mxu0 %v1974
        %v2110 = vpop.f32.mrb[0].mxu0
        %v2111 = vadd.f32 %v1918, %v2110
        %v2112 = vpop.f32.mrb[0].mxu0
        %v2113 = vadd.f32 %v1918, %v2112
        %2114 = vmatprep.mubr.f32.mxu0 0.0
        %2115 = vmatmul.mubr.f32.gmra.mrb[0].mxu0 %v1977
        %v2116 = vpop.f32.mrb[0].mxu0
        %v2117 = vadd.f32 %v1923, %v2116
        %v2118 = vpop.f32.mrb[0].mxu0
        %v2119 = vadd.f32 %v1923, %v2118
        %2120 = vdwg.mxu0
        %v2121 = vadd.f32 %v1819, %v2051
        %v2122 = vadd.f32 %v1821, %v2053
        %v2123 = vadd.f32 %v1825, %v2057
        %v2124 = vadd.f32 %v1827, %v2059
        %v2125 = vadd.f32 %v1831, %v2063
        %v2126 = vadd.f32 %v1833, %v2065
        %v2127 = vadd.f32 %v1837, %v2069
        %v2128 = vadd.f32 %v1839, %v2071
        %v2129 = vld [vmem:[#allocation17] sm:$0xff]
        %v2130 = vld [vmem:[#allocation17 + $0x8] sm:$0xff]
        %v2131 = vld [vmem:[#allocation17 + $0x10] sm:$0xff]
        %v2132 = vld [vmem:[#allocation17 + $0x18] sm:$0xff]
        %v2133 = vmax.f32 %v2121, 0.0
        %v2134 = vmax.f32 %v2122, 0.0
        %v2135 = vmax.f32 %v2123, 0.0
        %v2136 = vmax.f32 %v2124, 0.0
        %v2137 = vmax.f32 %v2125, 0.0
        %v2138 = vmax.f32 %v2126, 0.0
        %v2139 = vmax.f32 %v2127, 0.0
        %v2140 = vmax.f32 %v2128, 0.0
        %v2141 = vld [vmem:[#allocation18] sm:$0xff]
        %v2142 = vld [vmem:[#allocation18 + $0x8] sm:$0xff]
        %v2143 = vld [vmem:[#allocation18 + $0x10] sm:$0xff]
        %v2144 = vld [vmem:[#allocation18 + $0x18] sm:$0xff]
        %2146 = vset.pattern.permute.xlu0 0
        %2147 = vperm.xlu0 %2146, %v2141
        %v2148 = vpop.permute.xlu0 %2147
        %2151 = vset.pattern.permute.xlu0 0
        %2152 = vperm.xlu0 %2151, %v2142
        %v2153 = vpop.permute.xlu0 %2152
        %2156 = vset.pattern.permute.xlu0 0
        %2157 = vperm.xlu0 %2156, %v2143
        %v2158 = vpop.permute.xlu0 %2157
        %2161 = vset.pattern.permute.xlu0 0
        %2162 = vperm.xlu0 %2161, %v2144
        %v2163 = vpop.permute.xlu0 %2162
        %vm2165 = vcmask 261120
        %v2167 = vsel %vm2165, %v2129, 0
        %v2170 = vsel %vm2165, %v2130, 0
        %v2173 = vsel %vm2165, %v2131, 0
        %v2176 = vsel %vm2165, %v2132, 0
        %2178 = vmatprep.subr.mxu0 %v2134
        %2179 = vmatpush1.msra.mxu0 %v2133
        %2180 = vmatprep.subr.mxu0 %v2136
        %2181 = vmatpush1.msra.mxu0 %v2135
        %2182 = vmatprep.subr.mxu0 %v2138
        %2183 = vmatpush1.msra.mxu0 %v2137
        %2184 = vmatprep.subr.mxu0 %v2140
        %2185 = vmatpush1.msra.mxu0 %v2139
        %2186 = vmatprep.subr.mxu0 0.0
        %2187 = vmatpush1.msra.mxu0 0.0
        %2188 = vmatprep.subr.mxu0 0.0
        %2189 = vmatpush1.msra.mxu0 0.0
        %2190 = vmatprep.subr.mxu0 0.0
        %2191 = vmatpush1.msra.mxu0 0.0
        %2192 = vmatprep.subr.mxu0 0.0
        %2193 = vmatpush1.msra.mxu0 0.0
        %2194 = vmatprep.subr.mxu0 0.0
        %2195 = vmatpush1.msra.mxu0 0.0
        %2196 = vmatprep.subr.mxu0 0.0
        %2197 = vmatpush1.msra.mxu0 0.0
        %2198 = vmatprep.subr.mxu0 0.0
        %2199 = vmatpush1.msra.mxu0 0.0
        %2200 = vmatprep.subr.mxu0 0.0
        %2201 = vmatpush1.msra.mxu0 0.0
        %2202 = vmatprep.subr.mxu0 0.0
        %2203 = vmatpush1.msra.mxu0 0.0
        %2204 = vmatprep.subr.mxu0 0.0
        %2205 = vmatpush1.msra.mxu0 0.0
        %2206 = vmatprep.subr.mxu0 0.0
        %2207 = vmatpush1.msra.mxu0 0.0
        %2208 = vmatprep.subr.mxu0 0.0
        %2209 = vmatpush1.msra.mxu0 0.0
        %2210 = vmatprep.subr.mxu0 0.0
        %2211 = vmatpush1.msra.mxu0 0.0
        %2212 = vmatprep.subr.mxu0 0.0
        %2213 = vmatpush1.msra.mxu0 0.0
        %2214 = vmatprep.subr.mxu0 0.0
        %2215 = vmatpush1.msra.mxu0 0.0
        %2216 = vmatprep.subr.mxu0 0.0
        %2217 = vmatpush1.msra.mxu0 0.0
        %2218 = vmatprep.subr.mxu0 0.0
        %2219 = vmatpush1.msra.mxu0 0.0
        %2220 = vmatprep.subr.mxu0 0.0
        %2221 = vmatpush1.msra.mxu0 0.0
        %2222 = vmatprep.subr.mxu0 0.0
        %2223 = vmatpush1.msra.mxu0 0.0
        %2224 = vmatprep.subr.mxu0 0.0
        %2225 = vmatpush1.msra.mxu0 0.0
        %2226 = vmatprep.subr.mxu0 0.0
        %2227 = vmatpush1.msra.mxu0 0.0
        %2228 = vmatprep.subr.mxu0 0.0
        %2229 = vmatpush1.msra.mxu0 0.0
        %2230 = vmatprep.subr.mxu0 0.0
        %2231 = vmatpush1.msra.mxu0 0.0
        %2232 = vmatprep.subr.mxu0 0.0
        %2233 = vmatpush1.msra.mxu0 0.0
        %2234 = vmatprep.subr.mxu0 0.0
        %2235 = vmatpush1.msra.mxu0 0.0
        %2236 = vmatprep.subr.mxu0 0.0
        %2237 = vmatpush1.msra.mxu0 0.0
        %2238 = vmatprep.subr.mxu0 0.0
        %2239 = vmatpush1.msra.mxu0 0.0
        %2240 = vmatprep.subr.mxu0 0.0
        %2241 = vmatpush1.msra.mxu0 0.0
        %2242 = vmatprep.mubr.f32.mxu0 0.0
        %2243 = vmatmul.mubr.f32.gmra.mrb[0].mxu0 %v2167
        %v2244 = vpop.f32.mrb[0].mxu0
        %v2245 = vadd.f32 %v2148, %v2244
        %v2246 = vpop.f32.mrb[0].mxu0
        %v2247 = vadd.f32 %v2148, %v2246
        %2248 = vmatprep.mubr.f32.mxu0 0.0
        %2249 = vmatmul.mubr.f32.gmra.mrb[0].mxu0 %v2170
        %v2250 = vpop.f32.mrb[0].mxu0
        %v2251 = vadd.f32 %v2153, %v2250
        %v2252 = vpop.f32.mrb[0].mxu0
        %v2253 = vadd.f32 %v2153, %v2252
        %2254 = vmatprep.mubr.f32.mxu0 0.0
        %2255 = vmatmul.mubr.f32.gmra.mrb[0].mxu0 %v2173
        %v2256 = vpop.f32.mrb[0].mxu0
        %v2257 = vadd.f32 %v2158, %v2256
        %v2258 = vpop.f32.mrb[0].mxu0
        %v2259 = vadd.f32 %v2158, %v2258
        %2260 = vmatprep.mubr.f32.mxu0 0.0
        %2261 = vmatmul.mubr.f32.gmra.mrb[0].mxu0 %v2176
        %v2262 = vpop.f32.mrb[0].mxu0
        %v2263 = vadd.f32 %v2163, %v2262
        %v2264 = vpop.f32.mrb[0].mxu0
        %v2265 = vadd.f32 %v2163, %v2264
        %2266 = vdwg.mxu0
        %v2267 = vld [vmem:[#allocation20] sm:$0xff]
        %v2268 = vld [vmem:[#allocation20 + $0x8] sm:$0xff]
        %v2269 = vld [vmem:[#allocation20 + $0x10] sm:$0xff]
        %v2270 = vld [vmem:[#allocation20 + $0x18] sm:$0xff]
        %v2271 = vmax.f32 %v2245, 0.0
        %v2272 = vmax.f32 %v2247, 0.0
        %v2273 = vmax.f32 %v2251, 0.0
        %v2274 = vmax.f32 %v2253, 0.0
        %v2275 = vmax.f32 %v2257, 0.0
        %v2276 = vmax.f32 %v2259, 0.0
        %v2277 = vmax.f32 %v2263, 0.0
        %v2278 = vmax.f32 %v2265, 0.0
        %v2279 = vld [vmem:[#allocation21] sm:$0xff]
        %v2280 = vld [vmem:[#allocation21 + $0x8] sm:$0xff]
        %v2281 = vld [vmem:[#allocation21 + $0x10] sm:$0xff]
        %v2282 = vld [vmem:[#allocation21 + $0x18] sm:$0xff]
        %2284 = vset.pattern.permute.xlu0 0
        %2285 = vperm.xlu0 %2284, %v2279
        %v2286 = vpop.permute.xlu0 %2285
        %2289 = vset.pattern.permute.xlu0 0
        %2290 = vperm.xlu0 %2289, %v2280
        %v2291 = vpop.permute.xlu0 %2290
        %2294 = vset.pattern.permute.xlu0 0
        %2295 = vperm.xlu0 %2294, %v2281
        %v2296 = vpop.permute.xlu0 %2295
        %2299 = vset.pattern.permute.xlu0 0
        %2300 = vperm.xlu0 %2299, %v2282
        %v2301 = vpop.permute.xlu0 %2300
        %v2304 = vsel %vm2165, %v2267, 0
        %v2307 = vsel %vm2165, %v2268, 0
        %v2310 = vsel %vm2165, %v2269, 0
        %v2313 = vsel %vm2165, %v2270, 0
        %2315 = vmatprep.subr.mxu0 %v2272
        %2316 = vmatpush1.msra.mxu0 %v2271
        %2317 = vmatprep.subr.mxu0 %v2274
        %2318 = vmatpush1.msra.mxu0 %v2273
        %2319 = vmatprep.subr.mxu0 %v2276
        %2320 = vmatpush1.msra.mxu0 %v2275
        %2321 = vmatprep.subr.mxu0 %v2278
        %2322 = vmatpush1.msra.mxu0 %v2277
        %2323 = vmatprep.subr.mxu0 0.0
        %2324 = vmatpush1.msra.mxu0 0.0
        %2325 = vmatprep.subr.mxu0 0.0
        %2326 = vmatpush1.msra.mxu0 0.0
        %2327 = vmatprep.subr.mxu0 0.0
        %2328 = vmatpush1.msra.mxu0 0.0
        %2329 = vmatprep.subr.mxu0 0.0
        %2330 = vmatpush1.msra.mxu0 0.0
        %2331 = vmatprep.subr.mxu0 0.0
        %2332 = vmatpush1.msra.mxu0 0.0
        %2333 = vmatprep.subr.mxu0 0.0
        %2334 = vmatpush1.msra.mxu0 0.0
        %2335 = vmatprep.subr.mxu0 0.0
        %2336 = vmatpush1.msra.mxu0 0.0
        %2337 = vmatprep.subr.mxu0 0.0
        %2338 = vmatpush1.msra.mxu0 0.0
        %2339 = vmatprep.subr.mxu0 0.0
        %2340 = vmatpush1.msra.mxu0 0.0
        %2341 = vmatprep.subr.mxu0 0.0
        %2342 = vmatpush1.msra.mxu0 0.0
        %2343 = vmatprep.subr.mxu0 0.0
        %2344 = vmatpush1.msra.mxu0 0.0
        %2345 = vmatprep.subr.mxu0 0.0
        %2346 = vmatpush1.msra.mxu0 0.0
        %2347 = vmatprep.subr.mxu0 0.0
        %2348 = vmatpush1.msra.mxu0 0.0
        %2349 = vmatprep.subr.mxu0 0.0
        %2350 = vmatpush1.msra.mxu0 0.0
        %2351 = vmatprep.subr.mxu0 0.0
        %2352 = vmatpush1.msra.mxu0 0.0
        %2353 = vmatprep.subr.mxu0 0.0
        %2354 = vmatpush1.msra.mxu0 0.0
        %2355 = vmatprep.subr.mxu0 0.0
        %2356 = vmatpush1.msra.mxu0 0.0
        %2357 = vmatprep.subr.mxu0 0.0
        %2358 = vmatpush1.msra.mxu0 0.0
        %2359 = vmatprep.subr.mxu0 0.0
        %2360 = vmatpush1.msra.mxu0 0.0
        %2361 = vmatprep.subr.mxu0 0.0
        %2362 = vmatpush1.msra.mxu0 0.0
        %2363 = vmatprep.subr.mxu0 0.0
        %2364 = vmatpush1.msra.mxu0 0.0
        %2365 = vmatprep.subr.mxu0 0.0
        %2366 = vmatpush1.msra.mxu0 0.0
        %2367 = vmatprep.subr.mxu0 0.0
        %2368 = vmatpush1.msra.mxu0 0.0
        %2369 = vmatprep.subr.mxu0 0.0
        %2370 = vmatpush1.msra.mxu0 0.0
        %2371 = vmatprep.subr.mxu0 0.0
        %2372 = vmatpush1.msra.mxu0 0.0
        %2373 = vmatprep.subr.mxu0 0.0
        %2374 = vmatpush1.msra.mxu0 0.0
        %2375 = vmatprep.subr.mxu0 0.0
        %2376 = vmatpush1.msra.mxu0 0.0
        %2377 = vmatprep.subr.mxu0 0.0
        %2378 = vmatpush1.msra.mxu0 0.0
        %2379 = vmatprep.mubr.f32.mxu0 0.0
        %2380 = vmatmul.mubr.f32.gmra.mrb[0].mxu0 %v2304
        %v2381 = vpop.f32.mrb[0].mxu0
        %v2382 = vadd.f32 %v2286, %v2381
        %v2383 = vpop.f32.mrb[0].mxu0
        %v2384 = vadd.f32 %v2286, %v2383
        %2385 = vmatprep.mubr.f32.mxu0 0.0
        %2386 = vmatmul.mubr.f32.gmra.mrb[0].mxu0 %v2307
        %v2387 = vpop.f32.mrb[0].mxu0
        %v2388 = vadd.f32 %v2291, %v2387
        %v2389 = vpop.f32.mrb[0].mxu0
        %v2390 = vadd.f32 %v2291, %v2389
        %2391 = vmatprep.mubr.f32.mxu0 0.0
        %2392 = vmatmul.mubr.f32.gmra.mrb[0].mxu0 %v2310
        %v2393 = vpop.f32.mrb[0].mxu0
        %v2394 = vadd.f32 %v2296, %v2393
        %v2395 = vpop.f32.mrb[0].mxu0
        %v2396 = vadd.f32 %v2296, %v2395
        %2397 = vmatprep.mubr.f32.mxu0 0.0
        %2398 = vmatmul.mubr.f32.gmra.mrb[0].mxu0 %v2313
        %v2399 = vpop.f32.mrb[0].mxu0
        %v2400 = vadd.f32 %v2301, %v2399
        %v2401 = vpop.f32.mrb[0].mxu0
        %v2402 = vadd.f32 %v2301, %v2401
        %2403 = vdwg.mxu0
        %v2404 = vadd.f32 %v2121, %v2382
        %v2405 = vadd.f32 %v2122, %v2384
        %v2406 = vadd.f32 %v2123, %v2388
        %v2407 = vadd.f32 %v2124, %v2390
        %v2408 = vadd.f32 %v2125, %v2394
        %v2409 = vadd.f32 %v2126, %v2396
        %v2410 = vadd.f32 %v2127, %v2400
        %v2411 = vadd.f32 %v2128, %v2402
        %v2412 = vadd.f32 %v2404, %v2075
        %v2413 = vadd.f32 %v2405, %v2077
        %v2414 = vadd.f32 %v2406, %v2081
        %v2415 = vadd.f32 %v2407, %v2083
        %v2416 = vadd.f32 %v2408, %v2087
        %v2417 = vadd.f32 %v2409, %v2089
        %v2418 = vadd.f32 %v2410, %v2093
        %v2419 = vadd.f32 %v2411, %v2095
        %s2420 = scalar_lea.vmem [#allocation17], 32
        %v2421 = vld [vmem:[%s2420] sm:$0xff]
        %v2422 = vld [vmem:[%s2420 + $0x8] sm:$0xff]
        %v2423 = vld [vmem:[%s2420 + $0x10] sm:$0xff]
        %v2424 = vld [vmem:[%s2420 + $0x18] sm:$0xff]
        %v2425 = vmax.f32 %v2412, 0.0
        %v2426 = vmax.f32 %v2413, 0.0
        %v2427 = vmax.f32 %v2414, 0.0
        %v2428 = vmax.f32 %v2415, 0.0
        %v2429 = vmax.f32 %v2416, 0.0
        %v2430 = vmax.f32 %v2417, 0.0
        %v2431 = vmax.f32 %v2418, 0.0
        %v2432 = vmax.f32 %v2419, 0.0
        %s2433 = scalar_lea.vmem [#allocation18], 32
        %v2434 = vld [vmem:[%s2433] sm:$0xff]
        %v2435 = vld [vmem:[%s2433 + $0x8] sm:$0xff]
        %v2436 = vld [vmem:[%s2433 + $0x10] sm:$0xff]
        %v2437 = vld [vmem:[%s2433 + $0x18] sm:$0xff]
        %2439 = vset.pattern.permute.xlu0 0
        %2440 = vperm.xlu0 %2439, %v2434
        %v2441 = vpop.permute.xlu0 %2440
        %2444 = vset.pattern.permute.xlu0 0
        %2445 = vperm.xlu0 %2444, %v2435
        %v2446 = vpop.permute.xlu0 %2445
        %2449 = vset.pattern.permute.xlu0 0
        %2450 = vperm.xlu0 %2449, %v2436
        %v2451 = vpop.permute.xlu0 %2450
        %2454 = vset.pattern.permute.xlu0 0
        %2455 = vperm.xlu0 %2454, %v2437
        %v2456 = vpop.permute.xlu0 %2455
        %v2459 = vsel %vm2165, %v2421, 0
        %v2462 = vsel %vm2165, %v2422, 0
        %v2465 = vsel %vm2165, %v2423, 0
        %v2468 = vsel %vm2165, %v2424, 0
        %2470 = vmatprep.subr.mxu0 %v2426
        %2471 = vmatpush1.msra.mxu0 %v2425
        %2472 = vmatprep.subr.mxu0 %v2428
        %2473 = vmatpush1.msra.mxu0 %v2427
        %2474 = vmatprep.subr.mxu0 %v2430
        %2475 = vmatpush1.msra.mxu0 %v2429
        %2476 = vmatprep.subr.mxu0 %v2432
        %2477 = vmatpush1.msra.mxu0 %v2431
        %2478 = vmatprep.subr.mxu0 0.0
        %2479 = vmatpush1.msra.mxu0 0.0
        %2480 = vmatprep.subr.mxu0 0.0
        %2481 = vmatpush1.msra.mxu0 0.0
        %2482 = vmatprep.subr.mxu0 0.0
        %2483 = vmatpush1.msra.mxu0 0.0
        %2484 = vmatprep.subr.mxu0 0.0
        %2485 = vmatpush1.msra.mxu0 0.0
        %2486 = vmatprep.subr.mxu0 0.0
        %2487 = vmatpush1.msra.mxu0 0.0
        %2488 = vmatprep.subr.mxu0 0.0
        %2489 = vmatpush1.msra.mxu0 0.0
        %2490 = vmatprep.subr.mxu0 0.0
        %2491 = vmatpush1.msra.mxu0 0.0
        %2492 = vmatprep.subr.mxu0 0.0
        %2493 = vmatpush1.msra.mxu0 0.0
        %2494 = vmatprep.subr.mxu0 0.0
        %2495 = vmatpush1.msra.mxu0 0.0
        %2496 = vmatprep.subr.mxu0 0.0
        %2497 = vmatpush1.msra.mxu0 0.0
        %2498 = vmatprep.subr.mxu0 0.0
        %2499 = vmatpush1.msra.mxu0 0.0
        %2500 = vmatprep.subr.mxu0 0.0
        %2501 = vmatpush1.msra.mxu0 0.0
        %2502 = vmatprep.subr.mxu0 0.0
        %2503 = vmatpush1.msra.mxu0 0.0
        %2504 = vmatprep.subr.mxu0 0.0
        %2505 = vmatpush1.msra.mxu0 0.0
        %2506 = vmatprep.subr.mxu0 0.0
        %2507 = vmatpush1.msra.mxu0 0.0
        %2508 = vmatprep.subr.mxu0 0.0
        %2509 = vmatpush1.msra.mxu0 0.0
        %2510 = vmatprep.subr.mxu0 0.0
        %2511 = vmatpush1.msra.mxu0 0.0
        %2512 = vmatprep.subr.mxu0 0.0
        %2513 = vmatpush1.msra.mxu0 0.0
        %2514 = vmatprep.subr.mxu0 0.0
        %2515 = vmatpush1.msra.mxu0 0.0
        %2516 = vmatprep.subr.mxu0 0.0
        %2517 = vmatpush1.msra.mxu0 0.0
        %2518 = vmatprep.subr.mxu0 0.0
        %2519 = vmatpush1.msra.mxu0 0.0
        %2520 = vmatprep.subr.mxu0 0.0
        %2521 = vmatpush1.msra.mxu0 0.0
        %2522 = vmatprep.subr.mxu0 0.0
        %2523 = vmatpush1.msra.mxu0 0.0
        %2524 = vmatprep.subr.mxu0 0.0
        %2525 = vmatpush1.msra.mxu0 0.0
        %2526 = vmatprep.subr.mxu0 0.0
        %2527 = vmatpush1.msra.mxu0 0.0
        %2528 = vmatprep.subr.mxu0 0.0
        %2529 = vmatpush1.msra.mxu0 0.0
        %2530 = vmatprep.subr.mxu0 0.0
        %2531 = vmatpush1.msra.mxu0 0.0
        %2532 = vmatprep.subr.mxu0 0.0
        %2533 = vmatpush1.msra.mxu0 0.0
        %2534 = vmatprep.mubr.f32.mxu0 0.0
        %2535 = vmatmul.mubr.f32.gmra.mrb[0].mxu0 %v2459
        %v2536 = vpop.f32.mrb[0].mxu0
        %v2537 = vadd.f32 %v2441, %v2536
        %v2538 = vpop.f32.mrb[0].mxu0
        %v2539 = vadd.f32 %v2441, %v2538
        %2540 = vmatprep.mubr.f32.mxu0 0.0
        %2541 = vmatmul.mubr.f32.gmra.mrb[0].mxu0 %v2462
        %v2542 = vpop.f32.mrb[0].mxu0
        %v2543 = vadd.f32 %v2446, %v2542
        %v2544 = vpop.f32.mrb[0].mxu0
        %v2545 = vadd.f32 %v2446, %v2544
        %2546 = vmatprep.mubr.f32.mxu0 0.0
        %2547 = vmatmul.mubr.f32.gmra.mrb[0].mxu0 %v2465
        %v2548 = vpop.f32.mrb[0].mxu0
        %v2549 = vadd.f32 %v2451, %v2548
        %v2550 = vpop.f32.mrb[0].mxu0
        %v2551 = vadd.f32 %v2451, %v2550
        %2552 = vmatprep.mubr.f32.mxu0 0.0
        %2553 = vmatmul.mubr.f32.gmra.mrb[0].mxu0 %v2468
        %v2554 = vpop.f32.mrb[0].mxu0
        %v2555 = vadd.f32 %v2456, %v2554
        %v2556 = vpop.f32.mrb[0].mxu0
        %v2557 = vadd.f32 %v2456, %v2556
        %2558 = vdwg.mxu0
        %s2559 = scalar_lea.vmem [#allocation20], 32
        %v2560 = vld [vmem:[%s2559] sm:$0xff]
        %v2561 = vld [vmem:[%s2559 + $0x8] sm:$0xff]
        %v2562 = vld [vmem:[%s2559 + $0x10] sm:$0xff]
        %v2563 = vld [vmem:[%s2559 + $0x18] sm:$0xff]
        %v2564 = vmax.f32 %v2537, 0.0
        %v2565 = vmax.f32 %v2539, 0.0
        %v2566 = vmax.f32 %v2543, 0.0
        %v2567 = vmax.f32 %v2545, 0.0
        %v2568 = vmax.f32 %v2549, 0.0
        %v2569 = vmax.f32 %v2551, 0.0
        %v2570 = vmax.f32 %v2555, 0.0
        %v2571 = vmax.f32 %v2557, 0.0
        %s2572 = scalar_lea.vmem [#allocation21], 32
        %v2573 = vld [vmem:[%s2572] sm:$0xff]
        %v2574 = vld [vmem:[%s2572 + $0x8] sm:$0xff]
        %v2575 = vld [vmem:[%s2572 + $0x10] sm:$0xff]
        %v2576 = vld [vmem:[%s2572 + $0x18] sm:$0xff]
        %2578 = vset.pattern.permute.xlu0 0
        %2579 = vperm.xlu0 %2578, %v2573
        %v2580 = vpop.permute.xlu0 %2579
        %2583 = vset.pattern.permute.xlu0 0
        %2584 = vperm.xlu0 %2583, %v2574
        %v2585 = vpop.permute.xlu0 %2584
        %2588 = vset.pattern.permute.xlu0 0
        %2589 = vperm.xlu0 %2588, %v2575
        %v2590 = vpop.permute.xlu0 %2589
        %2593 = vset.pattern.permute.xlu0 0
        %2594 = vperm.xlu0 %2593, %v2576
        %v2595 = vpop.permute.xlu0 %2594
        %v2598 = vsel %vm2165, %v2560, 0
        %v2601 = vsel %vm2165, %v2561, 0
        %v2604 = vsel %vm2165, %v2562, 0
        %v2607 = vsel %vm2165, %v2563, 0
        %2609 = vmatprep.subr.mxu0 %v2565
        %2610 = vmatpush1.msra.mxu0 %v2564
        %2611 = vmatprep.subr.mxu0 %v2567
        %2612 = vmatpush1.msra.mxu0 %v2566
        %2613 = vmatprep.subr.mxu0 %v2569
        %2614 = vmatpush1.msra.mxu0 %v2568
        %2615 = vmatprep.subr.mxu0 %v2571
        %2616 = vmatpush1.msra.mxu0 %v2570
        %2617 = vmatprep.subr.mxu0 0.0
        %2618 = vmatpush1.msra.mxu0 0.0
        %2619 = vmatprep.subr.mxu0 0.0
        %2620 = vmatpush1.msra.mxu0 0.0
        %2621 = vmatprep.subr.mxu0 0.0
        %2622 = vmatpush1.msra.mxu0 0.0
        %2623 = vmatprep.subr.mxu0 0.0
        %2624 = vmatpush1.msra.mxu0 0.0
        %2625 = vmatprep.subr.mxu0 0.0
        %2626 = vmatpush1.msra.mxu0 0.0
        %2627 = vmatprep.subr.mxu0 0.0
        %2628 = vmatpush1.msra.mxu0 0.0
        %2629 = vmatprep.subr.mxu0 0.0
        %2630 = vmatpush1.msra.mxu0 0.0
        %2631 = vmatprep.subr.mxu0 0.0
        %2632 = vmatpush1.msra.mxu0 0.0
        %2633 = vmatprep.subr.mxu0 0.0
        %2634 = vmatpush1.msra.mxu0 0.0
        %2635 = vmatprep.subr.mxu0 0.0
        %2636 = vmatpush1.msra.mxu0 0.0
        %2637 = vmatprep.subr.mxu0 0.0
        %2638 = vmatpush1.msra.mxu0 0.0
        %2639 = vmatprep.subr.mxu0 0.0
        %2640 = vmatpush1.msra.mxu0 0.0
        %2641 = vmatprep.subr.mxu0 0.0
        %2642 = vmatpush1.msra.mxu0 0.0
        %2643 = vmatprep.subr.mxu0 0.0
        %2644 = vmatpush1.msra.mxu0 0.0
        %2645 = vmatprep.subr.mxu0 0.0
        %2646 = vmatpush1.msra.mxu0 0.0
        %2647 = vmatprep.subr.mxu0 0.0
        %2648 = vmatpush1.msra.mxu0 0.0
        %2649 = vmatprep.subr.mxu0 0.0
        %2650 = vmatpush1.msra.mxu0 0.0
        %2651 = vmatprep.subr.mxu0 0.0
        %2652 = vmatpush1.msra.mxu0 0.0
        %2653 = vmatprep.subr.mxu0 0.0
        %2654 = vmatpush1.msra.mxu0 0.0
        %2655 = vmatprep.subr.mxu0 0.0
        %2656 = vmatpush1.msra.mxu0 0.0
        %2657 = vmatprep.subr.mxu0 0.0
        %2658 = vmatpush1.msra.mxu0 0.0
        %2659 = vmatprep.subr.mxu0 0.0
        %2660 = vmatpush1.msra.mxu0 0.0
        %2661 = vmatprep.subr.mxu0 0.0
        %2662 = vmatpush1.msra.mxu0 0.0
        %2663 = vmatprep.subr.mxu0 0.0
        %2664 = vmatpush1.msra.mxu0 0.0
        %2665 = vmatprep.subr.mxu0 0.0
        %2666 = vmatpush1.msra.mxu0 0.0
        %2667 = vmatprep.subr.mxu0 0.0
        %2668 = vmatpush1.msra.mxu0 0.0
        %2669 = vmatprep.subr.mxu0 0.0
        %2670 = vmatpush1.msra.mxu0 0.0
        %2671 = vmatprep.subr.mxu0 0.0
        %2672 = vmatpush1.msra.mxu0 0.0
        %2673 = vmatprep.mubr.f32.mxu0 0.0
        %2674 = vmatmul.mubr.f32.gmra.mrb[0].mxu0 %v2598
        %v2675 = vpop.f32.mrb[0].mxu0
        %v2676 = vadd.f32 %v2580, %v2675
        %v2677 = vpop.f32.mrb[0].mxu0
        %v2678 = vadd.f32 %v2580, %v2677
        %2679 = vmatprep.mubr.f32.mxu0 0.0
        %2680 = vmatmul.mubr.f32.gmra.mrb[0].mxu0 %v2601
        %v2681 = vpop.f32.mrb[0].mxu0
        %v2682 = vadd.f32 %v2585, %v2681
        %v2683 = vpop.f32.mrb[0].mxu0
        %v2684 = vadd.f32 %v2585, %v2683
        %2685 = vmatprep.mubr.f32.mxu0 0.0
        %2686 = vmatmul.mubr.f32.gmra.mrb[0].mxu0 %v2604
        %v2687 = vpop.f32.mrb[0].mxu0
        %v2688 = vadd.f32 %v2590, %v2687
        %v2689 = vpop.f32.mrb[0].mxu0
        %v2690 = vadd.f32 %v2590, %v2689
        %2691 = vmatprep.mubr.f32.mxu0 0.0
        %2692 = vmatmul.mubr.f32.gmra.mrb[0].mxu0 %v2607
        %v2693 = vpop.f32.mrb[0].mxu0
        %v2694 = vadd.f32 %v2595, %v2693
        %v2695 = vpop.f32.mrb[0].mxu0
        %v2696 = vadd.f32 %v2595, %v2695
        %2697 = vdwg.mxu0
        %v2698 = vadd.f32 %v2412, %v2676
        %v2699 = vadd.f32 %v2413, %v2678
        %v2700 = vadd.f32 %v2414, %v2682
        %v2701 = vadd.f32 %v2415, %v2684
        %v2702 = vadd.f32 %v2416, %v2688
        %v2703 = vadd.f32 %v2417, %v2690
        %v2704 = vadd.f32 %v2418, %v2694
        %v2705 = vadd.f32 %v2419, %v2696
        %v2706 = vadd.f32 %v2698, %v2099
        %v2707 = vadd.f32 %v2699, %v2101
        %v2708 = vadd.f32 %v2700, %v2105
        %v2709 = vadd.f32 %v2701, %v2107
        %v2710 = vadd.f32 %v2702, %v2111
        %v2711 = vadd.f32 %v2703, %v2113
        %v2712 = vadd.f32 %v2704, %v2117
        %v2713 = vadd.f32 %v2705, %v2119
        %s2714 = scalar_lea.vmem [#allocation17], 64
        %v2715 = vld [vmem:[%s2714] sm:$0xff]
        %v2716 = vld [vmem:[%s2714 + $0x8] sm:$0xff]
        %v2717 = vld [vmem:[%s2714 + $0x10] sm:$0xff]
        %v2718 = vld [vmem:[%s2714 + $0x18] sm:$0xff]
        %v2719 = vmax.f32 %v2706, 0.0
        %v2720 = vmax.f32 %v2707, 0.0
        %v2721 = vmax.f32 %v2708, 0.0
        %v2722 = vmax.f32 %v2709, 0.0
        %v2723 = vmax.f32 %v2710, 0.0
        %v2724 = vmax.f32 %v2711, 0.0
        %v2725 = vmax.f32 %v2712, 0.0
        %v2726 = vmax.f32 %v2713, 0.0
        %s2727 = scalar_lea.vmem [#allocation18], 64
        %v2728 = vld [vmem:[%s2727] sm:$0xff]
        %v2729 = vld [vmem:[%s2727 + $0x8] sm:$0xff]
        %v2730 = vld [vmem:[%s2727 + $0x10] sm:$0xff]
        %v2731 = vld [vmem:[%s2727 + $0x18] sm:$0xff]
        %2733 = vset.pattern.permute.xlu0 0
        %2734 = vperm.xlu0 %2733, %v2728
        %v2735 = vpop.permute.xlu0 %2734
        %2738 = vset.pattern.permute.xlu0 0
        %2739 = vperm.xlu0 %2738, %v2729
        %v2740 = vpop.permute.xlu0 %2739
        %2743 = vset.pattern.permute.xlu0 0
        %2744 = vperm.xlu0 %2743, %v2730
        %v2745 = vpop.permute.xlu0 %2744
        %2748 = vset.pattern.permute.xlu0 0
        %2749 = vperm.xlu0 %2748, %v2731
        %v2750 = vpop.permute.xlu0 %2749
        %v2753 = vsel %vm2165, %v2715, 0
        %v2756 = vsel %vm2165, %v2716, 0
        %v2759 = vsel %vm2165, %v2717, 0
        %v2762 = vsel %vm2165, %v2718, 0
        %2764 = vmatprep.subr.mxu0 %v2720
        %2765 = vmatpush1.msra.mxu0 %v2719
        %2766 = vmatprep.subr.mxu0 %v2722
        %2767 = vmatpush1.msra.mxu0 %v2721
        %2768 = vmatprep.subr.mxu0 %v2724
        %2769 = vmatpush1.msra.mxu0 %v2723
        %2770 = vmatprep.subr.mxu0 %v2726
        %2771 = vmatpush1.msra.mxu0 %v2725
        %2772 = vmatprep.subr.mxu0 0.0
        %2773 = vmatpush1.msra.mxu0 0.0
        %2774 = vmatprep.subr.mxu0 0.0
        %2775 = vmatpush1.msra.mxu0 0.0
        %2776 = vmatprep.subr.mxu0 0.0
        %2777 = vmatpush1.msra.mxu0 0.0
        %2778 = vmatprep.subr.mxu0 0.0
        %2779 = vmatpush1.msra.mxu0 0.0
        %2780 = vmatprep.subr.mxu0 0.0
        %2781 = vmatpush1.msra.mxu0 0.0
        %2782 = vmatprep.subr.mxu0 0.0
        %2783 = vmatpush1.msra.mxu0 0.0
        %2784 = vmatprep.subr.mxu0 0.0
        %2785 = vmatpush1.msra.mxu0 0.0
        %2786 = vmatprep.subr.mxu0 0.0
        %2787 = vmatpush1.msra.mxu0 0.0
        %2788 = vmatprep.subr.mxu0 0.0
        %2789 = vmatpush1.msra.mxu0 0.0
        %2790 = vmatprep.subr.mxu0 0.0
        %2791 = vmatpush1.msra.mxu0 0.0
        %2792 = vmatprep.subr.mxu0 0.0
        %2793 = vmatpush1.msra.mxu0 0.0
        %2794 = vmatprep.subr.mxu0 0.0
        %2795 = vmatpush1.msra.mxu0 0.0
        %2796 = vmatprep.subr.mxu0 0.0
        %2797 = vmatpush1.msra.mxu0 0.0
        %2798 = vmatprep.subr.mxu0 0.0
        %2799 = vmatpush1.msra.mxu0 0.0
        %2800 = vmatprep.subr.mxu0 0.0
        %2801 = vmatpush1.msra.mxu0 0.0
        %2802 = vmatprep.subr.mxu0 0.0
        %2803 = vmatpush1.msra.mxu0 0.0
        %2804 = vmatprep.subr.mxu0 0.0
        %2805 = vmatpush1.msra.mxu0 0.0
        %2806 = vmatprep.subr.mxu0 0.0
        %2807 = vmatpush1.msra.mxu0 0.0
        %2808 = vmatprep.subr.mxu0 0.0
        %2809 = vmatpush1.msra.mxu0 0.0
        %2810 = vmatprep.subr.mxu0 0.0
        %2811 = vmatpush1.msra.mxu0 0.0
        %2812 = vmatprep.subr.mxu0 0.0
        %2813 = vmatpush1.msra.mxu0 0.0
        %2814 = vmatprep.subr.mxu0 0.0
        %2815 = vmatpush1.msra.mxu0 0.0
        %2816 = vmatprep.subr.mxu0 0.0
        %2817 = vmatpush1.msra.mxu0 0.0
        %2818 = vmatprep.subr.mxu0 0.0
        %2819 = vmatpush1.msra.mxu0 0.0
        %2820 = vmatprep.subr.mxu0 0.0
        %2821 = vmatpush1.msra.mxu0 0.0
        %2822 = vmatprep.subr.mxu0 0.0
        %2823 = vmatpush1.msra.mxu0 0.0
        %2824 = vmatprep.subr.mxu0 0.0
        %2825 = vmatpush1.msra.mxu0 0.0
        %2826 = vmatprep.subr.mxu0 0.0
        %2827 = vmatpush1.msra.mxu0 0.0
        %2828 = vmatprep.mubr.f32.mxu0 0.0
        %2829 = vmatmul.mubr.f32.gmra.mrb[0].mxu0 %v2753
        %v2830 = vpop.f32.mrb[0].mxu0
        %v2831 = vadd.f32 %v2735, %v2830
        %v2832 = vpop.f32.mrb[0].mxu0
        %v2833 = vadd.f32 %v2735, %v2832
        %2834 = vmatprep.mubr.f32.mxu0 0.0
        %2835 = vmatmul.mubr.f32.gmra.mrb[0].mxu0 %v2756
        %v2836 = vpop.f32.mrb[0].mxu0
        %v2837 = vadd.f32 %v2740, %v2836
        %v2838 = vpop.f32.mrb[0].mxu0
        %v2839 = vadd.f32 %v2740, %v2838
        %2840 = vmatprep.mubr.f32.mxu0 0.0
        %2841 = vmatmul.mubr.f32.gmra.mrb[0].mxu0 %v2759
        %v2842 = vpop.f32.mrb[0].mxu0
        %v2843 = vadd.f32 %v2745, %v2842
        %v2844 = vpop.f32.mrb[0].mxu0
        %v2845 = vadd.f32 %v2745, %v2844
        %2846 = vmatprep.mubr.f32.mxu0 0.0
        %2847 = vmatmul.mubr.f32.gmra.mrb[0].mxu0 %v2762
        %v2848 = vpop.f32.mrb[0].mxu0
        %v2849 = vadd.f32 %v2750, %v2848
        %v2850 = vpop.f32.mrb[0].mxu0
        %v2851 = vadd.f32 %v2750, %v2850
        %2852 = vdwg.mxu0
        %s2853 = scalar_lea.vmem [#allocation20], 64
        %v2854 = vld [vmem:[%s2853] sm:$0xff]
        %v2855 = vld [vmem:[%s2853 + $0x8] sm:$0xff]
        %v2856 = vld [vmem:[%s2853 + $0x10] sm:$0xff]
        %v2857 = vld [vmem:[%s2853 + $0x18] sm:$0xff]
        %v2858 = vmax.f32 %v2831, 0.0
        %v2859 = vmax.f32 %v2833, 0.0
        %v2860 = vmax.f32 %v2837, 0.0
        %v2861 = vmax.f32 %v2839, 0.0
        %v2862 = vmax.f32 %v2843, 0.0
        %v2863 = vmax.f32 %v2845, 0.0
        %v2864 = vmax.f32 %v2849, 0.0
        %v2865 = vmax.f32 %v2851, 0.0
        %s2866 = scalar_lea.vmem [#allocation21], 64
        %v2867 = vld [vmem:[%s2866] sm:$0xff]
        %v2868 = vld [vmem:[%s2866 + $0x8] sm:$0xff]
        %v2869 = vld [vmem:[%s2866 + $0x10] sm:$0xff]
        %v2870 = vld [vmem:[%s2866 + $0x18] sm:$0xff]
        %2872 = vset.pattern.permute.xlu0 0
        %2873 = vperm.xlu0 %2872, %v2867
        %v2874 = vpop.permute.xlu0 %2873
        %2877 = vset.pattern.permute.xlu0 0
        %2878 = vperm.xlu0 %2877, %v2868
        %v2879 = vpop.permute.xlu0 %2878
        %2882 = vset.pattern.permute.xlu0 0
        %2883 = vperm.xlu0 %2882, %v2869
        %v2884 = vpop.permute.xlu0 %2883
        %2887 = vset.pattern.permute.xlu0 0
        %2888 = vperm.xlu0 %2887, %v2870
        %v2889 = vpop.permute.xlu0 %2888
        %v2892 = vsel %vm2165, %v2854, 0
        %v2895 = vsel %vm2165, %v2855, 0
        %v2898 = vsel %vm2165, %v2856, 0
        %v2901 = vsel %vm2165, %v2857, 0
        %2903 = vmatprep.subr.mxu0 %v2859
        %2904 = vmatpush1.msra.mxu0 %v2858
        %2905 = vmatprep.subr.mxu0 %v2861
        %2906 = vmatpush1.msra.mxu0 %v2860
        %2907 = vmatprep.subr.mxu0 %v2863
        %2908 = vmatpush1.msra.mxu0 %v2862
        %2909 = vmatprep.subr.mxu0 %v2865
        %2910 = vmatpush1.msra.mxu0 %v2864
        %2911 = vmatprep.subr.mxu0 0.0
        %2912 = vmatpush1.msra.mxu0 0.0
        %2913 = vmatprep.subr.mxu0 0.0
        %2914 = vmatpush1.msra.mxu0 0.0
        %2915 = vmatprep.subr.mxu0 0.0
        %2916 = vmatpush1.msra.mxu0 0.0
        %2917 = vmatprep.subr.mxu0 0.0
        %2918 = vmatpush1.msra.mxu0 0.0
        %2919 = vmatprep.subr.mxu0 0.0
        %2920 = vmatpush1.msra.mxu0 0.0
        %2921 = vmatprep.subr.mxu0 0.0
        %2922 = vmatpush1.msra.mxu0 0.0
        %2923 = vmatprep.subr.mxu0 0.0
        %2924 = vmatpush1.msra.mxu0 0.0
        %2925 = vmatprep.subr.mxu0 0.0
        %2926 = vmatpush1.msra.mxu0 0.0
        %2927 = vmatprep.subr.mxu0 0.0
        %2928 = vmatpush1.msra.mxu0 0.0
        %2929 = vmatprep.subr.mxu0 0.0
        %2930 = vmatpush1.msra.mxu0 0.0
        %2931 = vmatprep.subr.mxu0 0.0
        %2932 = vmatpush1.msra.mxu0 0.0
        %2933 = vmatprep.subr.mxu0 0.0
        %2934 = vmatpush1.msra.mxu0 0.0
        %2935 = vmatprep.subr.mxu0 0.0
        %2936 = vmatpush1.msra.mxu0 0.0
        %2937 = vmatprep.subr.mxu0 0.0
        %2938 = vmatpush1.msra.mxu0 0.0
        %2939 = vmatprep.subr.mxu0 0.0
        %2940 = vmatpush1.msra.mxu0 0.0
        %2941 = vmatprep.subr.mxu0 0.0
        %2942 = vmatpush1.msra.mxu0 0.0
        %2943 = vmatprep.subr.mxu0 0.0
        %2944 = vmatpush1.msra.mxu0 0.0
        %2945 = vmatprep.subr.mxu0 0.0
        %2946 = vmatpush1.msra.mxu0 0.0
        %2947 = vmatprep.subr.mxu0 0.0
        %2948 = vmatpush1.msra.mxu0 0.0
        %2949 = vmatprep.subr.mxu0 0.0
        %2950 = vmatpush1.msra.mxu0 0.0
        %2951 = vmatprep.subr.mxu0 0.0
        %2952 = vmatpush1.msra.mxu0 0.0
        %2953 = vmatprep.subr.mxu0 0.0
        %2954 = vmatpush1.msra.mxu0 0.0
        %2955 = vmatprep.subr.mxu0 0.0
        %2956 = vmatpush1.msra.mxu0 0.0
        %2957 = vmatprep.subr.mxu0 0.0
        %2958 = vmatpush1.msra.mxu0 0.0
        %2959 = vmatprep.subr.mxu0 0.0
        %2960 = vmatpush1.msra.mxu0 0.0
        %2961 = vmatprep.subr.mxu0 0.0
        %2962 = vmatpush1.msra.mxu0 0.0
        %2963 = vmatprep.subr.mxu0 0.0
        %2964 = vmatpush1.msra.mxu0 0.0
        %2965 = vmatprep.subr.mxu0 0.0
        %2966 = vmatpush1.msra.mxu0 0.0
        %2967 = vmatprep.mubr.f32.mxu0 0.0
        %2968 = vmatmul.mubr.f32.gmra.mrb[0].mxu0 %v2892
        %v2969 = vpop.f32.mrb[0].mxu0
        %v2970 = vadd.f32 %v2874, %v2969
        %v2971 = vpop.f32.mrb[0].mxu0
        %v2972 = vadd.f32 %v2874, %v2971
        %2973 = vmatprep.mubr.f32.mxu0 0.0
        %2974 = vmatmul.mubr.f32.gmra.mrb[0].mxu0 %v2895
        %v2975 = vpop.f32.mrb[0].mxu0
        %v2976 = vadd.f32 %v2879, %v2975
        %v2977 = vpop.f32.mrb[0].mxu0
        %v2978 = vadd.f32 %v2879, %v2977
        %2979 = vmatprep.mubr.f32.mxu0 0.0
        %2980 = vmatmul.mubr.f32.gmra.mrb[0].mxu0 %v2898
        %v2981 = vpop.f32.mrb[0].mxu0
        %v2982 = vadd.f32 %v2884, %v2981
        %v2983 = vpop.f32.mrb[0].mxu0
        %v2984 = vadd.f32 %v2884, %v2983
        %2985 = vmatprep.mubr.f32.mxu0 0.0
        %2986 = vmatmul.mubr.f32.gmra.mrb[0].mxu0 %v2901
        %v2987 = vpop.f32.mrb[0].mxu0
        %v2988 = vadd.f32 %v2889, %v2987
        %v2989 = vpop.f32.mrb[0].mxu0
        %v2990 = vadd.f32 %v2889, %v2989
        %2991 = vdwg.mxu0
        %v2992 = vadd.f32 %v2706, %v2970
        %v2993 = vadd.f32 %v2707, %v2972
        %v2994 = vadd.f32 %v2708, %v2976
        %v2995 = vadd.f32 %v2709, %v2978
        %v2996 = vadd.f32 %v2710, %v2982
        %v2997 = vadd.f32 %v2711, %v2984
        %v2998 = vadd.f32 %v2712, %v2988
        %v2999 = vadd.f32 %v2713, %v2990
        %v3000 = vld [vmem:[#allocation23] sm:$0x1]
        %v3001 = vmax.f32 %v2992, 0.0
        %v3002 = vmax.f32 %v2993, 0.0
        %v3003 = vmax.f32 %v2994, 0.0
        %v3004 = vmax.f32 %v2995, 0.0
        %v3005 = vmax.f32 %v2996, 0.0
        %v3006 = vmax.f32 %v2997, 0.0
        %v3007 = vmax.f32 %v2998, 0.0
        %v3008 = vmax.f32 %v2999, 0.0
        %v3009 = vld [vmem:[#allocation2] sm:$0x1]
        %3011 = vset.pattern.permute.xlu0 0
        %3012 = vperm.xlu0 %3011, %v3009
        %v3013 = vpop.permute.xlu0 %3012
        %v3015 = vlaneseq
        %v3016 = vshrl.u32 %v3015, 7
        %v3017 = vsub.s32 0, %v3016
        %v3018 = vrot.slane %v3013, %v3017
        %v3020 = vsel %vm2165, %v3000, 0
        %3022 = vmatprep.subr.mxu0 %v3002
        %3023 = vmatpush1.msra.mxu0 %v3001
        %3024 = vmatprep.subr.mxu0 %v3004
        %3025 = vmatpush1.msra.mxu0 %v3003
        %3026 = vmatprep.subr.mxu0 %v3006
        %3027 = vmatpush1.msra.mxu0 %v3005
        %3028 = vmatprep.subr.mxu0 %v3008
        %3029 = vmatpush1.msra.mxu0 %v3007
        %3030 = vmatprep.subr.mxu0 0.0
        %3031 = vmatpush1.msra.mxu0 0.0
        %3032 = vmatprep.subr.mxu0 0.0
        %3033 = vmatpush1.msra.mxu0 0.0
        %3034 = vmatprep.subr.mxu0 0.0
        %3035 = vmatpush1.msra.mxu0 0.0
        %3036 = vmatprep.subr.mxu0 0.0
        %3037 = vmatpush1.msra.mxu0 0.0
        %3038 = vmatprep.subr.mxu0 0.0
        %3039 = vmatpush1.msra.mxu0 0.0
        %3040 = vmatprep.subr.mxu0 0.0
        %3041 = vmatpush1.msra.mxu0 0.0
        %3042 = vmatprep.subr.mxu0 0.0
        %3043 = vmatpush1.msra.mxu0 0.0
        %3044 = vmatprep.subr.mxu0 0.0
        %3045 = vmatpush1.msra.mxu0 0.0
        %3046 = vmatprep.subr.mxu0 0.0
        %3047 = vmatpush1.msra.mxu0 0.0
        %3048 = vmatprep.subr.mxu0 0.0
        %3049 = vmatpush1.msra.mxu0 0.0
        %3050 = vmatprep.subr.mxu0 0.0
        %3051 = vmatpush1.msra.mxu0 0.0
        %3052 = vmatprep.subr.mxu0 0.0
        %3053 = vmatpush1.msra.mxu0 0.0
        %3054 = vmatprep.subr.mxu0 0.0
        %3055 = vmatpush1.msra.mxu0 0.0
        %3056 = vmatprep.subr.mxu0 0.0
        %3057 = vmatpush1.msra.mxu0 0.0
        %3058 = vmatprep.subr.mxu0 0.0
        %3059 = vmatpush1.msra.mxu0 0.0
        %3060 = vmatprep.subr.mxu0 0.0
        %3061 = vmatpush1.msra.mxu0 0.0
        %3062 = vmatprep.subr.mxu0 0.0
        %3063 = vmatpush1.msra.mxu0 0.0
        %3064 = vmatprep.subr.mxu0 0.0
        %3065 = vmatpush1.msra.mxu0 0.0
        %3066 = vmatprep.subr.mxu0 0.0
        %3067 = vmatpush1.msra.mxu0 0.0
        %3068 = vmatprep.subr.mxu0 0.0
        %3069 = vmatpush1.msra.mxu0 0.0
        %3070 = vmatprep.subr.mxu0 0.0
        %3071 = vmatpush1.msra.mxu0 0.0
        %3072 = vmatprep.subr.mxu0 0.0
        %3073 = vmatpush1.msra.mxu0 0.0
        %3074 = vmatprep.subr.mxu0 0.0
        %3075 = vmatpush1.msra.mxu0 0.0
        %3076 = vmatprep.subr.mxu0 0.0
        %3077 = vmatpush1.msra.mxu0 0.0
        %3078 = vmatprep.subr.mxu0 0.0
        %3079 = vmatpush1.msra.mxu0 0.0
        %3080 = vmatprep.subr.mxu0 0.0
        %3081 = vmatpush1.msra.mxu0 0.0
        %3082 = vmatprep.subr.mxu0 0.0
        %3083 = vmatpush1.msra.mxu0 0.0
        %3084 = vmatprep.subr.mxu0 0.0
        %3085 = vmatpush1.msra.mxu0 0.0
        %3086 = vmatprep.mubr.f32.mxu0 0.0
        %3087 = vmatmul.mubr.f32.gmra.mrb[0].mxu0 %v3020
        %v3088 = vpop.f32.mrb[0].mxu0
        %v3089 = vadd.f32 %v3018, %v3088
        %v3090 = vpop.f32.mrb[0].mxu0
        %v3091 = vadd.f32 %v3018, %v3090
        %3092 = vdwg.mxu0
        %v3095 = vcombine.low %v3089, %v3091
        %v3097 = vunpack.c.l.s4 1966171168
        %v3098 = vunpack.c.0.s8 %v3097
        %v3099 = vlaneseq
        %v3100 = vshrl.u32 %v3099, 7
        %v3101 = vsub.s32 %v3098, %v3100
        %v3102 = vrot.slane %v3095, %v3101
        %v3104 = vunpack.c.l.s4 1966171168
        %v3105 = vunpack.c.0.s8 %v3104
        %v3106 = vlaneseq
        %v3107 = vshrl.u32 %v3106, 7
        %v3108 = vsub.s32 %v3105, %v3107
        %v3109 = vrot.slane %v3102, %v3108
        %v3111 = vlaneseq
        %vm3112 = vcmp.ge.s32.totalorder %v3111, 0
        %vm3113 = vcmp.lt.s32.totalorder %v3111, 256
        %vm3114 = vmand %vm3112, %vm3113
        %3115 = vst.msk [vmem:[%s748] sm:$0x3] %vm3114, %v3109
        %s3116 = sand.u32 %s381, 1
        %s3117 = scalar_lea.sflag [#allocation5], %s3116
        %s3118 = sand.u32 %s381, 1
        %s3119 = smul.addr %s3118, 2
        %s3120 = scalar_lea.vmem [#allocation24], %s3119
        // Predicated region
        $region129: #{tpu_custom_call.1} parent=75 // pred_check
          %p3121 = pneg %p391
        $region130: #{tpu_custom_call.1} parent=75 // pred_check_branch
          %3123 = sbr.rel (%p3121) target = $region132
        $region131: #{tpu_custom_call.1} parent=75 // pred_region
          %s3124 = smul.u32 2, %s48
          %s3126 = ssub.s32 32, 32
          %3127 = vsyncadd %s3117, %s3126
          %s3128 = smul.addr %s47, 2
          %s3129 = sadd.s32 %s3124, %s3128
          %s3130 = smul.addr %s3129, 16
          %s3131 = scalar_lea.hbm %s14, %s3130
          %s3133 = sshll.u32 %s3120, 4
          %s3134 = int_to_ptr.vmem [resolvable:$true] %s3133
          %3136 = dma.vmem_to_hbm [thread:$0]  %s3134, 32, %s3131, %s3117
        $region132: #{tpu_custom_call.1} parent=75 // pred_fallthru
          _
      $region76: #{tpu_custom_call.1} parent=5 // pred_fallthru
        _
      %p3137 = scmp.le.s32.totalorder 2, %s38
      // Predicated region
      $region133: #{tpu_custom_call.1} parent=5 // pred_check
        %p3138 = pneg %p3137
      $region134: #{tpu_custom_call.1} parent=5 // pred_check_branch
        %3140 = sbr.rel (%p3138) target = $region136
      $region135: #{tpu_custom_call.1} parent=5 // pred_region
        %s3141 = ssub.s32 %s38, 2
        // Predicated region
        $region137: #{tpu_custom_call.1} parent=135 // pred_check
          %p3142 = pneg %p397
        $region138: #{tpu_custom_call.1} parent=135 // pred_check_branch
          %3144 = sbr.rel (%p3142) target = $region140
        $region139: #{tpu_custom_call.1} parent=135 // pred_region
          %s3145 = sand.u32 %s382, 1
          %s3146 = scalar_lea.sflag [#allocation5], %s3145
          %s3147 = sand.u32 %s382, 1
          %s3148 = smul.addr %s3147, 2
          %s3149 = scalar_lea.vmem [#allocation24], %s3148
          %3150 = dma.done %s3146, 32
        $region140: #{tpu_custom_call.1} parent=135 // pred_fallthru
          _
      $region136: #{tpu_custom_call.1} parent=5 // pred_fallthru
        _
    $region6: #{tpu_custom_call.1} parent=1 // loop_footer
      %s42 = sadd.s32 1, %s38
    $region7: #{tpu_custom_call.1} parent=1 // loop_footer_branch
      %37 = sbr.rel target = $region3
    $region8: #{tpu_custom_call.1} parent=1 // loop_exit
      _
    %3151 = vsyncpa [#allocation4], 1
    %s3152 = scalar_lea.sflag [#allocation4], 1
    %3153 = vsyncpa %s3152, 1
    %3154 = vsyncpa [#allocation7], 1
    %s3155 = scalar_lea.sflag [#allocation7], 1
    %3156 = vsyncpa %s3155, 1
    %3157 = vsyncpa [#allocation10], 1
    %s3158 = scalar_lea.sflag [#allocation10], 1
    %3159 = vsyncpa %s3158, 1
    %3160 = vsyncpa [#allocation13], 1
    %3161 = vsyncpa [#allocation16], 1
    %3162 = vsyncpa [#allocation19], 1
    %3163 = vsyncpa [#allocation22], 1
    %3164 = vsyncpa [#allocation5], 1
    %s3165 = scalar_lea.sflag [#allocation5], 1
    %3166 = vsyncpa %s3165, 1

</llo_original>
